<compile_context>
chip_gen: v5e
topology: v5e:2x2
jax: 0.10.0
libtpu: 0.0.40
codegen_flags: <defaults>
</compile_context>

<pallas_src>
import functools

import jax
import jax.numpy as jnp
from jax import lax
from jax.experimental import pallas as pl
from jax.experimental.pallas import tpu as pltpu


def _round_up(x, m):
    return (x + m - 1) // m * m


def _dssc_kernel(x_ref, w1_ref, band_ref, bias_ref, o_ref, *, K, S, H1, nb):
    """One grid step processes `nb` batch elements.

    x_ref    : (nb, Hp, Lin)  f32  H/W-padded input, channels gathered to `hidden`,
                                   (W, hidden) flattened on lanes, lane-padded to 128x.
    w1_ref   : (K, 1, Lin)    f32  per-lane conv1 weights (BN1 scale folded).
    band_ref : (Lin, Lout)    f32  conv2 band matrix (taps + exp2 fan-out + W-stride
                                   + BN2 scale folded in).
    bias_ref : (1, 1, Lout)   f32  fused output bias (masked BN1 bias pushed through
                                   conv2, plus BN2 bias).
    o_ref    : (nb, H1, Lout) f32  lane-dense output slab (Lout = W2*oup padded to 128x).
    """
    band = band_ref[...]                       # loaded once per grid step
    bias = bias_ref[0]                         # (1, Lout)
    w1t = [w1_ref[k] for k in range(K)]        # K x (1, Lin), hoisted out of the n-loop
    for n in range(nb):                        # nb is small & static -> cheap unroll
        # ---- conv1: K tap FMAs along H, each tap read directly from the ref ----
        if S == 1:
            y = w1t[0] * x_ref[n, 0:H1, :]
            for k in range(1, K):
                y = y + w1t[k] * x_ref[n, k:k + H1, :]
        else:
            y = w1t[0] * x_ref[n, pl.ds(0, H1, S), :]
            for k in range(1, K):
                y = y + w1t[k] * x_ref[n, pl.ds(k, H1, S), :]
        # ---- conv2 + BN2 (+ strided W output) as one banded matmul on the MXU ----
        o_ref[n] = jnp.dot(y, band, preferred_element_type=jnp.float32,
                           precision=lax.Precision.HIGHEST) + bias


def depth_spatial_sep_conv(x, w1, scale1, bias1, w2, scale2, bias2,
                           *, kernel_size, stride, nb=None):
    """x: (N, C, H, W) f32.  w1: (C*exp1, K).  w2: (C*exp1*exp2, K).

    scale*/bias* are the eval-mode BatchNorm folded affine parameters.
    """
    N, C, H, W = x.shape
    hidden, K = w1.shape
    assert K == kernel_size and hidden % C == 0
    exp1 = hidden // C
    oup, K2 = w2.shape
    assert K2 == K and oup % hidden == 0
    exp2 = oup // hidden
    S = stride
    p = K // 2
    Hp = H + 2 * p
    Wp = W + 2 * p
    H1 = (Hp - K) // S + 1          # conv1 output height (stride S on H)
    W2 = (Wp - K) // S + 1          # conv2 output width  (stride S on W)
    Lin_raw = Wp * hidden           # input lane dim:  (W-padded, hidden) flattened
    Lout_raw = W2 * oup             # output lane dim: (W-out,   oup)    flattened
    Lin = _round_up(Lin_raw, 128)
    Lout = _round_up(Lout_raw, 128)
    f32 = jnp.float32

    # ---- per-generation block size: fat single step on single-TC chips, ------
    # ---- num_cores parallel steps on megacore parts, unroll capped at 8. -----
    if nb is None:
        cores = 1
        try:
            cores = max(1, int(getattr(jax.devices()[0], "num_cores", 1)))
        except Exception:
            pass
        target = N // cores if (cores > 1 and N % cores == 0) else N
        target = max(1, min(target, 8))
        nb = 1
        for d in range(1, N + 1):
            if N % d == 0 and d <= target:
                nb = d
    assert N % nb == 0 and nb >= 1

    # ---- glue: NHWC, gather C -> hidden, pad H/W, flatten (W,hidden) on lanes --
    ch_src = jnp.arange(hidden) // exp1                    # conv1 group -> input chan
    xe = jnp.take(jnp.transpose(x, (0, 2, 3, 1)).astype(f32), ch_src, axis=-1)
    xp = jnp.pad(xe, ((0, 0), (p, p), (p, p), (0, 0))).reshape(N, Hp, Lin_raw)
    if Lin > Lin_raw:
        xp = jnp.pad(xp, ((0, 0), (0, 0), (0, Lin - Lin_raw)))

    # ---- per-lane conv1 weights (BN1 scale folded); lane = wi*hidden + ch -----
    w1s = w1.astype(f32) * scale1.astype(f32)[:, None]                  # (hidden, K)
    w1_lane = jnp.broadcast_to(w1s.T[:, None, :], (K, Wp, hidden)).reshape(K, 1, Lin_raw)
    w1_lane = jnp.pad(w1_lane, ((0, 0), (0, 0), (0, Lin - Lin_raw)))

    # ---- conv2 band matrix: row (wi, ch) -> col (w, o); BN2 scale folded ------
    row = jnp.arange(Lin)
    col = jnp.arange(Lout)
    wi = row // hidden
    ch_row = row % hidden
    wcol = col // oup
    ocol = col % oup
    oh_col = ocol // exp2                                   # conv2 group channel
    k2 = wi[:, None] - wcol[None, :] * S                    # conv2 tap index (Lin, Lout)
    w2s = w2.astype(f32) * scale2.astype(f32)[:, None]      # (oup, K)
    vals = w2s[ocol[None, :], jnp.clip(k2, 0, K - 1)]
    valid = ((k2 >= 0) & (k2 < K)
             & (ch_row[:, None] == oh_col[None, :])
             & (row[:, None] < Lin_raw) & (col[None, :] < Lout_raw))
    band = jnp.where(valid, vals, 0.0).astype(f32)          # (Lin, Lout)

    # ---- fused output bias: (W-masked BN1 bias) through conv2  +  BN2 bias ----
    wmask = ((jnp.arange(Wp) >= p) & (jnp.arange(Wp) < p + W)).astype(f32)
    b1_lane = (wmask[:, None] * bias1.astype(f32)[None, :]).reshape(Lin_raw)
    b1_lane = jnp.pad(b1_lane, (0, Lin - Lin_raw))
    b2_lane = jnp.where(col < Lout_raw, bias2.astype(f32)[ocol], 0.0)
    bias_lane = (jnp.dot(b1_lane, band, precision=lax.Precision.HIGHEST)
                 + b2_lane).reshape(1, 1, Lout)

    kern = functools.partial(_dssc_kernel, K=K, S=S, H1=H1, nb=nb)

    out_flat = pl.pallas_call(
        kern,
        out_shape=jax.ShapeDtypeStruct((N, H1, Lout), f32),
        grid=(N // nb,),
        in_specs=[
            pl.BlockSpec((nb, Hp, Lin), lambda n: (n, 0, 0)),
            pl.BlockSpec((K, 1, Lin), lambda n: (0, 0, 0)),
            pl.BlockSpec((Lin, Lout), lambda n: (0, 0)),
            pl.BlockSpec((1, 1, Lout), lambda n: (0, 0, 0)),
        ],
        out_specs=pl.BlockSpec((nb, H1, Lout), lambda n: (n, 0, 0)),
        compiler_params=pltpu.CompilerParams(
            dimension_semantics=("parallel",)),
    )(xp, w1_lane, band, bias_lane)

    # ---- glue: drop lane padding (if any) and restore NCHW --------------------
    if Lout > Lout_raw:
        out_flat = out_flat[:, :, :Lout_raw]
    out = out_flat.reshape(N, H1, W2, oup)
    return jnp.transpose(out, (0, 3, 1, 2))                 # (N, oup, H1, W2)


if __name__ == "__main__":
    # Module hyper-params: DepthSpatialSepConv(inp=4, expand=(2,2), kernel_size=3, stride=1)
    N, C, H, W = 2, 4, 16, 16
    exp1, exp2 = 2, 2
    K, S = 3, 1
    hidden = C * exp1
    oup = hidden * exp2
    eps = 1e-5

    key = jax.random.PRNGKey(0)
    ks = jax.random.split(key, 11)
    x = jax.random.normal(ks[0], (N, C, H, W), jnp.float32)
    # Conv weights (PyTorch shapes (hidden,1,K,1) / (oup,1,1,K) squeezed to (ch, K)).
    w1 = 0.2 * jax.random.normal(ks[1], (hidden, K), jnp.float32)
    w2 = 0.2 * jax.random.normal(ks[2], (oup, K), jnp.float32)
    # Eval-mode BatchNorm parameters (deterministic, synthetic).
    g1 = 1.0 + 0.1 * jax.random.normal(ks[3], (hidden,), jnp.float32)
    be1 = 0.1 * jax.random.normal(ks[4], (hidden,), jnp.float32)
    m1 = 0.1 * jax.random.normal(ks[5], (hidden,), jnp.float32)
    v1 = 0.5 + jnp.abs(jax.random.normal(ks[6], (hidden,), jnp.float32))
    g2 = 1.0 + 0.1 * jax.random.normal(ks[7], (oup,), jnp.float32)
    be2 = 0.1 * jax.random.normal(ks[8], (oup,), jnp.float32)
    m2 = 0.1 * jax.random.normal(ks[9], (oup,), jnp.float32)
    v2 = 0.5 + jnp.abs(jax.random.normal(ks[10], (oup,), jnp.float32))

    # Fold BN (eval mode) into scale / bias.
    s1 = g1 / jnp.sqrt(v1 + eps); b1 = be1 - m1 * s1
    s2 = g2 / jnp.sqrt(v2 + eps); b2 = be2 - m2 * s2

    out = depth_spatial_sep_conv(x, w1, s1, b1, w2, s2, b2,
                                 kernel_size=K, stride=S)
    out = jax.block_until_ready(out)

    # Pure-JAX reference (same grouped-conv semantics as PyTorch).
    y1 = lax.conv_general_dilated(
        x, w1.reshape(hidden, 1, K, 1), window_strides=(S, 1),
        padding=[(K // 2, K // 2), (0, 0)],
        dimension_numbers=("NCHW", "OIHW", "NCHW"),
        feature_group_count=C, precision=lax.Precision.HIGHEST)
    y1 = y1 * s1[None, :, None, None] + b1[None, :, None, None]
    y2 = lax.conv_general_dilated(
        y1, w2.reshape(oup, 1, 1, K), window_strides=(1, S),
        padding=[(0, 0), (K // 2, K // 2)],
        dimension_numbers=("NCHW", "OIHW", "NCHW"),
        feature_group_count=hidden, precision=lax.Precision.HIGHEST)
    ref = y2 * s2[None, :, None, None] + b2[None, :, None, None]

    assert out.shape == ref.shape == (N, oup, H, W), (out.shape, ref.shape)
    err = float(jnp.max(jnp.abs(out - ref)))
    assert err < 2e-3, f"max abs err {err}"
    print("KERNEL_OK")
</pallas_src>

<mosaic_0001>
module attributes {stable_mosaic.version = 11 : i64} {
  func.func @_dssc_kernel(%arg0: i32, %arg1: memref<2x18x256xf32, #tpu.memory_space<vmem>>, %arg2: memref<3x1x256xf32, #tpu.memory_space<vmem>>, %arg3: memref<256x256xf32, #tpu.memory_space<vmem>>, %arg4: memref<1x1x256xf32, #tpu.memory_space<vmem>>, %arg5: memref<2x16x256xf32, #tpu.memory_space<vmem>>) attributes {dimension_semantics = [#tpu.dimension_semantics<parallel>], iteration_bounds = array<i64: 1>, scalar_prefetch = 0 : i64, scratch_operands = 0 : i64, tpu.core_type = #tpu.core_type<tc>, window_params = [{transform_indices = @transform_0, window_bounds = array<i64: 2, 18, 256>}, {pipeline_mode = #tpu.pipeline_mode<synchronous>, transform_indices = @transform_1, window_bounds = array<i64: 3, 1, 256>}, {pipeline_mode = #tpu.pipeline_mode<synchronous>, transform_indices = @transform_2, window_bounds = array<i64: 256, 256>}, {pipeline_mode = #tpu.pipeline_mode<synchronous>, transform_indices = @transform_3, window_bounds = array<i64: 1, 1, 256>}, {transform_indices = @transform_4, window_bounds = array<i64: 2, 16, 256>}]} {
    %c0 = arith.constant 0 : index
    %c0_0 = arith.constant 0 : index
    %0 = vector.load %arg3[%c0, %c0_0] : memref<256x256xf32, #tpu.memory_space<vmem>>, vector<256x256xf32>
    %c0_1 = arith.constant 0 : index
    %c0_2 = arith.constant 0 : index
    %c0_3 = arith.constant 0 : index
    %1 = vector.load %arg4[%c0_1, %c0_2, %c0_3] : memref<1x1x256xf32, #tpu.memory_space<vmem>>, vector<1x1x256xf32>
    %2 = vector.shape_cast %1 : vector<1x1x256xf32> to vector<1x256xf32>
    %c0_4 = arith.constant 0 : index
    %c0_5 = arith.constant 0 : index
    %c0_6 = arith.constant 0 : index
    %3 = vector.load %arg2[%c0_4, %c0_5, %c0_6] : memref<3x1x256xf32, #tpu.memory_space<vmem>>, vector<1x1x256xf32>
    %4 = vector.shape_cast %3 : vector<1x1x256xf32> to vector<1x256xf32>
    %c1 = arith.constant 1 : index
    %c0_7 = arith.constant 0 : index
    %c0_8 = arith.constant 0 : index
    %5 = vector.load %arg2[%c1, %c0_7, %c0_8] : memref<3x1x256xf32, #tpu.memory_space<vmem>>, vector<1x1x256xf32>
    %6 = vector.shape_cast %5 : vector<1x1x256xf32> to vector<1x256xf32>
    %c2 = arith.constant 2 : index
    %c0_9 = arith.constant 0 : index
    %c0_10 = arith.constant 0 : index
    %7 = vector.load %arg2[%c2, %c0_9, %c0_10] : memref<3x1x256xf32, #tpu.memory_space<vmem>>, vector<1x1x256xf32>
    %8 = vector.shape_cast %7 : vector<1x1x256xf32> to vector<1x256xf32>
    %c0_11 = arith.constant 0 : index
    %c0_12 = arith.constant 0 : index
    %c0_13 = arith.constant 0 : index
    %9 = vector.load %arg1[%c0_11, %c0_12, %c0_13] : memref<2x18x256xf32, #tpu.memory_space<vmem>>, vector<1x16x256xf32>
    %10 = vector.shape_cast %9 : vector<1x16x256xf32> to vector<16x256xf32>
    %11 = vector.broadcast %4 : vector<1x256xf32> to vector<16x256xf32>
    %12 = arith.mulf %11, %10 : vector<16x256xf32>
    %c0_14 = arith.constant 0 : index
    %c1_15 = arith.constant 1 : index
    %c0_16 = arith.constant 0 : index
    %13 = vector.load %arg1[%c0_14, %c1_15, %c0_16] : memref<2x18x256xf32, #tpu.memory_space<vmem>>, vector<1x16x256xf32>
    %14 = vector.shape_cast %13 : vector<1x16x256xf32> to vector<16x256xf32>
    %15 = vector.broadcast %6 : vector<1x256xf32> to vector<16x256xf32>
    %16 = arith.mulf %15, %14 : vector<16x256xf32>
    %17 = arith.addf %12, %16 : vector<16x256xf32>
    %c0_17 = arith.constant 0 : index
    %c2_18 = arith.constant 2 : index
    %c0_19 = arith.constant 0 : index
    %18 = vector.load %arg1[%c0_17, %c2_18, %c0_19] : memref<2x18x256xf32, #tpu.memory_space<vmem>>, vector<1x16x256xf32>
    %19 = vector.shape_cast %18 : vector<1x16x256xf32> to vector<16x256xf32>
    %20 = vector.broadcast %8 : vector<1x256xf32> to vector<16x256xf32>
    %21 = arith.mulf %20, %19 : vector<16x256xf32>
    %22 = arith.addf %17, %21 : vector<16x256xf32>
    %cst = arith.constant dense<0.000000e+00> : vector<16x256xf32>
    %23 = tpu.matmul %22, %0, %cst {dimension_numbers = #tpu.dot_dimension_numbers<[1], [0], [0], [1], [0, 0, 1, 1], [], []>, precision = #tpu.contract_precision<fp32>} : vector<16x256xf32>, vector<256x256xf32>, vector<16x256xf32> -> vector<16x256xf32>
    %24 = vector.broadcast %2 : vector<1x256xf32> to vector<16x256xf32>
    %25 = arith.addf %23, %24 : vector<16x256xf32>
    %c0_20 = arith.constant 0 : index
    %c0_21 = arith.constant 0 : index
    %c0_22 = arith.constant 0 : index
    %26 = vector.load %arg5[%c0_20, %c0_21, %c0_22] : memref<2x16x256xf32, #tpu.memory_space<vmem>>, vector<1x16x256xf32>
    %27 = vector.shape_cast %26 : vector<1x16x256xf32> to vector<16x256xf32>
    %28 = vector.shape_cast %25 : vector<16x256xf32> to vector<1x16x256xf32>
    tpu.vector_store %arg5[%c0_20, %c0_21, %c0_22], %28 {strides = array<i32>} : memref<2x16x256xf32, #tpu.memory_space<vmem>>, vector<1x16x256xf32>,
    %c1_23 = arith.constant 1 : index
    %c0_24 = arith.constant 0 : index
    %c0_25 = arith.constant 0 : index
    %29 = vector.load %arg1[%c1_23, %c0_24, %c0_25] : memref<2x18x256xf32, #tpu.memory_space<vmem>>, vector<1x16x256xf32>
    %30 = vector.shape_cast %29 : vector<1x16x256xf32> to vector<16x256xf32>
    %31 = vector.broadcast %4 : vector<1x256xf32> to vector<16x256xf32>
    %32 = arith.mulf %31, %30 : vector<16x256xf32>
    %c1_26 = arith.constant 1 : index
    %c1_27 = arith.constant 1 : index
    %c0_28 = arith.constant 0 : index
    %33 = vector.load %arg1[%c1_26, %c1_27, %c0_28] : memref<2x18x256xf32, #tpu.memory_space<vmem>>, vector<1x16x256xf32>
    %34 = vector.shape_cast %33 : vector<1x16x256xf32> to vector<16x256xf32>
    %35 = vector.broadcast %6 : vector<1x256xf32> to vector<16x256xf32>
    %36 = arith.mulf %35, %34 : vector<16x256xf32>
    %37 = arith.addf %32, %36 : vector<16x256xf32>
    %c1_29 = arith.constant 1 : index
    %c2_30 = arith.constant 2 : index
    %c0_31 = arith.constant 0 : index
    %38 = vector.load %arg1[%c1_29, %c2_30, %c0_31] : memref<2x18x256xf32, #tpu.memory_space<vmem>>, vector<1x16x256xf32>
    %39 = vector.shape_cast %38 : vector<1x16x256xf32> to vector<16x256xf32>
    %40 = vector.broadcast %8 : vector<1x256xf32> to vector<16x256xf32>
    %41 = arith.mulf %40, %39 : vector<16x256xf32>
    %42 = arith.addf %37, %41 : vector<16x256xf32>
    %cst_32 = arith.constant dense<0.000000e+00> : vector<16x256xf32>
    %43 = tpu.matmul %42, %0, %cst_32 {dimension_numbers = #tpu.dot_dimension_numbers<[1], [0], [0], [1], [0, 0, 1, 1], [], []>, precision = #tpu.contract_precision<fp32>} : vector<16x256xf32>, vector<256x256xf32>, vector<16x256xf32> -> vector<16x256xf32>
    %44 = vector.broadcast %2 : vector<1x256xf32> to vector<16x256xf32>
    %45 = arith.addf %43, %44 : vector<16x256xf32>
    %c1_33 = arith.constant 1 : index
    %c0_34 = arith.constant 0 : index
    %c0_35 = arith.constant 0 : index
    %46 = vector.load %arg5[%c1_33, %c0_34, %c0_35] : memref<2x16x256xf32, #tpu.memory_space<vmem>>, vector<1x16x256xf32>
    %47 = vector.shape_cast %46 : vector<1x16x256xf32> to vector<16x256xf32>
    %48 = vector.shape_cast %45 : vector<16x256xf32> to vector<1x16x256xf32>
    tpu.vector_store %arg5[%c1_33, %c0_34, %c0_35], %48 {strides = array<i32>} : memref<2x16x256xf32, #tpu.memory_space<vmem>>, vector<1x16x256xf32>,
    return
  }
  func.func @transform_0(%arg0: i32) -> (i32, i32, i32) {
    %c0_i32 = arith.constant 0 : i32
    %c0_i32_0 = arith.constant 0 : i32
    %c0_i32_1 = arith.constant 0 : i32
    return %arg0, %c0_i32, %c0_i32_0 : i32, i32, i32
  }
  func.func @transform_1(%arg0: i32) -> (i32, i32, i32) {
    %c0_i32 = arith.constant 0 : i32
    %c0_i32_0 = arith.constant 0 : i32
    %c0_i32_1 = arith.constant 0 : i32
    %c0_i32_2 = arith.constant 0 : i32
    return %c0_i32, %c0_i32_0, %c0_i32_1 : i32, i32, i32
  }
  func.func @transform_2(%arg0: i32) -> (i32, i32) {
    %c0_i32 = arith.constant 0 : i32
    %c0_i32_0 = arith.constant 0 : i32
    %c0_i32_1 = arith.constant 0 : i32
    return %c0_i32, %c0_i32_0 : i32, i32
  }
  func.func @transform_3(%arg0: i32) -> (i32, i32, i32) {
    %c0_i32 = arith.constant 0 : i32
    %c0_i32_0 = arith.constant 0 : i32
    %c0_i32_1 = arith.constant 0 : i32
    %c0_i32_2 = arith.constant 0 : i32
    return %c0_i32, %c0_i32_0, %c0_i32_1 : i32, i32, i32
  }
  func.func @transform_4(%arg0: i32) -> (i32, i32, i32) {
    %c0_i32 = arith.constant 0 : i32
    %c0_i32_0 = arith.constant 0 : i32
    %c0_i32_1 = arith.constant 0 : i32
    return %arg0, %c0_i32, %c0_i32_0 : i32, i32, i32
  }
}

</mosaic_0001>

<llo_original>
// kernel: tpu_custom_call.1
$region0: #{tpu_custom_call.1}
  #allocation0 [shape = 'u32[]', space=smem, size = 0x4, offset = 0x4, fixed_abs, tag = 'smem constant byte address 0x4 - core index']
  #allocation1 [shape = 'u32[72,128]{1,0:T(1,128)}', space=vmem, size = 0x9000, scoped, tag = 'internal scratch']
  %s0 = inlined_call_operand.vmem [shape: f32[2,18,256], index: 0, kind: input, shape index: {}]
  %s1 = inlined_call_operand.vmem [shape: f32[3,1,256], index: 1, kind: input, shape index: {}]
  %s2 = inlined_call_operand.hbm [shape: f32[256,256], index: 2, kind: input, shape index: {}]
  %s3 = inlined_call_operand.vmem [shape: f32[1,1,256], index: 3, kind: input, shape index: {}]
  %s4 = inlined_call_operand.hbm [shape: f32[2,16,256], index: 4, kind: output, shape index: {}]
  %s5 = sld [smem:[#allocation0]]
  $region30: #{tpu_custom_call.1} parent=0
    _
  %s7 = ssub.s32 1, %s5
  %s8 = scalar_select 0, %s7, %s5
  $region1: #{tpu_custom_call.1} parent=0
    #allocation2 [shape = 'u8[262144]{0}', space=vmem, size = 0x40000, scoped, tag = 'input window, operand 2, single buffered']
    #allocation3 [shape = 's32[1]{0}', space=sflag, size = 0x4, scoped, tag = 'scoped memory for tpu_custom_call.1']
    #allocation4 [shape = 's32[1]{0}', space=sflag, size = 0x4, scoped, tag = 'scoped memory for tpu_custom_call.1']
    #allocation5 [shape = 'u8[32768]{0}', space=vmem, size = 0x8000, scoped, tag = 'output window, operand 0, single buffered']
    %9 = vsyncpa [#allocation3], 0
    %10 = vsyncpa [#allocation4], 0
    // Predicated region
    $region2: #{tpu_custom_call.1} parent=1 // pred_check
      _
    $region3: #{tpu_custom_call.1} parent=1 // pred_check_branch
      %12 = sbr.rel (0) target = $region5
    $region4: #{tpu_custom_call.1} parent=1 // pred_region
      _
    $region5: #{tpu_custom_call.1} parent=1 // pred_fallthru
      _
    // Predicated region
    $region6: #{tpu_custom_call.1} parent=1 // pred_check
      _
    $region7: #{tpu_custom_call.1} parent=1 // pred_check_branch
      %14 = sbr.rel (0) target = $region9
    $region8: #{tpu_custom_call.1} parent=1 // pred_region
      _
    $region9: #{tpu_custom_call.1} parent=1 // pred_fallthru
      _
    // Predicated region
    $region10: #{tpu_custom_call.1} parent=1 // pred_check
      _
    $region11: #{tpu_custom_call.1} parent=1 // pred_check_branch
      %16 = sbr.rel (0) target = $region13
    $region12: #{tpu_custom_call.1} parent=1 // pred_region
      %18 = vsyncadd [#allocation3], 0
      %s19 = sshll.u32 %s2, 4
      %s20 = int_to_ptr.hbm [resolvable:$true] %s19
      %s21 = sshll.u32 [#allocation2], 4
      %s22 = int_to_ptr.vmem [resolvable:$true] %s21
      %27 = dma.hbm_to_vmem [thread:$0]  %s20, 8192, %s22, [#allocation3], 256, 256, 16
    $region13: #{tpu_custom_call.1} parent=1 // pred_fallthru
      _
    // Predicated region
    $region14: #{tpu_custom_call.1} parent=1 // pred_check
      _
    $region15: #{tpu_custom_call.1} parent=1 // pred_check_branch
      %29 = sbr.rel (0) target = $region17
    $region16: #{tpu_custom_call.1} parent=1 // pred_region
      _
    $region17: #{tpu_custom_call.1} parent=1 // pred_fallthru
      _
    // Predicated region
    $region18: #{tpu_custom_call.1} parent=1 // pred_check
      _
    $region19: #{tpu_custom_call.1} parent=1 // pred_check_branch
      %31 = sbr.rel (0) target = $region21
    $region20: #{tpu_custom_call.1} parent=1 // pred_region
      %33 = dma.done [#allocation3], 8192
    $region21: #{tpu_custom_call.1} parent=1 // pred_fallthru
      _
    %v34 = vld [vmem:[#allocation2] sm:$0xff]
    %v35 = vld [vmem:[#allocation2 + $0x8] sm:$0xff]
    %v36 = vld [vmem:[#allocation2 + $0x10] sm:$0xff]
    %v37 = vld [vmem:[#allocation2 + $0x18] sm:$0xff]
    %v38 = vld [vmem:[#allocation2 + $0x20] sm:$0xff]
    %v39 = vld [vmem:[#allocation2 + $0x28] sm:$0xff]
    %v40 = vld [vmem:[#allocation2 + $0x30] sm:$0xff]
    %v41 = vld [vmem:[#allocation2 + $0x38] sm:$0xff]
    %v42 = vld [vmem:[#allocation2 + $0x40] sm:$0xff]
    %v43 = vld [vmem:[#allocation2 + $0x48] sm:$0xff]
    %v44 = vld [vmem:[#allocation2 + $0x50] sm:$0xff]
    %v45 = vld [vmem:[#allocation2 + $0x58] sm:$0xff]
    %v46 = vld [vmem:[#allocation2 + $0x60] sm:$0xff]
    %v47 = vld [vmem:[#allocation2 + $0x68] sm:$0xff]
    %v48 = vld [vmem:[#allocation2 + $0x70] sm:$0xff]
    %v49 = vld [vmem:[#allocation2 + $0x78] sm:$0xff]
    %v50 = vld [vmem:[#allocation2 + $0x80] sm:$0xff]
    %v51 = vld [vmem:[#allocation2 + $0x88] sm:$0xff]
    %v52 = vld [vmem:[#allocation2 + $0x90] sm:$0xff]
    %v53 = vld [vmem:[#allocation2 + $0x98] sm:$0xff]
    %v54 = vld [vmem:[#allocation2 + $0xa0] sm:$0xff]
    %v55 = vld [vmem:[#allocation2 + $0xa8] sm:$0xff]
    %v56 = vld [vmem:[#allocation2 + $0xb0] sm:$0xff]
    %v57 = vld [vmem:[#allocation2 + $0xb8] sm:$0xff]
    %v58 = vld [vmem:[#allocation2 + $0xc0] sm:$0xff]
    %v59 = vld [vmem:[#allocation2 + $0xc8] sm:$0xff]
    %v60 = vld [vmem:[#allocation2 + $0xd0] sm:$0xff]
    %v61 = vld [vmem:[#allocation2 + $0xd8] sm:$0xff]
    %v62 = vld [vmem:[#allocation2 + $0xe0] sm:$0xff]
    %v63 = vld [vmem:[#allocation2 + $0xe8] sm:$0xff]
    %v64 = vld [vmem:[#allocation2 + $0xf0] sm:$0xff]
    %v65 = vld [vmem:[#allocation2 + $0xf8] sm:$0xff]
    %v66 = vld [vmem:[#allocation2 + $0x100] sm:$0xff]
    %v67 = vld [vmem:[#allocation2 + $0x108] sm:$0xff]
    %v68 = vld [vmem:[#allocation2 + $0x110] sm:$0xff]
    %v69 = vld [vmem:[#allocation2 + $0x118] sm:$0xff]
    %v70 = vld [vmem:[#allocation2 + $0x120] sm:$0xff]
    %v71 = vld [vmem:[#allocation2 + $0x128] sm:$0xff]
    %v72 = vld [vmem:[#allocation2 + $0x130] sm:$0xff]
    %v73 = vld [vmem:[#allocation2 + $0x138] sm:$0xff]
    %v74 = vld [vmem:[#allocation2 + $0x140] sm:$0xff]
    %v75 = vld [vmem:[#allocation2 + $0x148] sm:$0xff]
    %v76 = vld [vmem:[#allocation2 + $0x150] sm:$0xff]
    %v77 = vld [vmem:[#allocation2 + $0x158] sm:$0xff]
    %v78 = vld [vmem:[#allocation2 + $0x160] sm:$0xff]
    %v79 = vld [vmem:[#allocation2 + $0x168] sm:$0xff]
    %v80 = vld [vmem:[#allocation2 + $0x170] sm:$0xff]
    %v81 = vld [vmem:[#allocation2 + $0x178] sm:$0xff]
    %v82 = vld [vmem:[#allocation2 + $0x180] sm:$0xff]
    %v83 = vld [vmem:[#allocation2 + $0x188] sm:$0xff]
    %v84 = vld [vmem:[#allocation2 + $0x190] sm:$0xff]
    %v85 = vld [vmem:[#allocation2 + $0x198] sm:$0xff]
    %v86 = vld [vmem:[#allocation2 + $0x1a0] sm:$0xff]
    %v87 = vld [vmem:[#allocation2 + $0x1a8] sm:$0xff]
    %v88 = vld [vmem:[#allocation2 + $0x1b0] sm:$0xff]
    %v89 = vld [vmem:[#allocation2 + $0x1b8] sm:$0xff]
    %v90 = vld [vmem:[#allocation2 + $0x1c0] sm:$0xff]
    %v91 = vld [vmem:[#allocation2 + $0x1c8] sm:$0xff]
    %v92 = vld [vmem:[#allocation2 + $0x1d0] sm:$0xff]
    %v93 = vld [vmem:[#allocation2 + $0x1d8] sm:$0xff]
    %v94 = vld [vmem:[#allocation2 + $0x1e0] sm:$0xff]
    %v95 = vld [vmem:[#allocation2 + $0x1e8] sm:$0xff]
    %v96 = vld [vmem:[#allocation2 + $0x1f0] sm:$0xff]
    %v97 = vld [vmem:[#allocation2 + $0x1f8] sm:$0xff]
    %v98 = vld [vmem:[%s3] sm:$0x3]
    %v99 = vld [vmem:[%s1] sm:$0x3]
    %s100 = scalar_lea.vmem %s1, 2
    %v101 = vld [vmem:[%s100] sm:$0x3]
    %s102 = scalar_lea.vmem %s1, 4
    %v103 = vld [vmem:[%s102] sm:$0x3]
    %v104 = vld [vmem:[%s0] sm:$0xff]
    %v105 = vld [vmem:[%s0 + $0x8] sm:$0xff]
    %v106 = vld [vmem:[%s0 + $0x10] sm:$0xff]
    %v107 = vld [vmem:[%s0 + $0x18] sm:$0xff]
    %v109 = vperm.slane %v99, 0
    %v110 = vperm.slane %v99, 1
    %v113 = vmul.f32 %v109, %v104
    %v114 = vmul.f32 %v110, %v105
    %v115 = vmul.f32 %v109, %v106
    %v116 = vmul.f32 %v110, %v107
    %v117 = vld [vmem:[%s0] sm:$0xfe]
    %v118 = vld [vmem:[%s0 + $0x8] sm:$0xfe]
    %v119 = vld [vmem:[%s0 + $0x20] sm:$0x1]
    %v120 = vld [vmem:[%s0 + $0x28] sm:$0x1]
    %v122 = vperm.slane %v101, 0
    %v123 = vperm.slane %v101, 1
    %v126 = vmul.f32 %v122, %v117
    %v127 = vmul.f32 %v123, %v118
    %v128 = vmul.f32 %v122, %v106
    %v129 = vmul.f32 %v123, %v107
    %v130 = vmul.f32 %v122, %v119
    %v131 = vmul.f32 %v123, %v120
    %vm138 = vcmask 1046528
    %v139 = vrot.slane %v126, 1
    %v140 = vrot.slane %v128, 1
    %v141 = vsel %vm138, %v139, %v140
    %v142 = vrot.slane %v127, 1
    %v143 = vrot.slane %v129, 1
    %v144 = vsel %vm138, %v142, %v143
    %v145 = vrot.slane %v130, 1
    %v146 = vsel %vm138, %v140, %v145
    %v147 = vrot.slane %v131, 1
    %v148 = vsel %vm138, %v143, %v147
    %v153 = vadd.f32 %v113, %v141
    %v154 = vadd.f32 %v114, %v144
    %v155 = vadd.f32 %v115, %v146
    %v156 = vadd.f32 %v116, %v148
    %v157 = vld [vmem:[%s0] sm:$0xfc]
    %v158 = vld [vmem:[%s0 + $0x8] sm:$0xfc]
    %v159 = vld [vmem:[%s0 + $0x20] sm:$0x3]
    %v160 = vld [vmem:[%s0 + $0x28] sm:$0x3]
    %v162 = vperm.slane %v103, 0
    %v163 = vperm.slane %v103, 1
    %v166 = vmul.f32 %v162, %v157
    %v167 = vmul.f32 %v163, %v158
    %v168 = vmul.f32 %v162, %v106
    %v169 = vmul.f32 %v163, %v107
    %v170 = vmul.f32 %v162, %v159
    %v171 = vmul.f32 %v163, %v160
    %vm178 = vcmask 1045504
    %v179 = vrot.slane %v166, 2
    %v180 = vrot.slane %v168, 2
    %v181 = vsel %vm178, %v179, %v180
    %v182 = vrot.slane %v167, 2
    %v183 = vrot.slane %v169, 2
    %v184 = vsel %vm178, %v182, %v183
    %v185 = vrot.slane %v170, 2
    %v186 = vsel %vm178, %v180, %v185
    %v187 = vrot.slane %v171, 2
    %v188 = vsel %vm178, %v183, %v187
    %v193 = vadd.f32 %v153, %v181
    %v194 = vadd.f32 %v154, %v184
    %v195 = vadd.f32 %v155, %v186
    %v196 = vadd.f32 %v156, %v188
    %v198 = vperm.slane %v98, 0
    %v199 = vperm.slane %v98, 1
    %v202 = vand.u32 %v64, 4294901760
    %203 = vmatpush.msra.mxu0 %v202
    %v204 = vand.u32 %v62, 4294901760
    %205 = vmatpush.msra.mxu0 %v204
    %v206 = vand.u32 %v60, 4294901760
    %207 = vmatpush.msra.mxu0 %v206
    %v208 = vand.u32 %v58, 4294901760
    %209 = vmatpush.msra.mxu0 %v208
    %v210 = vand.u32 %v56, 4294901760
    %211 = vmatpush.msra.mxu0 %v210
    %v212 = vand.u32 %v54, 4294901760
    %213 = vmatpush.msra.mxu0 %v212
    %v214 = vand.u32 %v52, 4294901760
    %215 = vmatpush.msra.mxu0 %v214
    %v216 = vand.u32 %v50, 4294901760
    %217 = vmatpush.msra.mxu0 %v216
    %v218 = vand.u32 %v48, 4294901760
    %219 = vmatpush.msra.mxu0 %v218
    %v220 = vand.u32 %v46, 4294901760
    %221 = vmatpush.msra.mxu0 %v220
    %v222 = vand.u32 %v44, 4294901760
    %223 = vmatpush.msra.mxu0 %v222
    %v224 = vand.u32 %v42, 4294901760
    %225 = vmatpush.msra.mxu0 %v224
    %v226 = vand.u32 %v40, 4294901760
    %227 = vmatpush.msra.mxu0 %v226
    %v228 = vand.u32 %v38, 4294901760
    %229 = vmatpush.msra.mxu0 %v228
    %v230 = vand.u32 %v36, 4294901760
    %231 = vmatpush.msra.mxu0 %v230
    %v232 = vand.u32 %v34, 4294901760
    %233 = vmatpush.msra.mxu0 %v232
    %v234 = vand.u32 %v193, 4294901760
    %v235 = vsub.f32 %v193, %v234
    %v236 = vand.u32 %v235, 4294901760
    %v237 = vsub.f32 %v235, %v236
    %v238 = vand.u32 %v237, 4294901760
    %239 = vmatmul.f32.gmra.mxu0 %v238
    %v240 = vpop.f32.mrf.mxu0
    %v241 = vadd.f32 %v198, %v240
    %v242 = vand.u32 %v195, 4294901760
    %v243 = vsub.f32 %v195, %v242
    %v244 = vand.u32 %v243, 4294901760
    %v245 = vsub.f32 %v243, %v244
    %v246 = vand.u32 %v245, 4294901760
    %247 = vmatmul.f32.gmra.mxu0 %v246
    %v248 = vpop.f32.mrf.mxu0
    %v249 = vadd.f32 %v198, %v248
    %250 = vdwg.mxu0
    %v251 = vand.u32 %v64, 4294901760
    %v252 = vsub.f32 %v64, %v251
    %v253 = vand.u32 %v252, 4294901760
    %v254 = vsub.f32 %v252, %v253
    %v255 = vand.u32 %v254, 4294901760
    %256 = vmatpush.msra.mxu0 %v255
    %v257 = vand.u32 %v62, 4294901760
    %v258 = vsub.f32 %v62, %v257
    %v259 = vand.u32 %v258, 4294901760
    %v260 = vsub.f32 %v258, %v259
    %v261 = vand.u32 %v260, 4294901760
    %262 = vmatpush.msra.mxu0 %v261
    %v263 = vand.u32 %v60, 4294901760
    %v264 = vsub.f32 %v60, %v263
    %v265 = vand.u32 %v264, 4294901760
    %v266 = vsub.f32 %v264, %v265
    %v267 = vand.u32 %v266, 4294901760
    %268 = vmatpush.msra.mxu0 %v267
    %v269 = vand.u32 %v58, 4294901760
    %v270 = vsub.f32 %v58, %v269
    %v271 = vand.u32 %v270, 4294901760
    %v272 = vsub.f32 %v270, %v271
    %v273 = vand.u32 %v272, 4294901760
    %274 = vmatpush.msra.mxu0 %v273
    %v275 = vand.u32 %v56, 4294901760
    %v276 = vsub.f32 %v56, %v275
    %v277 = vand.u32 %v276, 4294901760
    %v278 = vsub.f32 %v276, %v277
    %v279 = vand.u32 %v278, 4294901760
    %280 = vmatpush.msra.mxu0 %v279
    %v281 = vand.u32 %v54, 4294901760
    %v282 = vsub.f32 %v54, %v281
    %v283 = vand.u32 %v282, 4294901760
    %v284 = vsub.f32 %v282, %v283
    %v285 = vand.u32 %v284, 4294901760
    %286 = vmatpush.msra.mxu0 %v285
    %v287 = vand.u32 %v52, 4294901760
    %v288 = vsub.f32 %v52, %v287
    %v289 = vand.u32 %v288, 4294901760
    %v290 = vsub.f32 %v288, %v289
    %v291 = vand.u32 %v290, 4294901760
    %292 = vmatpush.msra.mxu0 %v291
    %v293 = vand.u32 %v50, 4294901760
    %v294 = vsub.f32 %v50, %v293
    %v295 = vand.u32 %v294, 4294901760
    %v296 = vsub.f32 %v294, %v295
    %v297 = vand.u32 %v296, 4294901760
    %298 = vmatpush.msra.mxu0 %v297
    %v299 = vand.u32 %v48, 4294901760
    %v300 = vsub.f32 %v48, %v299
    %v301 = vand.u32 %v300, 4294901760
    %v302 = vsub.f32 %v300, %v301
    %v303 = vand.u32 %v302, 4294901760
    %304 = vmatpush.msra.mxu0 %v303
    %v305 = vand.u32 %v46, 4294901760
    %v306 = vsub.f32 %v46, %v305
    %v307 = vand.u32 %v306, 4294901760
    %v308 = vsub.f32 %v306, %v307
    %v309 = vand.u32 %v308, 4294901760
    %310 = vmatpush.msra.mxu0 %v309
    %v311 = vand.u32 %v44, 4294901760
    %v312 = vsub.f32 %v44, %v311
    %v313 = vand.u32 %v312, 4294901760
    %v314 = vsub.f32 %v312, %v313
    %v315 = vand.u32 %v314, 4294901760
    %316 = vmatpush.msra.mxu0 %v315
    %v317 = vand.u32 %v42, 4294901760
    %v318 = vsub.f32 %v42, %v317
    %v319 = vand.u32 %v318, 4294901760
    %v320 = vsub.f32 %v318, %v319
    %v321 = vand.u32 %v320, 4294901760
    %322 = vmatpush.msra.mxu0 %v321
    %v323 = vand.u32 %v40, 4294901760
    %v324 = vsub.f32 %v40, %v323
    %v325 = vand.u32 %v324, 4294901760
    %v326 = vsub.f32 %v324, %v325
    %v327 = vand.u32 %v326, 4294901760
    %328 = vmatpush.msra.mxu0 %v327
    %v329 = vand.u32 %v38, 4294901760
    %v330 = vsub.f32 %v38, %v329
    %v331 = vand.u32 %v330, 4294901760
    %v332 = vsub.f32 %v330, %v331
    %v333 = vand.u32 %v332, 4294901760
    %334 = vmatpush.msra.mxu0 %v333
    %v335 = vand.u32 %v36, 4294901760
    %v336 = vsub.f32 %v36, %v335
    %v337 = vand.u32 %v336, 4294901760
    %v338 = vsub.f32 %v336, %v337
    %v339 = vand.u32 %v338, 4294901760
    %340 = vmatpush.msra.mxu0 %v339
    %v341 = vand.u32 %v34, 4294901760
    %v342 = vsub.f32 %v34, %v341
    %v343 = vand.u32 %v342, 4294901760
    %v344 = vsub.f32 %v342, %v343
    %v345 = vand.u32 %v344, 4294901760
    %346 = vmatpush.msra.mxu0 %v345
    %v347 = vand.u32 %v193, 4294901760
    %348 = vmatmul.f32.gmra.mxu0 %v347
    %v349 = vpop.f32.mrf.mxu0
    %v350 = vadd.f32 %v241, %v349
    %v351 = vand.u32 %v195, 4294901760
    %352 = vmatmul.f32.gmra.mxu0 %v351
    %v353 = vpop.f32.mrf.mxu0
    %v354 = vadd.f32 %v249, %v353
    %355 = vdwg.mxu0
    %v356 = vand.u32 %v64, 4294901760
    %v357 = vsub.f32 %v64, %v356
    %358 = vmatpush.msra.mxu0 %v357
    %v359 = vand.u32 %v62, 4294901760
    %v360 = vsub.f32 %v62, %v359
    %361 = vmatpush.msra.mxu0 %v360
    %v362 = vand.u32 %v60, 4294901760
    %v363 = vsub.f32 %v60, %v362
    %364 = vmatpush.msra.mxu0 %v363
    %v365 = vand.u32 %v58, 4294901760
    %v366 = vsub.f32 %v58, %v365
    %367 = vmatpush.msra.mxu0 %v366
    %v368 = vand.u32 %v56, 4294901760
    %v369 = vsub.f32 %v56, %v368
    %370 = vmatpush.msra.mxu0 %v369
    %v371 = vand.u32 %v54, 4294901760
    %v372 = vsub.f32 %v54, %v371
    %373 = vmatpush.msra.mxu0 %v372
    %v374 = vand.u32 %v52, 4294901760
    %v375 = vsub.f32 %v52, %v374
    %376 = vmatpush.msra.mxu0 %v375
    %v377 = vand.u32 %v50, 4294901760
    %v378 = vsub.f32 %v50, %v377
    %379 = vmatpush.msra.mxu0 %v378
    %v380 = vand.u32 %v48, 4294901760
    %v381 = vsub.f32 %v48, %v380
    %382 = vmatpush.msra.mxu0 %v381
    %v383 = vand.u32 %v46, 4294901760
    %v384 = vsub.f32 %v46, %v383
    %385 = vmatpush.msra.mxu0 %v384
    %v386 = vand.u32 %v44, 4294901760
    %v387 = vsub.f32 %v44, %v386
    %388 = vmatpush.msra.mxu0 %v387
    %v389 = vand.u32 %v42, 4294901760
    %v390 = vsub.f32 %v42, %v389
    %391 = vmatpush.msra.mxu0 %v390
    %v392 = vand.u32 %v40, 4294901760
    %v393 = vsub.f32 %v40, %v392
    %394 = vmatpush.msra.mxu0 %v393
    %v395 = vand.u32 %v38, 4294901760
    %v396 = vsub.f32 %v38, %v395
    %397 = vmatpush.msra.mxu0 %v396
    %v398 = vand.u32 %v36, 4294901760
    %v399 = vsub.f32 %v36, %v398
    %400 = vmatpush.msra.mxu0 %v399
    %v401 = vand.u32 %v34, 4294901760
    %v402 = vsub.f32 %v34, %v401
    %403 = vmatpush.msra.mxu0 %v402
    %v404 = vand.u32 %v193, 4294901760
    %v405 = vsub.f32 %v193, %v404
    %406 = vmatmul.f32.gmra.mxu0 %v405
    %v407 = vpop.f32.mrf.mxu0
    %v408 = vadd.f32 %v350, %v407
    %v409 = vand.u32 %v195, 4294901760
    %v410 = vsub.f32 %v195, %v409
    %411 = vmatmul.f32.gmra.mxu0 %v410
    %v412 = vpop.f32.mrf.mxu0
    %v413 = vadd.f32 %v354, %v412
    %414 = vdwg.mxu0
    %v415 = vand.u32 %v64, 4294901760
    %416 = vmatpush.msra.mxu0 %v415
    %v417 = vand.u32 %v62, 4294901760
    %418 = vmatpush.msra.mxu0 %v417
    %v419 = vand.u32 %v60, 4294901760
    %420 = vmatpush.msra.mxu0 %v419
    %v421 = vand.u32 %v58, 4294901760
    %422 = vmatpush.msra.mxu0 %v421
    %v423 = vand.u32 %v56, 4294901760
    %424 = vmatpush.msra.mxu0 %v423
    %v425 = vand.u32 %v54, 4294901760
    %426 = vmatpush.msra.mxu0 %v425
    %v427 = vand.u32 %v52, 4294901760
    %428 = vmatpush.msra.mxu0 %v427
    %v429 = vand.u32 %v50, 4294901760
    %430 = vmatpush.msra.mxu0 %v429
    %v431 = vand.u32 %v48, 4294901760
    %432 = vmatpush.msra.mxu0 %v431
    %v433 = vand.u32 %v46, 4294901760
    %434 = vmatpush.msra.mxu0 %v433
    %v435 = vand.u32 %v44, 4294901760
    %436 = vmatpush.msra.mxu0 %v435
    %v437 = vand.u32 %v42, 4294901760
    %438 = vmatpush.msra.mxu0 %v437
    %v439 = vand.u32 %v40, 4294901760
    %440 = vmatpush.msra.mxu0 %v439
    %v441 = vand.u32 %v38, 4294901760
    %442 = vmatpush.msra.mxu0 %v441
    %v443 = vand.u32 %v36, 4294901760
    %444 = vmatpush.msra.mxu0 %v443
    %v445 = vand.u32 %v34, 4294901760
    %446 = vmatpush.msra.mxu0 %v445
    %v447 = vand.u32 %v193, 4294901760
    %v448 = vsub.f32 %v193, %v447
    %v449 = vand.u32 %v448, 4294901760
    %450 = vmatmul.f32.gmra.mxu0 %v449
    %v451 = vpop.f32.mrf.mxu0
    %v452 = vadd.f32 %v408, %v451
    %v453 = vand.u32 %v195, 4294901760
    %v454 = vsub.f32 %v195, %v453
    %v455 = vand.u32 %v454, 4294901760
    %456 = vmatmul.f32.gmra.mxu0 %v455
    %v457 = vpop.f32.mrf.mxu0
    %v458 = vadd.f32 %v413, %v457
    %459 = vdwg.mxu0
    %v460 = vand.u32 %v64, 4294901760
    %v461 = vsub.f32 %v64, %v460
    %v462 = vand.u32 %v461, 4294901760
    %463 = vmatpush.msra.mxu0 %v462
    %v464 = vand.u32 %v62, 4294901760
    %v465 = vsub.f32 %v62, %v464
    %v466 = vand.u32 %v465, 4294901760
    %467 = vmatpush.msra.mxu0 %v466
    %v468 = vand.u32 %v60, 4294901760
    %v469 = vsub.f32 %v60, %v468
    %v470 = vand.u32 %v469, 4294901760
    %471 = vmatpush.msra.mxu0 %v470
    %v472 = vand.u32 %v58, 4294901760
    %v473 = vsub.f32 %v58, %v472
    %v474 = vand.u32 %v473, 4294901760
    %475 = vmatpush.msra.mxu0 %v474
    %v476 = vand.u32 %v56, 4294901760
    %v477 = vsub.f32 %v56, %v476
    %v478 = vand.u32 %v477, 4294901760
    %479 = vmatpush.msra.mxu0 %v478
    %v480 = vand.u32 %v54, 4294901760
    %v481 = vsub.f32 %v54, %v480
    %v482 = vand.u32 %v481, 4294901760
    %483 = vmatpush.msra.mxu0 %v482
    %v484 = vand.u32 %v52, 4294901760
    %v485 = vsub.f32 %v52, %v484
    %v486 = vand.u32 %v485, 4294901760
    %487 = vmatpush.msra.mxu0 %v486
    %v488 = vand.u32 %v50, 4294901760
    %v489 = vsub.f32 %v50, %v488
    %v490 = vand.u32 %v489, 4294901760
    %491 = vmatpush.msra.mxu0 %v490
    %v492 = vand.u32 %v48, 4294901760
    %v493 = vsub.f32 %v48, %v492
    %v494 = vand.u32 %v493, 4294901760
    %495 = vmatpush.msra.mxu0 %v494
    %v496 = vand.u32 %v46, 4294901760
    %v497 = vsub.f32 %v46, %v496
    %v498 = vand.u32 %v497, 4294901760
    %499 = vmatpush.msra.mxu0 %v498
    %v500 = vand.u32 %v44, 4294901760
    %v501 = vsub.f32 %v44, %v500
    %v502 = vand.u32 %v501, 4294901760
    %503 = vmatpush.msra.mxu0 %v502
    %v504 = vand.u32 %v42, 4294901760
    %v505 = vsub.f32 %v42, %v504
    %v506 = vand.u32 %v505, 4294901760
    %507 = vmatpush.msra.mxu0 %v506
    %v508 = vand.u32 %v40, 4294901760
    %v509 = vsub.f32 %v40, %v508
    %v510 = vand.u32 %v509, 4294901760
    %511 = vmatpush.msra.mxu0 %v510
    %v512 = vand.u32 %v38, 4294901760
    %v513 = vsub.f32 %v38, %v512
    %v514 = vand.u32 %v513, 4294901760
    %515 = vmatpush.msra.mxu0 %v514
    %v516 = vand.u32 %v36, 4294901760
    %v517 = vsub.f32 %v36, %v516
    %v518 = vand.u32 %v517, 4294901760
    %519 = vmatpush.msra.mxu0 %v518
    %v520 = vand.u32 %v34, 4294901760
    %v521 = vsub.f32 %v34, %v520
    %v522 = vand.u32 %v521, 4294901760
    %523 = vmatpush.msra.mxu0 %v522
    %v524 = vand.u32 %v193, 4294901760
    %525 = vmatmul.f32.gmra.mxu0 %v524
    %v526 = vpop.f32.mrf.mxu0
    %v527 = vadd.f32 %v452, %v526
    %v528 = vand.u32 %v195, 4294901760
    %529 = vmatmul.f32.gmra.mxu0 %v528
    %v530 = vpop.f32.mrf.mxu0
    %v531 = vadd.f32 %v458, %v530
    %532 = vdwg.mxu0
    %v533 = vand.u32 %v64, 4294901760
    %534 = vmatpush.msra.mxu0 %v533
    %v535 = vand.u32 %v62, 4294901760
    %536 = vmatpush.msra.mxu0 %v535
    %v537 = vand.u32 %v60, 4294901760
    %538 = vmatpush.msra.mxu0 %v537
    %v539 = vand.u32 %v58, 4294901760
    %540 = vmatpush.msra.mxu0 %v539
    %v541 = vand.u32 %v56, 4294901760
    %542 = vmatpush.msra.mxu0 %v541
    %v543 = vand.u32 %v54, 4294901760
    %544 = vmatpush.msra.mxu0 %v543
    %v545 = vand.u32 %v52, 4294901760
    %546 = vmatpush.msra.mxu0 %v545
    %v547 = vand.u32 %v50, 4294901760
    %548 = vmatpush.msra.mxu0 %v547
    %v549 = vand.u32 %v48, 4294901760
    %550 = vmatpush.msra.mxu0 %v549
    %v551 = vand.u32 %v46, 4294901760
    %552 = vmatpush.msra.mxu0 %v551
    %v553 = vand.u32 %v44, 4294901760
    %554 = vmatpush.msra.mxu0 %v553
    %v555 = vand.u32 %v42, 4294901760
    %556 = vmatpush.msra.mxu0 %v555
    %v557 = vand.u32 %v40, 4294901760
    %558 = vmatpush.msra.mxu0 %v557
    %v559 = vand.u32 %v38, 4294901760
    %560 = vmatpush.msra.mxu0 %v559
    %v561 = vand.u32 %v36, 4294901760
    %562 = vmatpush.msra.mxu0 %v561
    %v563 = vand.u32 %v34, 4294901760
    %564 = vmatpush.msra.mxu0 %v563
    %v565 = vand.u32 %v193, 4294901760
    %566 = vmatmul.f32.gmra.mxu0 %v565
    %v567 = vpop.f32.mrf.mxu0
    %v568 = vadd.f32 %v527, %v567
    %v569 = vand.u32 %v195, 4294901760
    %570 = vmatmul.f32.gmra.mxu0 %v569
    %v571 = vpop.f32.mrf.mxu0
    %v572 = vadd.f32 %v531, %v571
    %573 = vdwg.mxu0
    %v574 = vand.u32 %v96, 4294901760
    %575 = vmatpush.msra.mxu0 %v574
    %v576 = vand.u32 %v94, 4294901760
    %577 = vmatpush.msra.mxu0 %v576
    %v578 = vand.u32 %v92, 4294901760
    %579 = vmatpush.msra.mxu0 %v578
    %v580 = vand.u32 %v90, 4294901760
    %581 = vmatpush.msra.mxu0 %v580
    %v582 = vand.u32 %v88, 4294901760
    %583 = vmatpush.msra.mxu0 %v582
    %v584 = vand.u32 %v86, 4294901760
    %585 = vmatpush.msra.mxu0 %v584
    %v586 = vand.u32 %v84, 4294901760
    %587 = vmatpush.msra.mxu0 %v586
    %v588 = vand.u32 %v82, 4294901760
    %589 = vmatpush.msra.mxu0 %v588
    %v590 = vand.u32 %v80, 4294901760
    %591 = vmatpush.msra.mxu0 %v590
    %v592 = vand.u32 %v78, 4294901760
    %593 = vmatpush.msra.mxu0 %v592
    %v594 = vand.u32 %v76, 4294901760
    %595 = vmatpush.msra.mxu0 %v594
    %v596 = vand.u32 %v74, 4294901760
    %597 = vmatpush.msra.mxu0 %v596
    %v598 = vand.u32 %v72, 4294901760
    %599 = vmatpush.msra.mxu0 %v598
    %v600 = vand.u32 %v70, 4294901760
    %601 = vmatpush.msra.mxu0 %v600
    %v602 = vand.u32 %v68, 4294901760
    %603 = vmatpush.msra.mxu0 %v602
    %v604 = vand.u32 %v66, 4294901760
    %605 = vmatpush.msra.mxu0 %v604
    %v606 = vand.u32 %v194, 4294901760
    %v607 = vsub.f32 %v194, %v606
    %v608 = vand.u32 %v607, 4294901760
    %v609 = vsub.f32 %v607, %v608
    %v610 = vand.u32 %v609, 4294901760
    %611 = vmatmul.f32.gmra.mxu0 %v610
    %v612 = vpop.f32.mrf.mxu0
    %v613 = vadd.f32 %v568, %v612
    %v614 = vand.u32 %v196, 4294901760
    %v615 = vsub.f32 %v196, %v614
    %v616 = vand.u32 %v615, 4294901760
    %v617 = vsub.f32 %v615, %v616
    %v618 = vand.u32 %v617, 4294901760
    %619 = vmatmul.f32.gmra.mxu0 %v618
    %v620 = vpop.f32.mrf.mxu0
    %v621 = vadd.f32 %v572, %v620
    %622 = vdwg.mxu0
    %v623 = vand.u32 %v96, 4294901760
    %v624 = vsub.f32 %v96, %v623
    %v625 = vand.u32 %v624, 4294901760
    %v626 = vsub.f32 %v624, %v625
    %v627 = vand.u32 %v626, 4294901760
    %628 = vmatpush.msra.mxu0 %v627
    %v629 = vand.u32 %v94, 4294901760
    %v630 = vsub.f32 %v94, %v629
    %v631 = vand.u32 %v630, 4294901760
    %v632 = vsub.f32 %v630, %v631
    %v633 = vand.u32 %v632, 4294901760
    %634 = vmatpush.msra.mxu0 %v633
    %v635 = vand.u32 %v92, 4294901760
    %v636 = vsub.f32 %v92, %v635
    %v637 = vand.u32 %v636, 4294901760
    %v638 = vsub.f32 %v636, %v637
    %v639 = vand.u32 %v638, 4294901760
    %640 = vmatpush.msra.mxu0 %v639
    %v641 = vand.u32 %v90, 4294901760
    %v642 = vsub.f32 %v90, %v641
    %v643 = vand.u32 %v642, 4294901760
    %v644 = vsub.f32 %v642, %v643
    %v645 = vand.u32 %v644, 4294901760
    %646 = vmatpush.msra.mxu0 %v645
    %v647 = vand.u32 %v88, 4294901760
    %v648 = vsub.f32 %v88, %v647
    %v649 = vand.u32 %v648, 4294901760
    %v650 = vsub.f32 %v648, %v649
    %v651 = vand.u32 %v650, 4294901760
    %652 = vmatpush.msra.mxu0 %v651
    %v653 = vand.u32 %v86, 4294901760
    %v654 = vsub.f32 %v86, %v653
    %v655 = vand.u32 %v654, 4294901760
    %v656 = vsub.f32 %v654, %v655
    %v657 = vand.u32 %v656, 4294901760
    %658 = vmatpush.msra.mxu0 %v657
    %v659 = vand.u32 %v84, 4294901760
    %v660 = vsub.f32 %v84, %v659
    %v661 = vand.u32 %v660, 4294901760
    %v662 = vsub.f32 %v660, %v661
    %v663 = vand.u32 %v662, 4294901760
    %664 = vmatpush.msra.mxu0 %v663
    %v665 = vand.u32 %v82, 4294901760
    %v666 = vsub.f32 %v82, %v665
    %v667 = vand.u32 %v666, 4294901760
    %v668 = vsub.f32 %v666, %v667
    %v669 = vand.u32 %v668, 4294901760
    %670 = vmatpush.msra.mxu0 %v669
    %v671 = vand.u32 %v80, 4294901760
    %v672 = vsub.f32 %v80, %v671
    %v673 = vand.u32 %v672, 4294901760
    %v674 = vsub.f32 %v672, %v673
    %v675 = vand.u32 %v674, 4294901760
    %676 = vmatpush.msra.mxu0 %v675
    %v677 = vand.u32 %v78, 4294901760
    %v678 = vsub.f32 %v78, %v677
    %v679 = vand.u32 %v678, 4294901760
    %v680 = vsub.f32 %v678, %v679
    %v681 = vand.u32 %v680, 4294901760
    %682 = vmatpush.msra.mxu0 %v681
    %v683 = vand.u32 %v76, 4294901760
    %v684 = vsub.f32 %v76, %v683
    %v685 = vand.u32 %v684, 4294901760
    %v686 = vsub.f32 %v684, %v685
    %v687 = vand.u32 %v686, 4294901760
    %688 = vmatpush.msra.mxu0 %v687
    %v689 = vand.u32 %v74, 4294901760
    %v690 = vsub.f32 %v74, %v689
    %v691 = vand.u32 %v690, 4294901760
    %v692 = vsub.f32 %v690, %v691
    %v693 = vand.u32 %v692, 4294901760
    %694 = vmatpush.msra.mxu0 %v693
    %v695 = vand.u32 %v72, 4294901760
    %v696 = vsub.f32 %v72, %v695
    %v697 = vand.u32 %v696, 4294901760
    %v698 = vsub.f32 %v696, %v697
    %v699 = vand.u32 %v698, 4294901760
    %700 = vmatpush.msra.mxu0 %v699
    %v701 = vand.u32 %v70, 4294901760
    %v702 = vsub.f32 %v70, %v701
    %v703 = vand.u32 %v702, 4294901760
    %v704 = vsub.f32 %v702, %v703
    %v705 = vand.u32 %v704, 4294901760
    %706 = vmatpush.msra.mxu0 %v705
    %v707 = vand.u32 %v68, 4294901760
    %v708 = vsub.f32 %v68, %v707
    %v709 = vand.u32 %v708, 4294901760
    %v710 = vsub.f32 %v708, %v709
    %v711 = vand.u32 %v710, 4294901760
    %712 = vmatpush.msra.mxu0 %v711
    %v713 = vand.u32 %v66, 4294901760
    %v714 = vsub.f32 %v66, %v713
    %v715 = vand.u32 %v714, 4294901760
    %v716 = vsub.f32 %v714, %v715
    %v717 = vand.u32 %v716, 4294901760
    %718 = vmatpush.msra.mxu0 %v717
    %v719 = vand.u32 %v194, 4294901760
    %720 = vmatmul.f32.gmra.mxu0 %v719
    %v721 = vpop.f32.mrf.mxu0
    %v722 = vadd.f32 %v613, %v721
    %v723 = vand.u32 %v196, 4294901760
    %724 = vmatmul.f32.gmra.mxu0 %v723
    %v725 = vpop.f32.mrf.mxu0
    %v726 = vadd.f32 %v621, %v725
    %727 = vdwg.mxu0
    %v728 = vand.u32 %v96, 4294901760
    %v729 = vsub.f32 %v96, %v728
    %730 = vmatpush.msra.mxu0 %v729
    %v731 = vand.u32 %v94, 4294901760
    %v732 = vsub.f32 %v94, %v731
    %733 = vmatpush.msra.mxu0 %v732
    %v734 = vand.u32 %v92, 4294901760
    %v735 = vsub.f32 %v92, %v734
    %736 = vmatpush.msra.mxu0 %v735
    %v737 = vand.u32 %v90, 4294901760
    %v738 = vsub.f32 %v90, %v737
    %739 = vmatpush.msra.mxu0 %v738
    %v740 = vand.u32 %v88, 4294901760
    %v741 = vsub.f32 %v88, %v740
    %742 = vmatpush.msra.mxu0 %v741
    %v743 = vand.u32 %v86, 4294901760
    %v744 = vsub.f32 %v86, %v743
    %745 = vmatpush.msra.mxu0 %v744
    %v746 = vand.u32 %v84, 4294901760
    %v747 = vsub.f32 %v84, %v746
    %748 = vmatpush.msra.mxu0 %v747
    %v749 = vand.u32 %v82, 4294901760
    %v750 = vsub.f32 %v82, %v749
    %751 = vmatpush.msra.mxu0 %v750
    %v752 = vand.u32 %v80, 4294901760
    %v753 = vsub.f32 %v80, %v752
    %754 = vmatpush.msra.mxu0 %v753
    %v755 = vand.u32 %v78, 4294901760
    %v756 = vsub.f32 %v78, %v755
    %757 = vmatpush.msra.mxu0 %v756
    %v758 = vand.u32 %v76, 4294901760
    %v759 = vsub.f32 %v76, %v758
    %760 = vmatpush.msra.mxu0 %v759
    %v761 = vand.u32 %v74, 4294901760
    %v762 = vsub.f32 %v74, %v761
    %763 = vmatpush.msra.mxu0 %v762
    %v764 = vand.u32 %v72, 4294901760
    %v765 = vsub.f32 %v72, %v764
    %766 = vmatpush.msra.mxu0 %v765
    %v767 = vand.u32 %v70, 4294901760
    %v768 = vsub.f32 %v70, %v767
    %769 = vmatpush.msra.mxu0 %v768
    %v770 = vand.u32 %v68, 4294901760
    %v771 = vsub.f32 %v68, %v770
    %772 = vmatpush.msra.mxu0 %v771
    %v773 = vand.u32 %v66, 4294901760
    %v774 = vsub.f32 %v66, %v773
    %775 = vmatpush.msra.mxu0 %v774
    %v776 = vand.u32 %v194, 4294901760
    %v777 = vsub.f32 %v194, %v776
    %778 = vmatmul.f32.gmra.mxu0 %v777
    %v779 = vpop.f32.mrf.mxu0
    %v780 = vadd.f32 %v722, %v779
    %v781 = vand.u32 %v196, 4294901760
    %v782 = vsub.f32 %v196, %v781
    %783 = vmatmul.f32.gmra.mxu0 %v782
    %v784 = vpop.f32.mrf.mxu0
    %v785 = vadd.f32 %v726, %v784
    %786 = vdwg.mxu0
    %v787 = vand.u32 %v96, 4294901760
    %788 = vmatpush.msra.mxu0 %v787
    %v789 = vand.u32 %v94, 4294901760
    %790 = vmatpush.msra.mxu0 %v789
    %v791 = vand.u32 %v92, 4294901760
    %792 = vmatpush.msra.mxu0 %v791
    %v793 = vand.u32 %v90, 4294901760
    %794 = vmatpush.msra.mxu0 %v793
    %v795 = vand.u32 %v88, 4294901760
    %796 = vmatpush.msra.mxu0 %v795
    %v797 = vand.u32 %v86, 4294901760
    %798 = vmatpush.msra.mxu0 %v797
    %v799 = vand.u32 %v84, 4294901760
    %800 = vmatpush.msra.mxu0 %v799
    %v801 = vand.u32 %v82, 4294901760
    %802 = vmatpush.msra.mxu0 %v801
    %v803 = vand.u32 %v80, 4294901760
    %804 = vmatpush.msra.mxu0 %v803
    %v805 = vand.u32 %v78, 4294901760
    %806 = vmatpush.msra.mxu0 %v805
    %v807 = vand.u32 %v76, 4294901760
    %808 = vmatpush.msra.mxu0 %v807
    %v809 = vand.u32 %v74, 4294901760
    %810 = vmatpush.msra.mxu0 %v809
    %v811 = vand.u32 %v72, 4294901760
    %812 = vmatpush.msra.mxu0 %v811
    %v813 = vand.u32 %v70, 4294901760
    %814 = vmatpush.msra.mxu0 %v813
    %v815 = vand.u32 %v68, 4294901760
    %816 = vmatpush.msra.mxu0 %v815
    %v817 = vand.u32 %v66, 4294901760
    %818 = vmatpush.msra.mxu0 %v817
    %v819 = vand.u32 %v194, 4294901760
    %v820 = vsub.f32 %v194, %v819
    %v821 = vand.u32 %v820, 4294901760
    %822 = vmatmul.f32.gmra.mxu0 %v821
    %v823 = vpop.f32.mrf.mxu0
    %v824 = vadd.f32 %v780, %v823
    %v825 = vand.u32 %v196, 4294901760
    %v826 = vsub.f32 %v196, %v825
    %v827 = vand.u32 %v826, 4294901760
    %828 = vmatmul.f32.gmra.mxu0 %v827
    %v829 = vpop.f32.mrf.mxu0
    %v830 = vadd.f32 %v785, %v829
    %831 = vdwg.mxu0
    %v832 = vand.u32 %v96, 4294901760
    %v833 = vsub.f32 %v96, %v832
    %v834 = vand.u32 %v833, 4294901760
    %835 = vmatpush.msra.mxu0 %v834
    %v836 = vand.u32 %v94, 4294901760
    %v837 = vsub.f32 %v94, %v836
    %v838 = vand.u32 %v837, 4294901760
    %839 = vmatpush.msra.mxu0 %v838
    %v840 = vand.u32 %v92, 4294901760
    %v841 = vsub.f32 %v92, %v840
    %v842 = vand.u32 %v841, 4294901760
    %843 = vmatpush.msra.mxu0 %v842
    %v844 = vand.u32 %v90, 4294901760
    %v845 = vsub.f32 %v90, %v844
    %v846 = vand.u32 %v845, 4294901760
    %847 = vmatpush.msra.mxu0 %v846
    %v848 = vand.u32 %v88, 4294901760
    %v849 = vsub.f32 %v88, %v848
    %v850 = vand.u32 %v849, 4294901760
    %851 = vmatpush.msra.mxu0 %v850
    %v852 = vand.u32 %v86, 4294901760
    %v853 = vsub.f32 %v86, %v852
    %v854 = vand.u32 %v853, 4294901760
    %855 = vmatpush.msra.mxu0 %v854
    %v856 = vand.u32 %v84, 4294901760
    %v857 = vsub.f32 %v84, %v856
    %v858 = vand.u32 %v857, 4294901760
    %859 = vmatpush.msra.mxu0 %v858
    %v860 = vand.u32 %v82, 4294901760
    %v861 = vsub.f32 %v82, %v860
    %v862 = vand.u32 %v861, 4294901760
    %863 = vmatpush.msra.mxu0 %v862
    %v864 = vand.u32 %v80, 4294901760
    %v865 = vsub.f32 %v80, %v864
    %v866 = vand.u32 %v865, 4294901760
    %867 = vmatpush.msra.mxu0 %v866
    %v868 = vand.u32 %v78, 4294901760
    %v869 = vsub.f32 %v78, %v868
    %v870 = vand.u32 %v869, 4294901760
    %871 = vmatpush.msra.mxu0 %v870
    %v872 = vand.u32 %v76, 4294901760
    %v873 = vsub.f32 %v76, %v872
    %v874 = vand.u32 %v873, 4294901760
    %875 = vmatpush.msra.mxu0 %v874
    %v876 = vand.u32 %v74, 4294901760
    %v877 = vsub.f32 %v74, %v876
    %v878 = vand.u32 %v877, 4294901760
    %879 = vmatpush.msra.mxu0 %v878
    %v880 = vand.u32 %v72, 4294901760
    %v881 = vsub.f32 %v72, %v880
    %v882 = vand.u32 %v881, 4294901760
    %883 = vmatpush.msra.mxu0 %v882
    %v884 = vand.u32 %v70, 4294901760
    %v885 = vsub.f32 %v70, %v884
    %v886 = vand.u32 %v885, 4294901760
    %887 = vmatpush.msra.mxu0 %v886
    %v888 = vand.u32 %v68, 4294901760
    %v889 = vsub.f32 %v68, %v888
    %v890 = vand.u32 %v889, 4294901760
    %891 = vmatpush.msra.mxu0 %v890
    %v892 = vand.u32 %v66, 4294901760
    %v893 = vsub.f32 %v66, %v892
    %v894 = vand.u32 %v893, 4294901760
    %895 = vmatpush.msra.mxu0 %v894
    %v896 = vand.u32 %v194, 4294901760
    %897 = vmatmul.f32.gmra.mxu0 %v896
    %v898 = vpop.f32.mrf.mxu0
    %v899 = vadd.f32 %v824, %v898
    %v900 = vand.u32 %v196, 4294901760
    %901 = vmatmul.f32.gmra.mxu0 %v900
    %v902 = vpop.f32.mrf.mxu0
    %v903 = vadd.f32 %v830, %v902
    %904 = vdwg.mxu0
    %v905 = vand.u32 %v96, 4294901760
    %906 = vmatpush.msra.mxu0 %v905
    %v907 = vand.u32 %v94, 4294901760
    %908 = vmatpush.msra.mxu0 %v907
    %v909 = vand.u32 %v92, 4294901760
    %910 = vmatpush.msra.mxu0 %v909
    %v911 = vand.u32 %v90, 4294901760
    %912 = vmatpush.msra.mxu0 %v911
    %v913 = vand.u32 %v88, 4294901760
    %914 = vmatpush.msra.mxu0 %v913
    %v915 = vand.u32 %v86, 4294901760
    %916 = vmatpush.msra.mxu0 %v915
    %v917 = vand.u32 %v84, 4294901760
    %918 = vmatpush.msra.mxu0 %v917
    %v919 = vand.u32 %v82, 4294901760
    %920 = vmatpush.msra.mxu0 %v919
    %v921 = vand.u32 %v80, 4294901760
    %922 = vmatpush.msra.mxu0 %v921
    %v923 = vand.u32 %v78, 4294901760
    %924 = vmatpush.msra.mxu0 %v923
    %v925 = vand.u32 %v76, 4294901760
    %926 = vmatpush.msra.mxu0 %v925
    %v927 = vand.u32 %v74, 4294901760
    %928 = vmatpush.msra.mxu0 %v927
    %v929 = vand.u32 %v72, 4294901760
    %930 = vmatpush.msra.mxu0 %v929
    %v931 = vand.u32 %v70, 4294901760
    %932 = vmatpush.msra.mxu0 %v931
    %v933 = vand.u32 %v68, 4294901760
    %934 = vmatpush.msra.mxu0 %v933
    %v935 = vand.u32 %v66, 4294901760
    %936 = vmatpush.msra.mxu0 %v935
    %v937 = vand.u32 %v194, 4294901760
    %938 = vmatmul.f32.gmra.mxu0 %v937
    %v939 = vpop.f32.mrf.mxu0
    %v940 = vadd.f32 %v899, %v939
    %v941 = vand.u32 %v196, 4294901760
    %942 = vmatmul.f32.gmra.mxu0 %v941
    %v943 = vpop.f32.mrf.mxu0
    %v944 = vadd.f32 %v903, %v943
    %945 = vdwg.mxu0
    %v946 = vand.u32 %v65, 4294901760
    %947 = vmatpush.msra.mxu0 %v946
    %v948 = vand.u32 %v63, 4294901760
    %949 = vmatpush.msra.mxu0 %v948
    %v950 = vand.u32 %v61, 4294901760
    %951 = vmatpush.msra.mxu0 %v950
    %v952 = vand.u32 %v59, 4294901760
    %953 = vmatpush.msra.mxu0 %v952
    %v954 = vand.u32 %v57, 4294901760
    %955 = vmatpush.msra.mxu0 %v954
    %v956 = vand.u32 %v55, 4294901760
    %957 = vmatpush.msra.mxu0 %v956
    %v958 = vand.u32 %v53, 4294901760
    %959 = vmatpush.msra.mxu0 %v958
    %v960 = vand.u32 %v51, 4294901760
    %961 = vmatpush.msra.mxu0 %v960
    %v962 = vand.u32 %v49, 4294901760
    %963 = vmatpush.msra.mxu0 %v962
    %v964 = vand.u32 %v47, 4294901760
    %965 = vmatpush.msra.mxu0 %v964
    %v966 = vand.u32 %v45, 4294901760
    %967 = vmatpush.msra.mxu0 %v966
    %v968 = vand.u32 %v43, 4294901760
    %969 = vmatpush.msra.mxu0 %v968
    %v970 = vand.u32 %v41, 4294901760
    %971 = vmatpush.msra.mxu0 %v970
    %v972 = vand.u32 %v39, 4294901760
    %973 = vmatpush.msra.mxu0 %v972
    %v974 = vand.u32 %v37, 4294901760
    %975 = vmatpush.msra.mxu0 %v974
    %v976 = vand.u32 %v35, 4294901760
    %977 = vmatpush.msra.mxu0 %v976
    %v978 = vand.u32 %v193, 4294901760
    %v979 = vsub.f32 %v193, %v978
    %v980 = vand.u32 %v979, 4294901760
    %v981 = vsub.f32 %v979, %v980
    %v982 = vand.u32 %v981, 4294901760
    %983 = vmatmul.f32.gmra.mxu0 %v982
    %v984 = vpop.f32.mrf.mxu0
    %v985 = vadd.f32 %v199, %v984
    %v986 = vand.u32 %v195, 4294901760
    %v987 = vsub.f32 %v195, %v986
    %v988 = vand.u32 %v987, 4294901760
    %v989 = vsub.f32 %v987, %v988
    %v990 = vand.u32 %v989, 4294901760
    %991 = vmatmul.f32.gmra.mxu0 %v990
    %v992 = vpop.f32.mrf.mxu0
    %v993 = vadd.f32 %v199, %v992
    %994 = vdwg.mxu0
    %v995 = vand.u32 %v65, 4294901760
    %v996 = vsub.f32 %v65, %v995
    %v997 = vand.u32 %v996, 4294901760
    %v998 = vsub.f32 %v996, %v997
    %v999 = vand.u32 %v998, 4294901760
    %1000 = vmatpush.msra.mxu0 %v999
    %v1001 = vand.u32 %v63, 4294901760
    %v1002 = vsub.f32 %v63, %v1001
    %v1003 = vand.u32 %v1002, 4294901760
    %v1004 = vsub.f32 %v1002, %v1003
    %v1005 = vand.u32 %v1004, 4294901760
    %1006 = vmatpush.msra.mxu0 %v1005
    %v1007 = vand.u32 %v61, 4294901760
    %v1008 = vsub.f32 %v61, %v1007
    %v1009 = vand.u32 %v1008, 4294901760
    %v1010 = vsub.f32 %v1008, %v1009
    %v1011 = vand.u32 %v1010, 4294901760
    %1012 = vmatpush.msra.mxu0 %v1011
    %v1013 = vand.u32 %v59, 4294901760
    %v1014 = vsub.f32 %v59, %v1013
    %v1015 = vand.u32 %v1014, 4294901760
    %v1016 = vsub.f32 %v1014, %v1015
    %v1017 = vand.u32 %v1016, 4294901760
    %1018 = vmatpush.msra.mxu0 %v1017
    %v1019 = vand.u32 %v57, 4294901760
    %v1020 = vsub.f32 %v57, %v1019
    %v1021 = vand.u32 %v1020, 4294901760
    %v1022 = vsub.f32 %v1020, %v1021
    %v1023 = vand.u32 %v1022, 4294901760
    %1024 = vmatpush.msra.mxu0 %v1023
    %v1025 = vand.u32 %v55, 4294901760
    %v1026 = vsub.f32 %v55, %v1025
    %v1027 = vand.u32 %v1026, 4294901760
    %v1028 = vsub.f32 %v1026, %v1027
    %v1029 = vand.u32 %v1028, 4294901760
    %1030 = vmatpush.msra.mxu0 %v1029
    %v1031 = vand.u32 %v53, 4294901760
    %v1032 = vsub.f32 %v53, %v1031
    %v1033 = vand.u32 %v1032, 4294901760
    %v1034 = vsub.f32 %v1032, %v1033
    %v1035 = vand.u32 %v1034, 4294901760
    %1036 = vmatpush.msra.mxu0 %v1035
    %v1037 = vand.u32 %v51, 4294901760
    %v1038 = vsub.f32 %v51, %v1037
    %v1039 = vand.u32 %v1038, 4294901760
    %v1040 = vsub.f32 %v1038, %v1039
    %v1041 = vand.u32 %v1040, 4294901760
    %1042 = vmatpush.msra.mxu0 %v1041
    %v1043 = vand.u32 %v49, 4294901760
    %v1044 = vsub.f32 %v49, %v1043
    %v1045 = vand.u32 %v1044, 4294901760
    %v1046 = vsub.f32 %v1044, %v1045
    %v1047 = vand.u32 %v1046, 4294901760
    %1048 = vmatpush.msra.mxu0 %v1047
    %v1049 = vand.u32 %v47, 4294901760
    %v1050 = vsub.f32 %v47, %v1049
    %v1051 = vand.u32 %v1050, 4294901760
    %v1052 = vsub.f32 %v1050, %v1051
    %v1053 = vand.u32 %v1052, 4294901760
    %1054 = vmatpush.msra.mxu0 %v1053
    %v1055 = vand.u32 %v45, 4294901760
    %v1056 = vsub.f32 %v45, %v1055
    %v1057 = vand.u32 %v1056, 4294901760
    %v1058 = vsub.f32 %v1056, %v1057
    %v1059 = vand.u32 %v1058, 4294901760
    %1060 = vmatpush.msra.mxu0 %v1059
    %v1061 = vand.u32 %v43, 4294901760
    %v1062 = vsub.f32 %v43, %v1061
    %v1063 = vand.u32 %v1062, 4294901760
    %v1064 = vsub.f32 %v1062, %v1063
    %v1065 = vand.u32 %v1064, 4294901760
    %1066 = vmatpush.msra.mxu0 %v1065
    %v1067 = vand.u32 %v41, 4294901760
    %v1068 = vsub.f32 %v41, %v1067
    %v1069 = vand.u32 %v1068, 4294901760
    %v1070 = vsub.f32 %v1068, %v1069
    %v1071 = vand.u32 %v1070, 4294901760
    %1072 = vmatpush.msra.mxu0 %v1071
    %v1073 = vand.u32 %v39, 4294901760
    %v1074 = vsub.f32 %v39, %v1073
    %v1075 = vand.u32 %v1074, 4294901760
    %v1076 = vsub.f32 %v1074, %v1075
    %v1077 = vand.u32 %v1076, 4294901760
    %1078 = vmatpush.msra.mxu0 %v1077
    %v1079 = vand.u32 %v37, 4294901760
    %v1080 = vsub.f32 %v37, %v1079
    %v1081 = vand.u32 %v1080, 4294901760
    %v1082 = vsub.f32 %v1080, %v1081
    %v1083 = vand.u32 %v1082, 4294901760
    %1084 = vmatpush.msra.mxu0 %v1083
    %v1085 = vand.u32 %v35, 4294901760
    %v1086 = vsub.f32 %v35, %v1085
    %v1087 = vand.u32 %v1086, 4294901760
    %v1088 = vsub.f32 %v1086, %v1087
    %v1089 = vand.u32 %v1088, 4294901760
    %1090 = vmatpush.msra.mxu0 %v1089
    %v1091 = vand.u32 %v193, 4294901760
    %1092 = vmatmul.f32.gmra.mxu0 %v1091
    %v1093 = vpop.f32.mrf.mxu0
    %v1094 = vadd.f32 %v985, %v1093
    %v1095 = vand.u32 %v195, 4294901760
    %1096 = vmatmul.f32.gmra.mxu0 %v1095
    %v1097 = vpop.f32.mrf.mxu0
    %v1098 = vadd.f32 %v993, %v1097
    %1099 = vdwg.mxu0
    %v1100 = vand.u32 %v65, 4294901760
    %v1101 = vsub.f32 %v65, %v1100
    %1102 = vmatpush.msra.mxu0 %v1101
    %v1103 = vand.u32 %v63, 4294901760
    %v1104 = vsub.f32 %v63, %v1103
    %1105 = vmatpush.msra.mxu0 %v1104
    %v1106 = vand.u32 %v61, 4294901760
    %v1107 = vsub.f32 %v61, %v1106
    %1108 = vmatpush.msra.mxu0 %v1107
    %v1109 = vand.u32 %v59, 4294901760
    %v1110 = vsub.f32 %v59, %v1109
    %1111 = vmatpush.msra.mxu0 %v1110
    %v1112 = vand.u32 %v57, 4294901760
    %v1113 = vsub.f32 %v57, %v1112
    %1114 = vmatpush.msra.mxu0 %v1113
    %v1115 = vand.u32 %v55, 4294901760
    %v1116 = vsub.f32 %v55, %v1115
    %1117 = vmatpush.msra.mxu0 %v1116
    %v1118 = vand.u32 %v53, 4294901760
    %v1119 = vsub.f32 %v53, %v1118
    %1120 = vmatpush.msra.mxu0 %v1119
    %v1121 = vand.u32 %v51, 4294901760
    %v1122 = vsub.f32 %v51, %v1121
    %1123 = vmatpush.msra.mxu0 %v1122
    %v1124 = vand.u32 %v49, 4294901760
    %v1125 = vsub.f32 %v49, %v1124
    %1126 = vmatpush.msra.mxu0 %v1125
    %v1127 = vand.u32 %v47, 4294901760
    %v1128 = vsub.f32 %v47, %v1127
    %1129 = vmatpush.msra.mxu0 %v1128
    %v1130 = vand.u32 %v45, 4294901760
    %v1131 = vsub.f32 %v45, %v1130
    %1132 = vmatpush.msra.mxu0 %v1131
    %v1133 = vand.u32 %v43, 4294901760
    %v1134 = vsub.f32 %v43, %v1133
    %1135 = vmatpush.msra.mxu0 %v1134
    %v1136 = vand.u32 %v41, 4294901760
    %v1137 = vsub.f32 %v41, %v1136
    %1138 = vmatpush.msra.mxu0 %v1137
    %v1139 = vand.u32 %v39, 4294901760
    %v1140 = vsub.f32 %v39, %v1139
    %1141 = vmatpush.msra.mxu0 %v1140
    %v1142 = vand.u32 %v37, 4294901760
    %v1143 = vsub.f32 %v37, %v1142
    %1144 = vmatpush.msra.mxu0 %v1143
    %v1145 = vand.u32 %v35, 4294901760
    %v1146 = vsub.f32 %v35, %v1145
    %1147 = vmatpush.msra.mxu0 %v1146
    %v1148 = vand.u32 %v193, 4294901760
    %v1149 = vsub.f32 %v193, %v1148
    %1150 = vmatmul.f32.gmra.mxu0 %v1149
    %v1151 = vpop.f32.mrf.mxu0
    %v1152 = vadd.f32 %v1094, %v1151
    %v1153 = vand.u32 %v195, 4294901760
    %v1154 = vsub.f32 %v195, %v1153
    %1155 = vmatmul.f32.gmra.mxu0 %v1154
    %v1156 = vpop.f32.mrf.mxu0
    %v1157 = vadd.f32 %v1098, %v1156
    %1158 = vdwg.mxu0
    %v1159 = vand.u32 %v65, 4294901760
    %1160 = vmatpush.msra.mxu0 %v1159
    %v1161 = vand.u32 %v63, 4294901760
    %1162 = vmatpush.msra.mxu0 %v1161
    %v1163 = vand.u32 %v61, 4294901760
    %1164 = vmatpush.msra.mxu0 %v1163
    %v1165 = vand.u32 %v59, 4294901760
    %1166 = vmatpush.msra.mxu0 %v1165
    %v1167 = vand.u32 %v57, 4294901760
    %1168 = vmatpush.msra.mxu0 %v1167
    %v1169 = vand.u32 %v55, 4294901760
    %1170 = vmatpush.msra.mxu0 %v1169
    %v1171 = vand.u32 %v53, 4294901760
    %1172 = vmatpush.msra.mxu0 %v1171
    %v1173 = vand.u32 %v51, 4294901760
    %1174 = vmatpush.msra.mxu0 %v1173
    %v1175 = vand.u32 %v49, 4294901760
    %1176 = vmatpush.msra.mxu0 %v1175
    %v1177 = vand.u32 %v47, 4294901760
    %1178 = vmatpush.msra.mxu0 %v1177
    %v1179 = vand.u32 %v45, 4294901760
    %1180 = vmatpush.msra.mxu0 %v1179
    %v1181 = vand.u32 %v43, 4294901760
    %1182 = vmatpush.msra.mxu0 %v1181
    %v1183 = vand.u32 %v41, 4294901760
    %1184 = vmatpush.msra.mxu0 %v1183
    %v1185 = vand.u32 %v39, 4294901760
    %1186 = vmatpush.msra.mxu0 %v1185
    %v1187 = vand.u32 %v37, 4294901760
    %1188 = vmatpush.msra.mxu0 %v1187
    %v1189 = vand.u32 %v35, 4294901760
    %1190 = vmatpush.msra.mxu0 %v1189
    %v1191 = vand.u32 %v193, 4294901760
    %v1192 = vsub.f32 %v193, %v1191
    %v1193 = vand.u32 %v1192, 4294901760
    %1194 = vmatmul.f32.gmra.mxu0 %v1193
    %v1195 = vpop.f32.mrf.mxu0
    %v1196 = vadd.f32 %v1152, %v1195
    %v1197 = vand.u32 %v195, 4294901760
    %v1198 = vsub.f32 %v195, %v1197
    %v1199 = vand.u32 %v1198, 4294901760
    %1200 = vmatmul.f32.gmra.mxu0 %v1199
    %v1201 = vpop.f32.mrf.mxu0
    %v1202 = vadd.f32 %v1157, %v1201
    %1203 = vdwg.mxu0
    %v1204 = vand.u32 %v65, 4294901760
    %v1205 = vsub.f32 %v65, %v1204
    %v1206 = vand.u32 %v1205, 4294901760
    %1207 = vmatpush.msra.mxu0 %v1206
    %v1208 = vand.u32 %v63, 4294901760
    %v1209 = vsub.f32 %v63, %v1208
    %v1210 = vand.u32 %v1209, 4294901760
    %1211 = vmatpush.msra.mxu0 %v1210
    %v1212 = vand.u32 %v61, 4294901760
    %v1213 = vsub.f32 %v61, %v1212
    %v1214 = vand.u32 %v1213, 4294901760
    %1215 = vmatpush.msra.mxu0 %v1214
    %v1216 = vand.u32 %v59, 4294901760
    %v1217 = vsub.f32 %v59, %v1216
    %v1218 = vand.u32 %v1217, 4294901760
    %1219 = vmatpush.msra.mxu0 %v1218
    %v1220 = vand.u32 %v57, 4294901760
    %v1221 = vsub.f32 %v57, %v1220
    %v1222 = vand.u32 %v1221, 4294901760
    %1223 = vmatpush.msra.mxu0 %v1222
    %v1224 = vand.u32 %v55, 4294901760
    %v1225 = vsub.f32 %v55, %v1224
    %v1226 = vand.u32 %v1225, 4294901760
    %1227 = vmatpush.msra.mxu0 %v1226
    %v1228 = vand.u32 %v53, 4294901760
    %v1229 = vsub.f32 %v53, %v1228
    %v1230 = vand.u32 %v1229, 4294901760
    %1231 = vmatpush.msra.mxu0 %v1230
    %v1232 = vand.u32 %v51, 4294901760
    %v1233 = vsub.f32 %v51, %v1232
    %v1234 = vand.u32 %v1233, 4294901760
    %1235 = vmatpush.msra.mxu0 %v1234
    %v1236 = vand.u32 %v49, 4294901760
    %v1237 = vsub.f32 %v49, %v1236
    %v1238 = vand.u32 %v1237, 4294901760
    %1239 = vmatpush.msra.mxu0 %v1238
    %v1240 = vand.u32 %v47, 4294901760
    %v1241 = vsub.f32 %v47, %v1240
    %v1242 = vand.u32 %v1241, 4294901760
    %1243 = vmatpush.msra.mxu0 %v1242
    %v1244 = vand.u32 %v45, 4294901760
    %v1245 = vsub.f32 %v45, %v1244
    %v1246 = vand.u32 %v1245, 4294901760
    %1247 = vmatpush.msra.mxu0 %v1246
    %v1248 = vand.u32 %v43, 4294901760
    %v1249 = vsub.f32 %v43, %v1248
    %v1250 = vand.u32 %v1249, 4294901760
    %1251 = vmatpush.msra.mxu0 %v1250
    %v1252 = vand.u32 %v41, 4294901760
    %v1253 = vsub.f32 %v41, %v1252
    %v1254 = vand.u32 %v1253, 4294901760
    %1255 = vmatpush.msra.mxu0 %v1254
    %v1256 = vand.u32 %v39, 4294901760
    %v1257 = vsub.f32 %v39, %v1256
    %v1258 = vand.u32 %v1257, 4294901760
    %1259 = vmatpush.msra.mxu0 %v1258
    %v1260 = vand.u32 %v37, 4294901760
    %v1261 = vsub.f32 %v37, %v1260
    %v1262 = vand.u32 %v1261, 4294901760
    %1263 = vmatpush.msra.mxu0 %v1262
    %v1264 = vand.u32 %v35, 4294901760
    %v1265 = vsub.f32 %v35, %v1264
    %v1266 = vand.u32 %v1265, 4294901760
    %1267 = vmatpush.msra.mxu0 %v1266
    %v1268 = vand.u32 %v193, 4294901760
    %1269 = vmatmul.f32.gmra.mxu0 %v1268
    %v1270 = vpop.f32.mrf.mxu0
    %v1271 = vadd.f32 %v1196, %v1270
    %v1272 = vand.u32 %v195, 4294901760
    %1273 = vmatmul.f32.gmra.mxu0 %v1272
    %v1274 = vpop.f32.mrf.mxu0
    %v1275 = vadd.f32 %v1202, %v1274
    %1276 = vdwg.mxu0
    %v1277 = vand.u32 %v65, 4294901760
    %1278 = vmatpush.msra.mxu0 %v1277
    %v1279 = vand.u32 %v63, 4294901760
    %1280 = vmatpush.msra.mxu0 %v1279
    %v1281 = vand.u32 %v61, 4294901760
    %1282 = vmatpush.msra.mxu0 %v1281
    %v1283 = vand.u32 %v59, 4294901760
    %1284 = vmatpush.msra.mxu0 %v1283
    %v1285 = vand.u32 %v57, 4294901760
    %1286 = vmatpush.msra.mxu0 %v1285
    %v1287 = vand.u32 %v55, 4294901760
    %1288 = vmatpush.msra.mxu0 %v1287
    %v1289 = vand.u32 %v53, 4294901760
    %1290 = vmatpush.msra.mxu0 %v1289
    %v1291 = vand.u32 %v51, 4294901760
    %1292 = vmatpush.msra.mxu0 %v1291
    %v1293 = vand.u32 %v49, 4294901760
    %1294 = vmatpush.msra.mxu0 %v1293
    %v1295 = vand.u32 %v47, 4294901760
    %1296 = vmatpush.msra.mxu0 %v1295
    %v1297 = vand.u32 %v45, 4294901760
    %1298 = vmatpush.msra.mxu0 %v1297
    %v1299 = vand.u32 %v43, 4294901760
    %1300 = vmatpush.msra.mxu0 %v1299
    %v1301 = vand.u32 %v41, 4294901760
    %1302 = vmatpush.msra.mxu0 %v1301
    %v1303 = vand.u32 %v39, 4294901760
    %1304 = vmatpush.msra.mxu0 %v1303
    %v1305 = vand.u32 %v37, 4294901760
    %1306 = vmatpush.msra.mxu0 %v1305
    %v1307 = vand.u32 %v35, 4294901760
    %1308 = vmatpush.msra.mxu0 %v1307
    %v1309 = vand.u32 %v193, 4294901760
    %1310 = vmatmul.f32.gmra.mxu0 %v1309
    %v1311 = vpop.f32.mrf.mxu0
    %v1312 = vadd.f32 %v1271, %v1311
    %v1313 = vand.u32 %v195, 4294901760
    %1314 = vmatmul.f32.gmra.mxu0 %v1313
    %v1315 = vpop.f32.mrf.mxu0
    %v1316 = vadd.f32 %v1275, %v1315
    %1317 = vdwg.mxu0
    %v1318 = vand.u32 %v97, 4294901760
    %1319 = vmatpush.msra.mxu0 %v1318
    %v1320 = vand.u32 %v95, 4294901760
    %1321 = vmatpush.msra.mxu0 %v1320
    %v1322 = vand.u32 %v93, 4294901760
    %1323 = vmatpush.msra.mxu0 %v1322
    %v1324 = vand.u32 %v91, 4294901760
    %1325 = vmatpush.msra.mxu0 %v1324
    %v1326 = vand.u32 %v89, 4294901760
    %1327 = vmatpush.msra.mxu0 %v1326
    %v1328 = vand.u32 %v87, 4294901760
    %1329 = vmatpush.msra.mxu0 %v1328
    %v1330 = vand.u32 %v85, 4294901760
    %1331 = vmatpush.msra.mxu0 %v1330
    %v1332 = vand.u32 %v83, 4294901760
    %1333 = vmatpush.msra.mxu0 %v1332
    %v1334 = vand.u32 %v81, 4294901760
    %1335 = vmatpush.msra.mxu0 %v1334
    %v1336 = vand.u32 %v79, 4294901760
    %1337 = vmatpush.msra.mxu0 %v1336
    %v1338 = vand.u32 %v77, 4294901760
    %1339 = vmatpush.msra.mxu0 %v1338
    %v1340 = vand.u32 %v75, 4294901760
    %1341 = vmatpush.msra.mxu0 %v1340
    %v1342 = vand.u32 %v73, 4294901760
    %1343 = vmatpush.msra.mxu0 %v1342
    %v1344 = vand.u32 %v71, 4294901760
    %1345 = vmatpush.msra.mxu0 %v1344
    %v1346 = vand.u32 %v69, 4294901760
    %1347 = vmatpush.msra.mxu0 %v1346
    %v1348 = vand.u32 %v67, 4294901760
    %1349 = vmatpush.msra.mxu0 %v1348
    %v1350 = vand.u32 %v194, 4294901760
    %v1351 = vsub.f32 %v194, %v1350
    %v1352 = vand.u32 %v1351, 4294901760
    %v1353 = vsub.f32 %v1351, %v1352
    %v1354 = vand.u32 %v1353, 4294901760
    %1355 = vmatmul.f32.gmra.mxu0 %v1354
    %v1356 = vpop.f32.mrf.mxu0
    %v1357 = vadd.f32 %v1312, %v1356
    %v1358 = vand.u32 %v196, 4294901760
    %v1359 = vsub.f32 %v196, %v1358
    %v1360 = vand.u32 %v1359, 4294901760
    %v1361 = vsub.f32 %v1359, %v1360
    %v1362 = vand.u32 %v1361, 4294901760
    %1363 = vmatmul.f32.gmra.mxu0 %v1362
    %v1364 = vpop.f32.mrf.mxu0
    %v1365 = vadd.f32 %v1316, %v1364
    %1366 = vdwg.mxu0
    %v1367 = vand.u32 %v97, 4294901760
    %v1368 = vsub.f32 %v97, %v1367
    %v1369 = vand.u32 %v1368, 4294901760
    %v1370 = vsub.f32 %v1368, %v1369
    %v1371 = vand.u32 %v1370, 4294901760
    %1372 = vmatpush.msra.mxu0 %v1371
    %v1373 = vand.u32 %v95, 4294901760
    %v1374 = vsub.f32 %v95, %v1373
    %v1375 = vand.u32 %v1374, 4294901760
    %v1376 = vsub.f32 %v1374, %v1375
    %v1377 = vand.u32 %v1376, 4294901760
    %1378 = vmatpush.msra.mxu0 %v1377
    %v1379 = vand.u32 %v93, 4294901760
    %v1380 = vsub.f32 %v93, %v1379
    %v1381 = vand.u32 %v1380, 4294901760
    %v1382 = vsub.f32 %v1380, %v1381
    %v1383 = vand.u32 %v1382, 4294901760
    %1384 = vmatpush.msra.mxu0 %v1383
    %v1385 = vand.u32 %v91, 4294901760
    %v1386 = vsub.f32 %v91, %v1385
    %v1387 = vand.u32 %v1386, 4294901760
    %v1388 = vsub.f32 %v1386, %v1387
    %v1389 = vand.u32 %v1388, 4294901760
    %1390 = vmatpush.msra.mxu0 %v1389
    %v1391 = vand.u32 %v89, 4294901760
    %v1392 = vsub.f32 %v89, %v1391
    %v1393 = vand.u32 %v1392, 4294901760
    %v1394 = vsub.f32 %v1392, %v1393
    %v1395 = vand.u32 %v1394, 4294901760
    %1396 = vmatpush.msra.mxu0 %v1395
    %v1397 = vand.u32 %v87, 4294901760
    %v1398 = vsub.f32 %v87, %v1397
    %v1399 = vand.u32 %v1398, 4294901760
    %v1400 = vsub.f32 %v1398, %v1399
    %v1401 = vand.u32 %v1400, 4294901760
    %1402 = vmatpush.msra.mxu0 %v1401
    %v1403 = vand.u32 %v85, 4294901760
    %v1404 = vsub.f32 %v85, %v1403
    %v1405 = vand.u32 %v1404, 4294901760
    %v1406 = vsub.f32 %v1404, %v1405
    %v1407 = vand.u32 %v1406, 4294901760
    %1408 = vmatpush.msra.mxu0 %v1407
    %v1409 = vand.u32 %v83, 4294901760
    %v1410 = vsub.f32 %v83, %v1409
    %v1411 = vand.u32 %v1410, 4294901760
    %v1412 = vsub.f32 %v1410, %v1411
    %v1413 = vand.u32 %v1412, 4294901760
    %1414 = vmatpush.msra.mxu0 %v1413
    %v1415 = vand.u32 %v81, 4294901760
    %v1416 = vsub.f32 %v81, %v1415
    %v1417 = vand.u32 %v1416, 4294901760
    %v1418 = vsub.f32 %v1416, %v1417
    %v1419 = vand.u32 %v1418, 4294901760
    %1420 = vmatpush.msra.mxu0 %v1419
    %v1421 = vand.u32 %v79, 4294901760
    %v1422 = vsub.f32 %v79, %v1421
    %v1423 = vand.u32 %v1422, 4294901760
    %v1424 = vsub.f32 %v1422, %v1423
    %v1425 = vand.u32 %v1424, 4294901760
    %1426 = vmatpush.msra.mxu0 %v1425
    %v1427 = vand.u32 %v77, 4294901760
    %v1428 = vsub.f32 %v77, %v1427
    %v1429 = vand.u32 %v1428, 4294901760
    %v1430 = vsub.f32 %v1428, %v1429
    %v1431 = vand.u32 %v1430, 4294901760
    %1432 = vmatpush.msra.mxu0 %v1431
    %v1433 = vand.u32 %v75, 4294901760
    %v1434 = vsub.f32 %v75, %v1433
    %v1435 = vand.u32 %v1434, 4294901760
    %v1436 = vsub.f32 %v1434, %v1435
    %v1437 = vand.u32 %v1436, 4294901760
    %1438 = vmatpush.msra.mxu0 %v1437
    %v1439 = vand.u32 %v73, 4294901760
    %v1440 = vsub.f32 %v73, %v1439
    %v1441 = vand.u32 %v1440, 4294901760
    %v1442 = vsub.f32 %v1440, %v1441
    %v1443 = vand.u32 %v1442, 4294901760
    %1444 = vmatpush.msra.mxu0 %v1443
    %v1445 = vand.u32 %v71, 4294901760
    %v1446 = vsub.f32 %v71, %v1445
    %v1447 = vand.u32 %v1446, 4294901760
    %v1448 = vsub.f32 %v1446, %v1447
    %v1449 = vand.u32 %v1448, 4294901760
    %1450 = vmatpush.msra.mxu0 %v1449
    %v1451 = vand.u32 %v69, 4294901760
    %v1452 = vsub.f32 %v69, %v1451
    %v1453 = vand.u32 %v1452, 4294901760
    %v1454 = vsub.f32 %v1452, %v1453
    %v1455 = vand.u32 %v1454, 4294901760
    %1456 = vmatpush.msra.mxu0 %v1455
    %v1457 = vand.u32 %v67, 4294901760
    %v1458 = vsub.f32 %v67, %v1457
    %v1459 = vand.u32 %v1458, 4294901760
    %v1460 = vsub.f32 %v1458, %v1459
    %v1461 = vand.u32 %v1460, 4294901760
    %1462 = vmatpush.msra.mxu0 %v1461
    %v1463 = vand.u32 %v194, 4294901760
    %1464 = vmatmul.f32.gmra.mxu0 %v1463
    %v1465 = vpop.f32.mrf.mxu0
    %v1466 = vadd.f32 %v1357, %v1465
    %v1467 = vand.u32 %v196, 4294901760
    %1468 = vmatmul.f32.gmra.mxu0 %v1467
    %v1469 = vpop.f32.mrf.mxu0
    %v1470 = vadd.f32 %v1365, %v1469
    %1471 = vdwg.mxu0
    %v1472 = vand.u32 %v97, 4294901760
    %v1473 = vsub.f32 %v97, %v1472
    %1474 = vmatpush.msra.mxu0 %v1473
    %v1475 = vand.u32 %v95, 4294901760
    %v1476 = vsub.f32 %v95, %v1475
    %1477 = vmatpush.msra.mxu0 %v1476
    %v1478 = vand.u32 %v93, 4294901760
    %v1479 = vsub.f32 %v93, %v1478
    %1480 = vmatpush.msra.mxu0 %v1479
    %v1481 = vand.u32 %v91, 4294901760
    %v1482 = vsub.f32 %v91, %v1481
    %1483 = vmatpush.msra.mxu0 %v1482
    %v1484 = vand.u32 %v89, 4294901760
    %v1485 = vsub.f32 %v89, %v1484
    %1486 = vmatpush.msra.mxu0 %v1485
    %v1487 = vand.u32 %v87, 4294901760
    %v1488 = vsub.f32 %v87, %v1487
    %1489 = vmatpush.msra.mxu0 %v1488
    %v1490 = vand.u32 %v85, 4294901760
    %v1491 = vsub.f32 %v85, %v1490
    %1492 = vmatpush.msra.mxu0 %v1491
    %v1493 = vand.u32 %v83, 4294901760
    %v1494 = vsub.f32 %v83, %v1493
    %1495 = vmatpush.msra.mxu0 %v1494
    %v1496 = vand.u32 %v81, 4294901760
    %v1497 = vsub.f32 %v81, %v1496
    %1498 = vmatpush.msra.mxu0 %v1497
    %v1499 = vand.u32 %v79, 4294901760
    %v1500 = vsub.f32 %v79, %v1499
    %1501 = vmatpush.msra.mxu0 %v1500
    %v1502 = vand.u32 %v77, 4294901760
    %v1503 = vsub.f32 %v77, %v1502
    %1504 = vmatpush.msra.mxu0 %v1503
    %v1505 = vand.u32 %v75, 4294901760
    %v1506 = vsub.f32 %v75, %v1505
    %1507 = vmatpush.msra.mxu0 %v1506
    %v1508 = vand.u32 %v73, 4294901760
    %v1509 = vsub.f32 %v73, %v1508
    %1510 = vmatpush.msra.mxu0 %v1509
    %v1511 = vand.u32 %v71, 4294901760
    %v1512 = vsub.f32 %v71, %v1511
    %1513 = vmatpush.msra.mxu0 %v1512
    %v1514 = vand.u32 %v69, 4294901760
    %v1515 = vsub.f32 %v69, %v1514
    %1516 = vmatpush.msra.mxu0 %v1515
    %v1517 = vand.u32 %v67, 4294901760
    %v1518 = vsub.f32 %v67, %v1517
    %1519 = vmatpush.msra.mxu0 %v1518
    %v1520 = vand.u32 %v194, 4294901760
    %v1521 = vsub.f32 %v194, %v1520
    %1522 = vmatmul.f32.gmra.mxu0 %v1521
    %v1523 = vpop.f32.mrf.mxu0
    %v1524 = vadd.f32 %v1466, %v1523
    %v1525 = vand.u32 %v196, 4294901760
    %v1526 = vsub.f32 %v196, %v1525
    %1527 = vmatmul.f32.gmra.mxu0 %v1526
    %v1528 = vpop.f32.mrf.mxu0
    %v1529 = vadd.f32 %v1470, %v1528
    %1530 = vdwg.mxu0
    %v1531 = vand.u32 %v97, 4294901760
    %1532 = vmatpush.msra.mxu0 %v1531
    %v1533 = vand.u32 %v95, 4294901760
    %1534 = vmatpush.msra.mxu0 %v1533
    %v1535 = vand.u32 %v93, 4294901760
    %1536 = vmatpush.msra.mxu0 %v1535
    %v1537 = vand.u32 %v91, 4294901760
    %1538 = vmatpush.msra.mxu0 %v1537
    %v1539 = vand.u32 %v89, 4294901760
    %1540 = vmatpush.msra.mxu0 %v1539
    %v1541 = vand.u32 %v87, 4294901760
    %1542 = vmatpush.msra.mxu0 %v1541
    %v1543 = vand.u32 %v85, 4294901760
    %1544 = vmatpush.msra.mxu0 %v1543
    %v1545 = vand.u32 %v83, 4294901760
    %1546 = vmatpush.msra.mxu0 %v1545
    %v1547 = vand.u32 %v81, 4294901760
    %1548 = vmatpush.msra.mxu0 %v1547
    %v1549 = vand.u32 %v79, 4294901760
    %1550 = vmatpush.msra.mxu0 %v1549
    %v1551 = vand.u32 %v77, 4294901760
    %1552 = vmatpush.msra.mxu0 %v1551
    %v1553 = vand.u32 %v75, 4294901760
    %1554 = vmatpush.msra.mxu0 %v1553
    %v1555 = vand.u32 %v73, 4294901760
    %1556 = vmatpush.msra.mxu0 %v1555
    %v1557 = vand.u32 %v71, 4294901760
    %1558 = vmatpush.msra.mxu0 %v1557
    %v1559 = vand.u32 %v69, 4294901760
    %1560 = vmatpush.msra.mxu0 %v1559
    %v1561 = vand.u32 %v67, 4294901760
    %1562 = vmatpush.msra.mxu0 %v1561
    %v1563 = vand.u32 %v194, 4294901760
    %v1564 = vsub.f32 %v194, %v1563
    %v1565 = vand.u32 %v1564, 4294901760
    %1566 = vmatmul.f32.gmra.mxu0 %v1565
    %v1567 = vpop.f32.mrf.mxu0
    %v1568 = vadd.f32 %v1524, %v1567
    %v1569 = vand.u32 %v196, 4294901760
    %v1570 = vsub.f32 %v196, %v1569
    %v1571 = vand.u32 %v1570, 4294901760
    %1572 = vmatmul.f32.gmra.mxu0 %v1571
    %v1573 = vpop.f32.mrf.mxu0
    %v1574 = vadd.f32 %v1529, %v1573
    %1575 = vdwg.mxu0
    %v1576 = vand.u32 %v97, 4294901760
    %v1577 = vsub.f32 %v97, %v1576
    %v1578 = vand.u32 %v1577, 4294901760
    %1579 = vmatpush.msra.mxu0 %v1578
    %v1580 = vand.u32 %v95, 4294901760
    %v1581 = vsub.f32 %v95, %v1580
    %v1582 = vand.u32 %v1581, 4294901760
    %1583 = vmatpush.msra.mxu0 %v1582
    %v1584 = vand.u32 %v93, 4294901760
    %v1585 = vsub.f32 %v93, %v1584
    %v1586 = vand.u32 %v1585, 4294901760
    %1587 = vmatpush.msra.mxu0 %v1586
    %v1588 = vand.u32 %v91, 4294901760
    %v1589 = vsub.f32 %v91, %v1588
    %v1590 = vand.u32 %v1589, 4294901760
    %1591 = vmatpush.msra.mxu0 %v1590
    %v1592 = vand.u32 %v89, 4294901760
    %v1593 = vsub.f32 %v89, %v1592
    %v1594 = vand.u32 %v1593, 4294901760
    %1595 = vmatpush.msra.mxu0 %v1594
    %v1596 = vand.u32 %v87, 4294901760
    %v1597 = vsub.f32 %v87, %v1596
    %v1598 = vand.u32 %v1597, 4294901760
    %1599 = vmatpush.msra.mxu0 %v1598
    %v1600 = vand.u32 %v85, 4294901760
    %v1601 = vsub.f32 %v85, %v1600
    %v1602 = vand.u32 %v1601, 4294901760
    %1603 = vmatpush.msra.mxu0 %v1602
    %v1604 = vand.u32 %v83, 4294901760
    %v1605 = vsub.f32 %v83, %v1604
    %v1606 = vand.u32 %v1605, 4294901760
    %1607 = vmatpush.msra.mxu0 %v1606
    %v1608 = vand.u32 %v81, 4294901760
    %v1609 = vsub.f32 %v81, %v1608
    %v1610 = vand.u32 %v1609, 4294901760
    %1611 = vmatpush.msra.mxu0 %v1610
    %v1612 = vand.u32 %v79, 4294901760
    %v1613 = vsub.f32 %v79, %v1612
    %v1614 = vand.u32 %v1613, 4294901760
    %1615 = vmatpush.msra.mxu0 %v1614
    %v1616 = vand.u32 %v77, 4294901760
    %v1617 = vsub.f32 %v77, %v1616
    %v1618 = vand.u32 %v1617, 4294901760
    %1619 = vmatpush.msra.mxu0 %v1618
    %v1620 = vand.u32 %v75, 4294901760
    %v1621 = vsub.f32 %v75, %v1620
    %v1622 = vand.u32 %v1621, 4294901760
    %1623 = vmatpush.msra.mxu0 %v1622
    %v1624 = vand.u32 %v73, 4294901760
    %v1625 = vsub.f32 %v73, %v1624
    %v1626 = vand.u32 %v1625, 4294901760
    %1627 = vmatpush.msra.mxu0 %v1626
    %v1628 = vand.u32 %v71, 4294901760
    %v1629 = vsub.f32 %v71, %v1628
    %v1630 = vand.u32 %v1629, 4294901760
    %1631 = vmatpush.msra.mxu0 %v1630
    %v1632 = vand.u32 %v69, 4294901760
    %v1633 = vsub.f32 %v69, %v1632
    %v1634 = vand.u32 %v1633, 4294901760
    %1635 = vmatpush.msra.mxu0 %v1634
    %v1636 = vand.u32 %v67, 4294901760
    %v1637 = vsub.f32 %v67, %v1636
    %v1638 = vand.u32 %v1637, 4294901760
    %1639 = vmatpush.msra.mxu0 %v1638
    %v1640 = vand.u32 %v194, 4294901760
    %1641 = vmatmul.f32.gmra.mxu0 %v1640
    %v1642 = vpop.f32.mrf.mxu0
    %v1643 = vadd.f32 %v1568, %v1642
    %v1644 = vand.u32 %v196, 4294901760
    %1645 = vmatmul.f32.gmra.mxu0 %v1644
    %v1646 = vpop.f32.mrf.mxu0
    %v1647 = vadd.f32 %v1574, %v1646
    %1648 = vdwg.mxu0
    %v1649 = vand.u32 %v97, 4294901760
    %1650 = vmatpush.msra.mxu0 %v1649
    %v1651 = vand.u32 %v95, 4294901760
    %1652 = vmatpush.msra.mxu0 %v1651
    %v1653 = vand.u32 %v93, 4294901760
    %1654 = vmatpush.msra.mxu0 %v1653
    %v1655 = vand.u32 %v91, 4294901760
    %1656 = vmatpush.msra.mxu0 %v1655
    %v1657 = vand.u32 %v89, 4294901760
    %1658 = vmatpush.msra.mxu0 %v1657
    %v1659 = vand.u32 %v87, 4294901760
    %1660 = vmatpush.msra.mxu0 %v1659
    %v1661 = vand.u32 %v85, 4294901760
    %1662 = vmatpush.msra.mxu0 %v1661
    %v1663 = vand.u32 %v83, 4294901760
    %1664 = vmatpush.msra.mxu0 %v1663
    %v1665 = vand.u32 %v81, 4294901760
    %1666 = vmatpush.msra.mxu0 %v1665
    %v1667 = vand.u32 %v79, 4294901760
    %1668 = vmatpush.msra.mxu0 %v1667
    %v1669 = vand.u32 %v77, 4294901760
    %1670 = vmatpush.msra.mxu0 %v1669
    %v1671 = vand.u32 %v75, 4294901760
    %1672 = vmatpush.msra.mxu0 %v1671
    %v1673 = vand.u32 %v73, 4294901760
    %1674 = vmatpush.msra.mxu0 %v1673
    %v1675 = vand.u32 %v71, 4294901760
    %1676 = vmatpush.msra.mxu0 %v1675
    %v1677 = vand.u32 %v69, 4294901760
    %1678 = vmatpush.msra.mxu0 %v1677
    %v1679 = vand.u32 %v67, 4294901760
    %1680 = vmatpush.msra.mxu0 %v1679
    %v1681 = vand.u32 %v194, 4294901760
    %1682 = vmatmul.f32.gmra.mxu0 %v1681
    %v1683 = vpop.f32.mrf.mxu0
    %v1684 = vadd.f32 %v1643, %v1683
    %v1685 = vand.u32 %v196, 4294901760
    %1686 = vmatmul.f32.gmra.mxu0 %v1685
    %v1687 = vpop.f32.mrf.mxu0
    %v1688 = vadd.f32 %v1647, %v1687
    %1689 = vdwg.mxu0
    %1690 = vst [vmem:[#allocation5] sm:$0xff] %v940
    %1691 = vst [vmem:[#allocation5 + $0x8] sm:$0xff] %v1684
    %1692 = vst [vmem:[#allocation5 + $0x10] sm:$0xff] %v944
    %1693 = vst [vmem:[#allocation5 + $0x18] sm:$0xff] %v1688
    %s1694 = scalar_lea.vmem %s0, 48
    %v1695 = vld [vmem:[%s1694] sm:$0xff]
    %v1696 = vld [vmem:[%s1694 + $0x8] sm:$0xff]
    %v1697 = vld [vmem:[%s1694 + $0x10] sm:$0xff]
    %v1698 = vld [vmem:[%s1694 + $0x18] sm:$0xff]
    %v1699 = vmul.f32 %v109, %v1695
    %v1700 = vmul.f32 %v110, %v1696
    %v1701 = vmul.f32 %v109, %v1697
    %v1702 = vmul.f32 %v110, %v1698
    %v1703 = vld [vmem:[%s1694] sm:$0xfe]
    %v1704 = vld [vmem:[%s1694 + $0x8] sm:$0xfe]
    %v1705 = vld [vmem:[%s1694 + $0x20] sm:$0x1]
    %v1706 = vld [vmem:[%s1694 + $0x28] sm:$0x1]
    %v1707 = vmul.f32 %v122, %v1703
    %v1708 = vmul.f32 %v123, %v1704
    %v1709 = vmul.f32 %v122, %v1697
    %v1710 = vmul.f32 %v123, %v1698
    %v1711 = vmul.f32 %v122, %v1705
    %v1712 = vmul.f32 %v123, %v1706
    %v1719 = vrot.slane %v1707, 1
    %v1720 = vrot.slane %v1709, 1
    %v1721 = vsel %vm138, %v1719, %v1720
    %v1722 = vrot.slane %v1708, 1
    %v1723 = vrot.slane %v1710, 1
    %v1724 = vsel %vm138, %v1722, %v1723
    %v1725 = vrot.slane %v1711, 1
    %v1726 = vsel %vm138, %v1720, %v1725
    %v1727 = vrot.slane %v1712, 1
    %v1728 = vsel %vm138, %v1723, %v1727
    %v1733 = vadd.f32 %v1699, %v1721
    %v1734 = vadd.f32 %v1700, %v1724
    %v1735 = vadd.f32 %v1701, %v1726
    %v1736 = vadd.f32 %v1702, %v1728
    %v1737 = vld [vmem:[%s1694] sm:$0xfc]
    %v1738 = vld [vmem:[%s1694 + $0x8] sm:$0xfc]
    %v1739 = vld [vmem:[%s1694 + $0x20] sm:$0x3]
    %v1740 = vld [vmem:[%s1694 + $0x28] sm:$0x3]
    %v1741 = vmul.f32 %v162, %v1737
    %v1742 = vmul.f32 %v163, %v1738
    %v1743 = vmul.f32 %v162, %v1697
    %v1744 = vmul.f32 %v163, %v1698
    %v1745 = vmul.f32 %v162, %v1739
    %v1746 = vmul.f32 %v163, %v1740
    %v1753 = vrot.slane %v1741, 2
    %v1754 = vrot.slane %v1743, 2
    %v1755 = vsel %vm178, %v1753, %v1754
    %v1756 = vrot.slane %v1742, 2
    %v1757 = vrot.slane %v1744, 2
    %v1758 = vsel %vm178, %v1756, %v1757
    %v1759 = vrot.slane %v1745, 2
    %v1760 = vsel %vm178, %v1754, %v1759
    %v1761 = vrot.slane %v1746, 2
    %v1762 = vsel %vm178, %v1757, %v1761
    %v1767 = vadd.f32 %v1733, %v1755
    %v1768 = vadd.f32 %v1734, %v1758
    %v1769 = vadd.f32 %v1735, %v1760
    %v1770 = vadd.f32 %v1736, %v1762
    %v1771 = vand.u32 %v64, 4294901760
    %1772 = vmatpush.msra.mxu0 %v1771
    %v1773 = vand.u32 %v62, 4294901760
    %1774 = vmatpush.msra.mxu0 %v1773
    %v1775 = vand.u32 %v60, 4294901760
    %1776 = vmatpush.msra.mxu0 %v1775
    %v1777 = vand.u32 %v58, 4294901760
    %1778 = vmatpush.msra.mxu0 %v1777
    %v1779 = vand.u32 %v56, 4294901760
    %1780 = vmatpush.msra.mxu0 %v1779
    %v1781 = vand.u32 %v54, 4294901760
    %1782 = vmatpush.msra.mxu0 %v1781
    %v1783 = vand.u32 %v52, 4294901760
    %1784 = vmatpush.msra.mxu0 %v1783
    %v1785 = vand.u32 %v50, 4294901760
    %1786 = vmatpush.msra.mxu0 %v1785
    %v1787 = vand.u32 %v48, 4294901760
    %1788 = vmatpush.msra.mxu0 %v1787
    %v1789 = vand.u32 %v46, 4294901760
    %1790 = vmatpush.msra.mxu0 %v1789
    %v1791 = vand.u32 %v44, 4294901760
    %1792 = vmatpush.msra.mxu0 %v1791
    %v1793 = vand.u32 %v42, 4294901760
    %1794 = vmatpush.msra.mxu0 %v1793
    %v1795 = vand.u32 %v40, 4294901760
    %1796 = vmatpush.msra.mxu0 %v1795
    %v1797 = vand.u32 %v38, 4294901760
    %1798 = vmatpush.msra.mxu0 %v1797
    %v1799 = vand.u32 %v36, 4294901760
    %1800 = vmatpush.msra.mxu0 %v1799
    %v1801 = vand.u32 %v34, 4294901760
    %1802 = vmatpush.msra.mxu0 %v1801
    %v1803 = vand.u32 %v1767, 4294901760
    %v1804 = vsub.f32 %v1767, %v1803
    %v1805 = vand.u32 %v1804, 4294901760
    %v1806 = vsub.f32 %v1804, %v1805
    %v1807 = vand.u32 %v1806, 4294901760
    %1808 = vmatmul.f32.gmra.mxu0 %v1807
    %v1809 = vpop.f32.mrf.mxu0
    %v1810 = vadd.f32 %v198, %v1809
    %v1811 = vand.u32 %v1769, 4294901760
    %v1812 = vsub.f32 %v1769, %v1811
    %v1813 = vand.u32 %v1812, 4294901760
    %v1814 = vsub.f32 %v1812, %v1813
    %v1815 = vand.u32 %v1814, 4294901760
    %1816 = vmatmul.f32.gmra.mxu0 %v1815
    %v1817 = vpop.f32.mrf.mxu0
    %v1818 = vadd.f32 %v198, %v1817
    %1819 = vdwg.mxu0
    %v1820 = vand.u32 %v64, 4294901760
    %v1821 = vsub.f32 %v64, %v1820
    %v1822 = vand.u32 %v1821, 4294901760
    %v1823 = vsub.f32 %v1821, %v1822
    %v1824 = vand.u32 %v1823, 4294901760
    %1825 = vmatpush.msra.mxu0 %v1824
    %v1826 = vand.u32 %v62, 4294901760
    %v1827 = vsub.f32 %v62, %v1826
    %v1828 = vand.u32 %v1827, 4294901760
    %v1829 = vsub.f32 %v1827, %v1828
    %v1830 = vand.u32 %v1829, 4294901760
    %1831 = vmatpush.msra.mxu0 %v1830
    %v1832 = vand.u32 %v60, 4294901760
    %v1833 = vsub.f32 %v60, %v1832
    %v1834 = vand.u32 %v1833, 4294901760
    %v1835 = vsub.f32 %v1833, %v1834
    %v1836 = vand.u32 %v1835, 4294901760
    %1837 = vmatpush.msra.mxu0 %v1836
    %v1838 = vand.u32 %v58, 4294901760
    %v1839 = vsub.f32 %v58, %v1838
    %v1840 = vand.u32 %v1839, 4294901760
    %v1841 = vsub.f32 %v1839, %v1840
    %v1842 = vand.u32 %v1841, 4294901760
    %1843 = vmatpush.msra.mxu0 %v1842
    %v1844 = vand.u32 %v56, 4294901760
    %v1845 = vsub.f32 %v56, %v1844
    %v1846 = vand.u32 %v1845, 4294901760
    %v1847 = vsub.f32 %v1845, %v1846
    %v1848 = vand.u32 %v1847, 4294901760
    %1849 = vmatpush.msra.mxu0 %v1848
    %v1850 = vand.u32 %v54, 4294901760
    %v1851 = vsub.f32 %v54, %v1850
    %v1852 = vand.u32 %v1851, 4294901760
    %v1853 = vsub.f32 %v1851, %v1852
    %v1854 = vand.u32 %v1853, 4294901760
    %1855 = vmatpush.msra.mxu0 %v1854
    %v1856 = vand.u32 %v52, 4294901760
    %v1857 = vsub.f32 %v52, %v1856
    %v1858 = vand.u32 %v1857, 4294901760
    %v1859 = vsub.f32 %v1857, %v1858
    %v1860 = vand.u32 %v1859, 4294901760
    %1861 = vmatpush.msra.mxu0 %v1860
    %v1862 = vand.u32 %v50, 4294901760
    %v1863 = vsub.f32 %v50, %v1862
    %v1864 = vand.u32 %v1863, 4294901760
    %v1865 = vsub.f32 %v1863, %v1864
    %v1866 = vand.u32 %v1865, 4294901760
    %1867 = vmatpush.msra.mxu0 %v1866
    %v1868 = vand.u32 %v48, 4294901760
    %v1869 = vsub.f32 %v48, %v1868
    %v1870 = vand.u32 %v1869, 4294901760
    %v1871 = vsub.f32 %v1869, %v1870
    %v1872 = vand.u32 %v1871, 4294901760
    %1873 = vmatpush.msra.mxu0 %v1872
    %v1874 = vand.u32 %v46, 4294901760
    %v1875 = vsub.f32 %v46, %v1874
    %v1876 = vand.u32 %v1875, 4294901760
    %v1877 = vsub.f32 %v1875, %v1876
    %v1878 = vand.u32 %v1877, 4294901760
    %1879 = vmatpush.msra.mxu0 %v1878
    %v1880 = vand.u32 %v44, 4294901760
    %v1881 = vsub.f32 %v44, %v1880
    %v1882 = vand.u32 %v1881, 4294901760
    %v1883 = vsub.f32 %v1881, %v1882
    %v1884 = vand.u32 %v1883, 4294901760
    %1885 = vmatpush.msra.mxu0 %v1884
    %v1886 = vand.u32 %v42, 4294901760
    %v1887 = vsub.f32 %v42, %v1886
    %v1888 = vand.u32 %v1887, 4294901760
    %v1889 = vsub.f32 %v1887, %v1888
    %v1890 = vand.u32 %v1889, 4294901760
    %1891 = vmatpush.msra.mxu0 %v1890
    %v1892 = vand.u32 %v40, 4294901760
    %v1893 = vsub.f32 %v40, %v1892
    %v1894 = vand.u32 %v1893, 4294901760
    %v1895 = vsub.f32 %v1893, %v1894
    %v1896 = vand.u32 %v1895, 4294901760
    %1897 = vmatpush.msra.mxu0 %v1896
    %v1898 = vand.u32 %v38, 4294901760
    %v1899 = vsub.f32 %v38, %v1898
    %v1900 = vand.u32 %v1899, 4294901760
    %v1901 = vsub.f32 %v1899, %v1900
    %v1902 = vand.u32 %v1901, 4294901760
    %1903 = vmatpush.msra.mxu0 %v1902
    %v1904 = vand.u32 %v36, 4294901760
    %v1905 = vsub.f32 %v36, %v1904
    %v1906 = vand.u32 %v1905, 4294901760
    %v1907 = vsub.f32 %v1905, %v1906
    %v1908 = vand.u32 %v1907, 4294901760
    %1909 = vmatpush.msra.mxu0 %v1908
    %v1910 = vand.u32 %v34, 4294901760
    %v1911 = vsub.f32 %v34, %v1910
    %v1912 = vand.u32 %v1911, 4294901760
    %v1913 = vsub.f32 %v1911, %v1912
    %v1914 = vand.u32 %v1913, 4294901760
    %1915 = vmatpush.msra.mxu0 %v1914
    %v1916 = vand.u32 %v1767, 4294901760
    %1917 = vmatmul.f32.gmra.mxu0 %v1916
    %v1918 = vpop.f32.mrf.mxu0
    %v1919 = vadd.f32 %v1810, %v1918
    %v1920 = vand.u32 %v1769, 4294901760
    %1921 = vmatmul.f32.gmra.mxu0 %v1920
    %v1922 = vpop.f32.mrf.mxu0
    %v1923 = vadd.f32 %v1818, %v1922
    %1924 = vdwg.mxu0
    %v1925 = vand.u32 %v64, 4294901760
    %v1926 = vsub.f32 %v64, %v1925
    %1927 = vmatpush.msra.mxu0 %v1926
    %v1928 = vand.u32 %v62, 4294901760
    %v1929 = vsub.f32 %v62, %v1928
    %1930 = vmatpush.msra.mxu0 %v1929
    %v1931 = vand.u32 %v60, 4294901760
    %v1932 = vsub.f32 %v60, %v1931
    %1933 = vmatpush.msra.mxu0 %v1932
    %v1934 = vand.u32 %v58, 4294901760
    %v1935 = vsub.f32 %v58, %v1934
    %1936 = vmatpush.msra.mxu0 %v1935
    %v1937 = vand.u32 %v56, 4294901760
    %v1938 = vsub.f32 %v56, %v1937
    %1939 = vmatpush.msra.mxu0 %v1938
    %v1940 = vand.u32 %v54, 4294901760
    %v1941 = vsub.f32 %v54, %v1940
    %1942 = vmatpush.msra.mxu0 %v1941
    %v1943 = vand.u32 %v52, 4294901760
    %v1944 = vsub.f32 %v52, %v1943
    %1945 = vmatpush.msra.mxu0 %v1944
    %v1946 = vand.u32 %v50, 4294901760
    %v1947 = vsub.f32 %v50, %v1946
    %1948 = vmatpush.msra.mxu0 %v1947
    %v1949 = vand.u32 %v48, 4294901760
    %v1950 = vsub.f32 %v48, %v1949
    %1951 = vmatpush.msra.mxu0 %v1950
    %v1952 = vand.u32 %v46, 4294901760
    %v1953 = vsub.f32 %v46, %v1952
    %1954 = vmatpush.msra.mxu0 %v1953
    %v1955 = vand.u32 %v44, 4294901760
    %v1956 = vsub.f32 %v44, %v1955
    %1957 = vmatpush.msra.mxu0 %v1956
    %v1958 = vand.u32 %v42, 4294901760
    %v1959 = vsub.f32 %v42, %v1958
    %1960 = vmatpush.msra.mxu0 %v1959
    %v1961 = vand.u32 %v40, 4294901760
    %v1962 = vsub.f32 %v40, %v1961
    %1963 = vmatpush.msra.mxu0 %v1962
    %v1964 = vand.u32 %v38, 4294901760
    %v1965 = vsub.f32 %v38, %v1964
    %1966 = vmatpush.msra.mxu0 %v1965
    %v1967 = vand.u32 %v36, 4294901760
    %v1968 = vsub.f32 %v36, %v1967
    %1969 = vmatpush.msra.mxu0 %v1968
    %v1970 = vand.u32 %v34, 4294901760
    %v1971 = vsub.f32 %v34, %v1970
    %1972 = vmatpush.msra.mxu0 %v1971
    %v1973 = vand.u32 %v1767, 4294901760
    %v1974 = vsub.f32 %v1767, %v1973
    %1975 = vmatmul.f32.gmra.mxu0 %v1974
    %v1976 = vpop.f32.mrf.mxu0
    %v1977 = vadd.f32 %v1919, %v1976
    %v1978 = vand.u32 %v1769, 4294901760
    %v1979 = vsub.f32 %v1769, %v1978
    %1980 = vmatmul.f32.gmra.mxu0 %v1979
    %v1981 = vpop.f32.mrf.mxu0
    %v1982 = vadd.f32 %v1923, %v1981
    %1983 = vdwg.mxu0
    %v1984 = vand.u32 %v64, 4294901760
    %1985 = vmatpush.msra.mxu0 %v1984
    %v1986 = vand.u32 %v62, 4294901760
    %1987 = vmatpush.msra.mxu0 %v1986
    %v1988 = vand.u32 %v60, 4294901760
    %1989 = vmatpush.msra.mxu0 %v1988
    %v1990 = vand.u32 %v58, 4294901760
    %1991 = vmatpush.msra.mxu0 %v1990
    %v1992 = vand.u32 %v56, 4294901760
    %1993 = vmatpush.msra.mxu0 %v1992
    %v1994 = vand.u32 %v54, 4294901760
    %1995 = vmatpush.msra.mxu0 %v1994
    %v1996 = vand.u32 %v52, 4294901760
    %1997 = vmatpush.msra.mxu0 %v1996
    %v1998 = vand.u32 %v50, 4294901760
    %1999 = vmatpush.msra.mxu0 %v1998
    %v2000 = vand.u32 %v48, 4294901760
    %2001 = vmatpush.msra.mxu0 %v2000
    %v2002 = vand.u32 %v46, 4294901760
    %2003 = vmatpush.msra.mxu0 %v2002
    %v2004 = vand.u32 %v44, 4294901760
    %2005 = vmatpush.msra.mxu0 %v2004
    %v2006 = vand.u32 %v42, 4294901760
    %2007 = vmatpush.msra.mxu0 %v2006
    %v2008 = vand.u32 %v40, 4294901760
    %2009 = vmatpush.msra.mxu0 %v2008
    %v2010 = vand.u32 %v38, 4294901760
    %2011 = vmatpush.msra.mxu0 %v2010
    %v2012 = vand.u32 %v36, 4294901760
    %2013 = vmatpush.msra.mxu0 %v2012
    %v2014 = vand.u32 %v34, 4294901760
    %2015 = vmatpush.msra.mxu0 %v2014
    %v2016 = vand.u32 %v1767, 4294901760
    %v2017 = vsub.f32 %v1767, %v2016
    %v2018 = vand.u32 %v2017, 4294901760
    %2019 = vmatmul.f32.gmra.mxu0 %v2018
    %v2020 = vpop.f32.mrf.mxu0
    %v2021 = vadd.f32 %v1977, %v2020
    %v2022 = vand.u32 %v1769, 4294901760
    %v2023 = vsub.f32 %v1769, %v2022
    %v2024 = vand.u32 %v2023, 4294901760
    %2025 = vmatmul.f32.gmra.mxu0 %v2024
    %v2026 = vpop.f32.mrf.mxu0
    %v2027 = vadd.f32 %v1982, %v2026
    %2028 = vdwg.mxu0
    %v2029 = vand.u32 %v64, 4294901760
    %v2030 = vsub.f32 %v64, %v2029
    %v2031 = vand.u32 %v2030, 4294901760
    %2032 = vmatpush.msra.mxu0 %v2031
    %v2033 = vand.u32 %v62, 4294901760
    %v2034 = vsub.f32 %v62, %v2033
    %v2035 = vand.u32 %v2034, 4294901760
    %2036 = vmatpush.msra.mxu0 %v2035
    %v2037 = vand.u32 %v60, 4294901760
    %v2038 = vsub.f32 %v60, %v2037
    %v2039 = vand.u32 %v2038, 4294901760
    %2040 = vmatpush.msra.mxu0 %v2039
    %v2041 = vand.u32 %v58, 4294901760
    %v2042 = vsub.f32 %v58, %v2041
    %v2043 = vand.u32 %v2042, 4294901760
    %2044 = vmatpush.msra.mxu0 %v2043
    %v2045 = vand.u32 %v56, 4294901760
    %v2046 = vsub.f32 %v56, %v2045
    %v2047 = vand.u32 %v2046, 4294901760
    %2048 = vmatpush.msra.mxu0 %v2047
    %v2049 = vand.u32 %v54, 4294901760
    %v2050 = vsub.f32 %v54, %v2049
    %v2051 = vand.u32 %v2050, 4294901760
    %2052 = vmatpush.msra.mxu0 %v2051
    %v2053 = vand.u32 %v52, 4294901760
    %v2054 = vsub.f32 %v52, %v2053
    %v2055 = vand.u32 %v2054, 4294901760
    %2056 = vmatpush.msra.mxu0 %v2055
    %v2057 = vand.u32 %v50, 4294901760
    %v2058 = vsub.f32 %v50, %v2057
    %v2059 = vand.u32 %v2058, 4294901760
    %2060 = vmatpush.msra.mxu0 %v2059
    %v2061 = vand.u32 %v48, 4294901760
    %v2062 = vsub.f32 %v48, %v2061
    %v2063 = vand.u32 %v2062, 4294901760
    %2064 = vmatpush.msra.mxu0 %v2063
    %v2065 = vand.u32 %v46, 4294901760
    %v2066 = vsub.f32 %v46, %v2065
    %v2067 = vand.u32 %v2066, 4294901760
    %2068 = vmatpush.msra.mxu0 %v2067
    %v2069 = vand.u32 %v44, 4294901760
    %v2070 = vsub.f32 %v44, %v2069
    %v2071 = vand.u32 %v2070, 4294901760
    %2072 = vmatpush.msra.mxu0 %v2071
    %v2073 = vand.u32 %v42, 4294901760
    %v2074 = vsub.f32 %v42, %v2073
    %v2075 = vand.u32 %v2074, 4294901760
    %2076 = vmatpush.msra.mxu0 %v2075
    %v2077 = vand.u32 %v40, 4294901760
    %v2078 = vsub.f32 %v40, %v2077
    %v2079 = vand.u32 %v2078, 4294901760
    %2080 = vmatpush.msra.mxu0 %v2079
    %v2081 = vand.u32 %v38, 4294901760
    %v2082 = vsub.f32 %v38, %v2081
    %v2083 = vand.u32 %v2082, 4294901760
    %2084 = vmatpush.msra.mxu0 %v2083
    %v2085 = vand.u32 %v36, 4294901760
    %v2086 = vsub.f32 %v36, %v2085
    %v2087 = vand.u32 %v2086, 4294901760
    %2088 = vmatpush.msra.mxu0 %v2087
    %v2089 = vand.u32 %v34, 4294901760
    %v2090 = vsub.f32 %v34, %v2089
    %v2091 = vand.u32 %v2090, 4294901760
    %2092 = vmatpush.msra.mxu0 %v2091
    %v2093 = vand.u32 %v1767, 4294901760
    %2094 = vmatmul.f32.gmra.mxu0 %v2093
    %v2095 = vpop.f32.mrf.mxu0
    %v2096 = vadd.f32 %v2021, %v2095
    %v2097 = vand.u32 %v1769, 4294901760
    %2098 = vmatmul.f32.gmra.mxu0 %v2097
    %v2099 = vpop.f32.mrf.mxu0
    %v2100 = vadd.f32 %v2027, %v2099
    %2101 = vdwg.mxu0
    %v2102 = vand.u32 %v64, 4294901760
    %2103 = vmatpush.msra.mxu0 %v2102
    %v2104 = vand.u32 %v62, 4294901760
    %2105 = vmatpush.msra.mxu0 %v2104
    %v2106 = vand.u32 %v60, 4294901760
    %2107 = vmatpush.msra.mxu0 %v2106
    %v2108 = vand.u32 %v58, 4294901760
    %2109 = vmatpush.msra.mxu0 %v2108
    %v2110 = vand.u32 %v56, 4294901760
    %2111 = vmatpush.msra.mxu0 %v2110
    %v2112 = vand.u32 %v54, 4294901760
    %2113 = vmatpush.msra.mxu0 %v2112
    %v2114 = vand.u32 %v52, 4294901760
    %2115 = vmatpush.msra.mxu0 %v2114
    %v2116 = vand.u32 %v50, 4294901760
    %2117 = vmatpush.msra.mxu0 %v2116
    %v2118 = vand.u32 %v48, 4294901760
    %2119 = vmatpush.msra.mxu0 %v2118
    %v2120 = vand.u32 %v46, 4294901760
    %2121 = vmatpush.msra.mxu0 %v2120
    %v2122 = vand.u32 %v44, 4294901760
    %2123 = vmatpush.msra.mxu0 %v2122
    %v2124 = vand.u32 %v42, 4294901760
    %2125 = vmatpush.msra.mxu0 %v2124
    %v2126 = vand.u32 %v40, 4294901760
    %2127 = vmatpush.msra.mxu0 %v2126
    %v2128 = vand.u32 %v38, 4294901760
    %2129 = vmatpush.msra.mxu0 %v2128
    %v2130 = vand.u32 %v36, 4294901760
    %2131 = vmatpush.msra.mxu0 %v2130
    %v2132 = vand.u32 %v34, 4294901760
    %2133 = vmatpush.msra.mxu0 %v2132
    %v2134 = vand.u32 %v1767, 4294901760
    %2135 = vmatmul.f32.gmra.mxu0 %v2134
    %v2136 = vpop.f32.mrf.mxu0
    %v2137 = vadd.f32 %v2096, %v2136
    %v2138 = vand.u32 %v1769, 4294901760
    %2139 = vmatmul.f32.gmra.mxu0 %v2138
    %v2140 = vpop.f32.mrf.mxu0
    %v2141 = vadd.f32 %v2100, %v2140
    %2142 = vdwg.mxu0
    %v2143 = vand.u32 %v96, 4294901760
    %2144 = vmatpush.msra.mxu0 %v2143
    %v2145 = vand.u32 %v94, 4294901760
    %2146 = vmatpush.msra.mxu0 %v2145
    %v2147 = vand.u32 %v92, 4294901760
    %2148 = vmatpush.msra.mxu0 %v2147
    %v2149 = vand.u32 %v90, 4294901760
    %2150 = vmatpush.msra.mxu0 %v2149
    %v2151 = vand.u32 %v88, 4294901760
    %2152 = vmatpush.msra.mxu0 %v2151
    %v2153 = vand.u32 %v86, 4294901760
    %2154 = vmatpush.msra.mxu0 %v2153
    %v2155 = vand.u32 %v84, 4294901760
    %2156 = vmatpush.msra.mxu0 %v2155
    %v2157 = vand.u32 %v82, 4294901760
    %2158 = vmatpush.msra.mxu0 %v2157
    %v2159 = vand.u32 %v80, 4294901760
    %2160 = vmatpush.msra.mxu0 %v2159
    %v2161 = vand.u32 %v78, 4294901760
    %2162 = vmatpush.msra.mxu0 %v2161
    %v2163 = vand.u32 %v76, 4294901760
    %2164 = vmatpush.msra.mxu0 %v2163
    %v2165 = vand.u32 %v74, 4294901760
    %2166 = vmatpush.msra.mxu0 %v2165
    %v2167 = vand.u32 %v72, 4294901760
    %2168 = vmatpush.msra.mxu0 %v2167
    %v2169 = vand.u32 %v70, 4294901760
    %2170 = vmatpush.msra.mxu0 %v2169
    %v2171 = vand.u32 %v68, 4294901760
    %2172 = vmatpush.msra.mxu0 %v2171
    %v2173 = vand.u32 %v66, 4294901760
    %2174 = vmatpush.msra.mxu0 %v2173
    %v2175 = vand.u32 %v1768, 4294901760
    %v2176 = vsub.f32 %v1768, %v2175
    %v2177 = vand.u32 %v2176, 4294901760
    %v2178 = vsub.f32 %v2176, %v2177
    %v2179 = vand.u32 %v2178, 4294901760
    %2180 = vmatmul.f32.gmra.mxu0 %v2179
    %v2181 = vpop.f32.mrf.mxu0
    %v2182 = vadd.f32 %v2137, %v2181
    %v2183 = vand.u32 %v1770, 4294901760
    %v2184 = vsub.f32 %v1770, %v2183
    %v2185 = vand.u32 %v2184, 4294901760
    %v2186 = vsub.f32 %v2184, %v2185
    %v2187 = vand.u32 %v2186, 4294901760
    %2188 = vmatmul.f32.gmra.mxu0 %v2187
    %v2189 = vpop.f32.mrf.mxu0
    %v2190 = vadd.f32 %v2141, %v2189
    %2191 = vdwg.mxu0
    %v2192 = vand.u32 %v96, 4294901760
    %v2193 = vsub.f32 %v96, %v2192
    %v2194 = vand.u32 %v2193, 4294901760
    %v2195 = vsub.f32 %v2193, %v2194
    %v2196 = vand.u32 %v2195, 4294901760
    %2197 = vmatpush.msra.mxu0 %v2196
    %v2198 = vand.u32 %v94, 4294901760
    %v2199 = vsub.f32 %v94, %v2198
    %v2200 = vand.u32 %v2199, 4294901760
    %v2201 = vsub.f32 %v2199, %v2200
    %v2202 = vand.u32 %v2201, 4294901760
    %2203 = vmatpush.msra.mxu0 %v2202
    %v2204 = vand.u32 %v92, 4294901760
    %v2205 = vsub.f32 %v92, %v2204
    %v2206 = vand.u32 %v2205, 4294901760
    %v2207 = vsub.f32 %v2205, %v2206
    %v2208 = vand.u32 %v2207, 4294901760
    %2209 = vmatpush.msra.mxu0 %v2208
    %v2210 = vand.u32 %v90, 4294901760
    %v2211 = vsub.f32 %v90, %v2210
    %v2212 = vand.u32 %v2211, 4294901760
    %v2213 = vsub.f32 %v2211, %v2212
    %v2214 = vand.u32 %v2213, 4294901760
    %2215 = vmatpush.msra.mxu0 %v2214
    %v2216 = vand.u32 %v88, 4294901760
    %v2217 = vsub.f32 %v88, %v2216
    %v2218 = vand.u32 %v2217, 4294901760
    %v2219 = vsub.f32 %v2217, %v2218
    %v2220 = vand.u32 %v2219, 4294901760
    %2221 = vmatpush.msra.mxu0 %v2220
    %v2222 = vand.u32 %v86, 4294901760
    %v2223 = vsub.f32 %v86, %v2222
    %v2224 = vand.u32 %v2223, 4294901760
    %v2225 = vsub.f32 %v2223, %v2224
    %v2226 = vand.u32 %v2225, 4294901760
    %2227 = vmatpush.msra.mxu0 %v2226
    %v2228 = vand.u32 %v84, 4294901760
    %v2229 = vsub.f32 %v84, %v2228
    %v2230 = vand.u32 %v2229, 4294901760
    %v2231 = vsub.f32 %v2229, %v2230
    %v2232 = vand.u32 %v2231, 4294901760
    %2233 = vmatpush.msra.mxu0 %v2232
    %v2234 = vand.u32 %v82, 4294901760
    %v2235 = vsub.f32 %v82, %v2234
    %v2236 = vand.u32 %v2235, 4294901760
    %v2237 = vsub.f32 %v2235, %v2236
    %v2238 = vand.u32 %v2237, 4294901760
    %2239 = vmatpush.msra.mxu0 %v2238
    %v2240 = vand.u32 %v80, 4294901760
    %v2241 = vsub.f32 %v80, %v2240
    %v2242 = vand.u32 %v2241, 4294901760
    %v2243 = vsub.f32 %v2241, %v2242
    %v2244 = vand.u32 %v2243, 4294901760
    %2245 = vmatpush.msra.mxu0 %v2244
    %v2246 = vand.u32 %v78, 4294901760
    %v2247 = vsub.f32 %v78, %v2246
    %v2248 = vand.u32 %v2247, 4294901760
    %v2249 = vsub.f32 %v2247, %v2248
    %v2250 = vand.u32 %v2249, 4294901760
    %2251 = vmatpush.msra.mxu0 %v2250
    %v2252 = vand.u32 %v76, 4294901760
    %v2253 = vsub.f32 %v76, %v2252
    %v2254 = vand.u32 %v2253, 4294901760
    %v2255 = vsub.f32 %v2253, %v2254
    %v2256 = vand.u32 %v2255, 4294901760
    %2257 = vmatpush.msra.mxu0 %v2256
    %v2258 = vand.u32 %v74, 4294901760
    %v2259 = vsub.f32 %v74, %v2258
    %v2260 = vand.u32 %v2259, 4294901760
    %v2261 = vsub.f32 %v2259, %v2260
    %v2262 = vand.u32 %v2261, 4294901760
    %2263 = vmatpush.msra.mxu0 %v2262
    %v2264 = vand.u32 %v72, 4294901760
    %v2265 = vsub.f32 %v72, %v2264
    %v2266 = vand.u32 %v2265, 4294901760
    %v2267 = vsub.f32 %v2265, %v2266
    %v2268 = vand.u32 %v2267, 4294901760
    %2269 = vmatpush.msra.mxu0 %v2268
    %v2270 = vand.u32 %v70, 4294901760
    %v2271 = vsub.f32 %v70, %v2270
    %v2272 = vand.u32 %v2271, 4294901760
    %v2273 = vsub.f32 %v2271, %v2272
    %v2274 = vand.u32 %v2273, 4294901760
    %2275 = vmatpush.msra.mxu0 %v2274
    %v2276 = vand.u32 %v68, 4294901760
    %v2277 = vsub.f32 %v68, %v2276
    %v2278 = vand.u32 %v2277, 4294901760
    %v2279 = vsub.f32 %v2277, %v2278
    %v2280 = vand.u32 %v2279, 4294901760
    %2281 = vmatpush.msra.mxu0 %v2280
    %v2282 = vand.u32 %v66, 4294901760
    %v2283 = vsub.f32 %v66, %v2282
    %v2284 = vand.u32 %v2283, 4294901760
    %v2285 = vsub.f32 %v2283, %v2284
    %v2286 = vand.u32 %v2285, 4294901760
    %2287 = vmatpush.msra.mxu0 %v2286
    %v2288 = vand.u32 %v1768, 4294901760
    %2289 = vmatmul.f32.gmra.mxu0 %v2288
    %v2290 = vpop.f32.mrf.mxu0
    %v2291 = vadd.f32 %v2182, %v2290
    %v2292 = vand.u32 %v1770, 4294901760
    %2293 = vmatmul.f32.gmra.mxu0 %v2292
    %v2294 = vpop.f32.mrf.mxu0
    %v2295 = vadd.f32 %v2190, %v2294
    %2296 = vdwg.mxu0
    %v2297 = vand.u32 %v96, 4294901760
    %v2298 = vsub.f32 %v96, %v2297
    %2299 = vmatpush.msra.mxu0 %v2298
    %v2300 = vand.u32 %v94, 4294901760
    %v2301 = vsub.f32 %v94, %v2300
    %2302 = vmatpush.msra.mxu0 %v2301
    %v2303 = vand.u32 %v92, 4294901760
    %v2304 = vsub.f32 %v92, %v2303
    %2305 = vmatpush.msra.mxu0 %v2304
    %v2306 = vand.u32 %v90, 4294901760
    %v2307 = vsub.f32 %v90, %v2306
    %2308 = vmatpush.msra.mxu0 %v2307
    %v2309 = vand.u32 %v88, 4294901760
    %v2310 = vsub.f32 %v88, %v2309
    %2311 = vmatpush.msra.mxu0 %v2310
    %v2312 = vand.u32 %v86, 4294901760
    %v2313 = vsub.f32 %v86, %v2312
    %2314 = vmatpush.msra.mxu0 %v2313
    %v2315 = vand.u32 %v84, 4294901760
    %v2316 = vsub.f32 %v84, %v2315
    %2317 = vmatpush.msra.mxu0 %v2316
    %v2318 = vand.u32 %v82, 4294901760
    %v2319 = vsub.f32 %v82, %v2318
    %2320 = vmatpush.msra.mxu0 %v2319
    %v2321 = vand.u32 %v80, 4294901760
    %v2322 = vsub.f32 %v80, %v2321
    %2323 = vmatpush.msra.mxu0 %v2322
    %v2324 = vand.u32 %v78, 4294901760
    %v2325 = vsub.f32 %v78, %v2324
    %2326 = vmatpush.msra.mxu0 %v2325
    %v2327 = vand.u32 %v76, 4294901760
    %v2328 = vsub.f32 %v76, %v2327
    %2329 = vmatpush.msra.mxu0 %v2328
    %v2330 = vand.u32 %v74, 4294901760
    %v2331 = vsub.f32 %v74, %v2330
    %2332 = vmatpush.msra.mxu0 %v2331
    %v2333 = vand.u32 %v72, 4294901760
    %v2334 = vsub.f32 %v72, %v2333
    %2335 = vmatpush.msra.mxu0 %v2334
    %v2336 = vand.u32 %v70, 4294901760
    %v2337 = vsub.f32 %v70, %v2336
    %2338 = vmatpush.msra.mxu0 %v2337
    %v2339 = vand.u32 %v68, 4294901760
    %v2340 = vsub.f32 %v68, %v2339
    %2341 = vmatpush.msra.mxu0 %v2340
    %v2342 = vand.u32 %v66, 4294901760
    %v2343 = vsub.f32 %v66, %v2342
    %2344 = vmatpush.msra.mxu0 %v2343
    %v2345 = vand.u32 %v1768, 4294901760
    %v2346 = vsub.f32 %v1768, %v2345
    %2347 = vmatmul.f32.gmra.mxu0 %v2346
    %v2348 = vpop.f32.mrf.mxu0
    %v2349 = vadd.f32 %v2291, %v2348
    %v2350 = vand.u32 %v1770, 4294901760
    %v2351 = vsub.f32 %v1770, %v2350
    %2352 = vmatmul.f32.gmra.mxu0 %v2351
    %v2353 = vpop.f32.mrf.mxu0
    %v2354 = vadd.f32 %v2295, %v2353
    %2355 = vdwg.mxu0
    %v2356 = vand.u32 %v96, 4294901760
    %2357 = vmatpush.msra.mxu0 %v2356
    %v2358 = vand.u32 %v94, 4294901760
    %2359 = vmatpush.msra.mxu0 %v2358
    %v2360 = vand.u32 %v92, 4294901760
    %2361 = vmatpush.msra.mxu0 %v2360
    %v2362 = vand.u32 %v90, 4294901760
    %2363 = vmatpush.msra.mxu0 %v2362
    %v2364 = vand.u32 %v88, 4294901760
    %2365 = vmatpush.msra.mxu0 %v2364
    %v2366 = vand.u32 %v86, 4294901760
    %2367 = vmatpush.msra.mxu0 %v2366
    %v2368 = vand.u32 %v84, 4294901760
    %2369 = vmatpush.msra.mxu0 %v2368
    %v2370 = vand.u32 %v82, 4294901760
    %2371 = vmatpush.msra.mxu0 %v2370
    %v2372 = vand.u32 %v80, 4294901760
    %2373 = vmatpush.msra.mxu0 %v2372
    %v2374 = vand.u32 %v78, 4294901760
    %2375 = vmatpush.msra.mxu0 %v2374
    %v2376 = vand.u32 %v76, 4294901760
    %2377 = vmatpush.msra.mxu0 %v2376
    %v2378 = vand.u32 %v74, 4294901760
    %2379 = vmatpush.msra.mxu0 %v2378
    %v2380 = vand.u32 %v72, 4294901760
    %2381 = vmatpush.msra.mxu0 %v2380
    %v2382 = vand.u32 %v70, 4294901760
    %2383 = vmatpush.msra.mxu0 %v2382
    %v2384 = vand.u32 %v68, 4294901760
    %2385 = vmatpush.msra.mxu0 %v2384
    %v2386 = vand.u32 %v66, 4294901760
    %2387 = vmatpush.msra.mxu0 %v2386
    %v2388 = vand.u32 %v1768, 4294901760
    %v2389 = vsub.f32 %v1768, %v2388
    %v2390 = vand.u32 %v2389, 4294901760
    %2391 = vmatmul.f32.gmra.mxu0 %v2390
    %v2392 = vpop.f32.mrf.mxu0
    %v2393 = vadd.f32 %v2349, %v2392
    %v2394 = vand.u32 %v1770, 4294901760
    %v2395 = vsub.f32 %v1770, %v2394
    %v2396 = vand.u32 %v2395, 4294901760
    %2397 = vmatmul.f32.gmra.mxu0 %v2396
    %v2398 = vpop.f32.mrf.mxu0
    %v2399 = vadd.f32 %v2354, %v2398
    %2400 = vdwg.mxu0
    %v2401 = vand.u32 %v96, 4294901760
    %v2402 = vsub.f32 %v96, %v2401
    %v2403 = vand.u32 %v2402, 4294901760
    %2404 = vmatpush.msra.mxu0 %v2403
    %v2405 = vand.u32 %v94, 4294901760
    %v2406 = vsub.f32 %v94, %v2405
    %v2407 = vand.u32 %v2406, 4294901760
    %2408 = vmatpush.msra.mxu0 %v2407
    %v2409 = vand.u32 %v92, 4294901760
    %v2410 = vsub.f32 %v92, %v2409
    %v2411 = vand.u32 %v2410, 4294901760
    %2412 = vmatpush.msra.mxu0 %v2411
    %v2413 = vand.u32 %v90, 4294901760
    %v2414 = vsub.f32 %v90, %v2413
    %v2415 = vand.u32 %v2414, 4294901760
    %2416 = vmatpush.msra.mxu0 %v2415
    %v2417 = vand.u32 %v88, 4294901760
    %v2418 = vsub.f32 %v88, %v2417
    %v2419 = vand.u32 %v2418, 4294901760
    %2420 = vmatpush.msra.mxu0 %v2419
    %v2421 = vand.u32 %v86, 4294901760
    %v2422 = vsub.f32 %v86, %v2421
    %v2423 = vand.u32 %v2422, 4294901760
    %2424 = vmatpush.msra.mxu0 %v2423
    %v2425 = vand.u32 %v84, 4294901760
    %v2426 = vsub.f32 %v84, %v2425
    %v2427 = vand.u32 %v2426, 4294901760
    %2428 = vmatpush.msra.mxu0 %v2427
    %v2429 = vand.u32 %v82, 4294901760
    %v2430 = vsub.f32 %v82, %v2429
    %v2431 = vand.u32 %v2430, 4294901760
    %2432 = vmatpush.msra.mxu0 %v2431
    %v2433 = vand.u32 %v80, 4294901760
    %v2434 = vsub.f32 %v80, %v2433
    %v2435 = vand.u32 %v2434, 4294901760
    %2436 = vmatpush.msra.mxu0 %v2435
    %v2437 = vand.u32 %v78, 4294901760
    %v2438 = vsub.f32 %v78, %v2437
    %v2439 = vand.u32 %v2438, 4294901760
    %2440 = vmatpush.msra.mxu0 %v2439
    %v2441 = vand.u32 %v76, 4294901760
    %v2442 = vsub.f32 %v76, %v2441
    %v2443 = vand.u32 %v2442, 4294901760
    %2444 = vmatpush.msra.mxu0 %v2443
    %v2445 = vand.u32 %v74, 4294901760
    %v2446 = vsub.f32 %v74, %v2445
    %v2447 = vand.u32 %v2446, 4294901760
    %2448 = vmatpush.msra.mxu0 %v2447
    %v2449 = vand.u32 %v72, 4294901760
    %v2450 = vsub.f32 %v72, %v2449
    %v2451 = vand.u32 %v2450, 4294901760
    %2452 = vmatpush.msra.mxu0 %v2451
    %v2453 = vand.u32 %v70, 4294901760
    %v2454 = vsub.f32 %v70, %v2453
    %v2455 = vand.u32 %v2454, 4294901760
    %2456 = vmatpush.msra.mxu0 %v2455
    %v2457 = vand.u32 %v68, 4294901760
    %v2458 = vsub.f32 %v68, %v2457
    %v2459 = vand.u32 %v2458, 4294901760
    %2460 = vmatpush.msra.mxu0 %v2459
    %v2461 = vand.u32 %v66, 4294901760
    %v2462 = vsub.f32 %v66, %v2461
    %v2463 = vand.u32 %v2462, 4294901760
    %2464 = vmatpush.msra.mxu0 %v2463
    %v2465 = vand.u32 %v1768, 4294901760
    %2466 = vmatmul.f32.gmra.mxu0 %v2465
    %v2467 = vpop.f32.mrf.mxu0
    %v2468 = vadd.f32 %v2393, %v2467
    %v2469 = vand.u32 %v1770, 4294901760
    %2470 = vmatmul.f32.gmra.mxu0 %v2469
    %v2471 = vpop.f32.mrf.mxu0
    %v2472 = vadd.f32 %v2399, %v2471
    %2473 = vdwg.mxu0
    %v2474 = vand.u32 %v96, 4294901760
    %2475 = vmatpush.msra.mxu0 %v2474
    %v2476 = vand.u32 %v94, 4294901760
    %2477 = vmatpush.msra.mxu0 %v2476
    %v2478 = vand.u32 %v92, 4294901760
    %2479 = vmatpush.msra.mxu0 %v2478
    %v2480 = vand.u32 %v90, 4294901760
    %2481 = vmatpush.msra.mxu0 %v2480
    %v2482 = vand.u32 %v88, 4294901760
    %2483 = vmatpush.msra.mxu0 %v2482
    %v2484 = vand.u32 %v86, 4294901760
    %2485 = vmatpush.msra.mxu0 %v2484
    %v2486 = vand.u32 %v84, 4294901760
    %2487 = vmatpush.msra.mxu0 %v2486
    %v2488 = vand.u32 %v82, 4294901760
    %2489 = vmatpush.msra.mxu0 %v2488
    %v2490 = vand.u32 %v80, 4294901760
    %2491 = vmatpush.msra.mxu0 %v2490
    %v2492 = vand.u32 %v78, 4294901760
    %2493 = vmatpush.msra.mxu0 %v2492
    %v2494 = vand.u32 %v76, 4294901760
    %2495 = vmatpush.msra.mxu0 %v2494
    %v2496 = vand.u32 %v74, 4294901760
    %2497 = vmatpush.msra.mxu0 %v2496
    %v2498 = vand.u32 %v72, 4294901760
    %2499 = vmatpush.msra.mxu0 %v2498
    %v2500 = vand.u32 %v70, 4294901760
    %2501 = vmatpush.msra.mxu0 %v2500
    %v2502 = vand.u32 %v68, 4294901760
    %2503 = vmatpush.msra.mxu0 %v2502
    %v2504 = vand.u32 %v66, 4294901760
    %2505 = vmatpush.msra.mxu0 %v2504
    %v2506 = vand.u32 %v1768, 4294901760
    %2507 = vmatmul.f32.gmra.mxu0 %v2506
    %v2508 = vpop.f32.mrf.mxu0
    %v2509 = vadd.f32 %v2468, %v2508
    %v2510 = vand.u32 %v1770, 4294901760
    %2511 = vmatmul.f32.gmra.mxu0 %v2510
    %v2512 = vpop.f32.mrf.mxu0
    %v2513 = vadd.f32 %v2472, %v2512
    %2514 = vdwg.mxu0
    %v2515 = vand.u32 %v65, 4294901760
    %2516 = vmatpush.msra.mxu0 %v2515
    %v2517 = vand.u32 %v63, 4294901760
    %2518 = vmatpush.msra.mxu0 %v2517
    %v2519 = vand.u32 %v61, 4294901760
    %2520 = vmatpush.msra.mxu0 %v2519
    %v2521 = vand.u32 %v59, 4294901760
    %2522 = vmatpush.msra.mxu0 %v2521
    %v2523 = vand.u32 %v57, 4294901760
    %2524 = vmatpush.msra.mxu0 %v2523
    %v2525 = vand.u32 %v55, 4294901760
    %2526 = vmatpush.msra.mxu0 %v2525
    %v2527 = vand.u32 %v53, 4294901760
    %2528 = vmatpush.msra.mxu0 %v2527
    %v2529 = vand.u32 %v51, 4294901760
    %2530 = vmatpush.msra.mxu0 %v2529
    %v2531 = vand.u32 %v49, 4294901760
    %2532 = vmatpush.msra.mxu0 %v2531
    %v2533 = vand.u32 %v47, 4294901760
    %2534 = vmatpush.msra.mxu0 %v2533
    %v2535 = vand.u32 %v45, 4294901760
    %2536 = vmatpush.msra.mxu0 %v2535
    %v2537 = vand.u32 %v43, 4294901760
    %2538 = vmatpush.msra.mxu0 %v2537
    %v2539 = vand.u32 %v41, 4294901760
    %2540 = vmatpush.msra.mxu0 %v2539
    %v2541 = vand.u32 %v39, 4294901760
    %2542 = vmatpush.msra.mxu0 %v2541
    %v2543 = vand.u32 %v37, 4294901760
    %2544 = vmatpush.msra.mxu0 %v2543
    %v2545 = vand.u32 %v35, 4294901760
    %2546 = vmatpush.msra.mxu0 %v2545
    %v2547 = vand.u32 %v1767, 4294901760
    %v2548 = vsub.f32 %v1767, %v2547
    %v2549 = vand.u32 %v2548, 4294901760
    %v2550 = vsub.f32 %v2548, %v2549
    %v2551 = vand.u32 %v2550, 4294901760
    %2552 = vmatmul.f32.gmra.mxu0 %v2551
    %v2553 = vpop.f32.mrf.mxu0
    %v2554 = vadd.f32 %v199, %v2553
    %v2555 = vand.u32 %v1769, 4294901760
    %v2556 = vsub.f32 %v1769, %v2555
    %v2557 = vand.u32 %v2556, 4294901760
    %v2558 = vsub.f32 %v2556, %v2557
    %v2559 = vand.u32 %v2558, 4294901760
    %2560 = vmatmul.f32.gmra.mxu0 %v2559
    %v2561 = vpop.f32.mrf.mxu0
    %v2562 = vadd.f32 %v199, %v2561
    %2563 = vdwg.mxu0
    %v2564 = vand.u32 %v65, 4294901760
    %v2565 = vsub.f32 %v65, %v2564
    %v2566 = vand.u32 %v2565, 4294901760
    %v2567 = vsub.f32 %v2565, %v2566
    %v2568 = vand.u32 %v2567, 4294901760
    %2569 = vmatpush.msra.mxu0 %v2568
    %v2570 = vand.u32 %v63, 4294901760
    %v2571 = vsub.f32 %v63, %v2570
    %v2572 = vand.u32 %v2571, 4294901760
    %v2573 = vsub.f32 %v2571, %v2572
    %v2574 = vand.u32 %v2573, 4294901760
    %2575 = vmatpush.msra.mxu0 %v2574
    %v2576 = vand.u32 %v61, 4294901760
    %v2577 = vsub.f32 %v61, %v2576
    %v2578 = vand.u32 %v2577, 4294901760
    %v2579 = vsub.f32 %v2577, %v2578
    %v2580 = vand.u32 %v2579, 4294901760
    %2581 = vmatpush.msra.mxu0 %v2580
    %v2582 = vand.u32 %v59, 4294901760
    %v2583 = vsub.f32 %v59, %v2582
    %v2584 = vand.u32 %v2583, 4294901760
    %v2585 = vsub.f32 %v2583, %v2584
    %v2586 = vand.u32 %v2585, 4294901760
    %2587 = vmatpush.msra.mxu0 %v2586
    %v2588 = vand.u32 %v57, 4294901760
    %v2589 = vsub.f32 %v57, %v2588
    %v2590 = vand.u32 %v2589, 4294901760
    %v2591 = vsub.f32 %v2589, %v2590
    %v2592 = vand.u32 %v2591, 4294901760
    %2593 = vmatpush.msra.mxu0 %v2592
    %v2594 = vand.u32 %v55, 4294901760
    %v2595 = vsub.f32 %v55, %v2594
    %v2596 = vand.u32 %v2595, 4294901760
    %v2597 = vsub.f32 %v2595, %v2596
    %v2598 = vand.u32 %v2597, 4294901760
    %2599 = vmatpush.msra.mxu0 %v2598
    %v2600 = vand.u32 %v53, 4294901760
    %v2601 = vsub.f32 %v53, %v2600
    %v2602 = vand.u32 %v2601, 4294901760
    %v2603 = vsub.f32 %v2601, %v2602
    %v2604 = vand.u32 %v2603, 4294901760
    %2605 = vmatpush.msra.mxu0 %v2604
    %v2606 = vand.u32 %v51, 4294901760
    %v2607 = vsub.f32 %v51, %v2606
    %v2608 = vand.u32 %v2607, 4294901760
    %v2609 = vsub.f32 %v2607, %v2608
    %v2610 = vand.u32 %v2609, 4294901760
    %2611 = vmatpush.msra.mxu0 %v2610
    %v2612 = vand.u32 %v49, 4294901760
    %v2613 = vsub.f32 %v49, %v2612
    %v2614 = vand.u32 %v2613, 4294901760
    %v2615 = vsub.f32 %v2613, %v2614
    %v2616 = vand.u32 %v2615, 4294901760
    %2617 = vmatpush.msra.mxu0 %v2616
    %v2618 = vand.u32 %v47, 4294901760
    %v2619 = vsub.f32 %v47, %v2618
    %v2620 = vand.u32 %v2619, 4294901760
    %v2621 = vsub.f32 %v2619, %v2620
    %v2622 = vand.u32 %v2621, 4294901760
    %2623 = vmatpush.msra.mxu0 %v2622
    %v2624 = vand.u32 %v45, 4294901760
    %v2625 = vsub.f32 %v45, %v2624
    %v2626 = vand.u32 %v2625, 4294901760
    %v2627 = vsub.f32 %v2625, %v2626
    %v2628 = vand.u32 %v2627, 4294901760
    %2629 = vmatpush.msra.mxu0 %v2628
    %v2630 = vand.u32 %v43, 4294901760
    %v2631 = vsub.f32 %v43, %v2630
    %v2632 = vand.u32 %v2631, 4294901760
    %v2633 = vsub.f32 %v2631, %v2632
    %v2634 = vand.u32 %v2633, 4294901760
    %2635 = vmatpush.msra.mxu0 %v2634
    %v2636 = vand.u32 %v41, 4294901760
    %v2637 = vsub.f32 %v41, %v2636
    %v2638 = vand.u32 %v2637, 4294901760
    %v2639 = vsub.f32 %v2637, %v2638
    %v2640 = vand.u32 %v2639, 4294901760
    %2641 = vmatpush.msra.mxu0 %v2640
    %v2642 = vand.u32 %v39, 4294901760
    %v2643 = vsub.f32 %v39, %v2642
    %v2644 = vand.u32 %v2643, 4294901760
    %v2645 = vsub.f32 %v2643, %v2644
    %v2646 = vand.u32 %v2645, 4294901760
    %2647 = vmatpush.msra.mxu0 %v2646
    %v2648 = vand.u32 %v37, 4294901760
    %v2649 = vsub.f32 %v37, %v2648
    %v2650 = vand.u32 %v2649, 4294901760
    %v2651 = vsub.f32 %v2649, %v2650
    %v2652 = vand.u32 %v2651, 4294901760
    %2653 = vmatpush.msra.mxu0 %v2652
    %v2654 = vand.u32 %v35, 4294901760
    %v2655 = vsub.f32 %v35, %v2654
    %v2656 = vand.u32 %v2655, 4294901760
    %v2657 = vsub.f32 %v2655, %v2656
    %v2658 = vand.u32 %v2657, 4294901760
    %2659 = vmatpush.msra.mxu0 %v2658
    %v2660 = vand.u32 %v1767, 4294901760
    %2661 = vmatmul.f32.gmra.mxu0 %v2660
    %v2662 = vpop.f32.mrf.mxu0
    %v2663 = vadd.f32 %v2554, %v2662
    %v2664 = vand.u32 %v1769, 4294901760
    %2665 = vmatmul.f32.gmra.mxu0 %v2664
    %v2666 = vpop.f32.mrf.mxu0
    %v2667 = vadd.f32 %v2562, %v2666
    %2668 = vdwg.mxu0
    %v2669 = vand.u32 %v65, 4294901760
    %v2670 = vsub.f32 %v65, %v2669
    %2671 = vmatpush.msra.mxu0 %v2670
    %v2672 = vand.u32 %v63, 4294901760
    %v2673 = vsub.f32 %v63, %v2672
    %2674 = vmatpush.msra.mxu0 %v2673
    %v2675 = vand.u32 %v61, 4294901760
    %v2676 = vsub.f32 %v61, %v2675
    %2677 = vmatpush.msra.mxu0 %v2676
    %v2678 = vand.u32 %v59, 4294901760
    %v2679 = vsub.f32 %v59, %v2678
    %2680 = vmatpush.msra.mxu0 %v2679
    %v2681 = vand.u32 %v57, 4294901760
    %v2682 = vsub.f32 %v57, %v2681
    %2683 = vmatpush.msra.mxu0 %v2682
    %v2684 = vand.u32 %v55, 4294901760
    %v2685 = vsub.f32 %v55, %v2684
    %2686 = vmatpush.msra.mxu0 %v2685
    %v2687 = vand.u32 %v53, 4294901760
    %v2688 = vsub.f32 %v53, %v2687
    %2689 = vmatpush.msra.mxu0 %v2688
    %v2690 = vand.u32 %v51, 4294901760
    %v2691 = vsub.f32 %v51, %v2690
    %2692 = vmatpush.msra.mxu0 %v2691
    %v2693 = vand.u32 %v49, 4294901760
    %v2694 = vsub.f32 %v49, %v2693
    %2695 = vmatpush.msra.mxu0 %v2694
    %v2696 = vand.u32 %v47, 4294901760
    %v2697 = vsub.f32 %v47, %v2696
    %2698 = vmatpush.msra.mxu0 %v2697
    %v2699 = vand.u32 %v45, 4294901760
    %v2700 = vsub.f32 %v45, %v2699
    %2701 = vmatpush.msra.mxu0 %v2700
    %v2702 = vand.u32 %v43, 4294901760
    %v2703 = vsub.f32 %v43, %v2702
    %2704 = vmatpush.msra.mxu0 %v2703
    %v2705 = vand.u32 %v41, 4294901760
    %v2706 = vsub.f32 %v41, %v2705
    %2707 = vmatpush.msra.mxu0 %v2706
    %v2708 = vand.u32 %v39, 4294901760
    %v2709 = vsub.f32 %v39, %v2708
    %2710 = vmatpush.msra.mxu0 %v2709
    %v2711 = vand.u32 %v37, 4294901760
    %v2712 = vsub.f32 %v37, %v2711
    %2713 = vmatpush.msra.mxu0 %v2712
    %v2714 = vand.u32 %v35, 4294901760
    %v2715 = vsub.f32 %v35, %v2714
    %2716 = vmatpush.msra.mxu0 %v2715
    %v2717 = vand.u32 %v1767, 4294901760
    %v2718 = vsub.f32 %v1767, %v2717
    %2719 = vmatmul.f32.gmra.mxu0 %v2718
    %v2720 = vpop.f32.mrf.mxu0
    %v2721 = vadd.f32 %v2663, %v2720
    %v2722 = vand.u32 %v1769, 4294901760
    %v2723 = vsub.f32 %v1769, %v2722
    %2724 = vmatmul.f32.gmra.mxu0 %v2723
    %v2725 = vpop.f32.mrf.mxu0
    %v2726 = vadd.f32 %v2667, %v2725
    %2727 = vdwg.mxu0
    %v2728 = vand.u32 %v65, 4294901760
    %2729 = vmatpush.msra.mxu0 %v2728
    %v2730 = vand.u32 %v63, 4294901760
    %2731 = vmatpush.msra.mxu0 %v2730
    %v2732 = vand.u32 %v61, 4294901760
    %2733 = vmatpush.msra.mxu0 %v2732
    %v2734 = vand.u32 %v59, 4294901760
    %2735 = vmatpush.msra.mxu0 %v2734
    %v2736 = vand.u32 %v57, 4294901760
    %2737 = vmatpush.msra.mxu0 %v2736
    %v2738 = vand.u32 %v55, 4294901760
    %2739 = vmatpush.msra.mxu0 %v2738
    %v2740 = vand.u32 %v53, 4294901760
    %2741 = vmatpush.msra.mxu0 %v2740
    %v2742 = vand.u32 %v51, 4294901760
    %2743 = vmatpush.msra.mxu0 %v2742
    %v2744 = vand.u32 %v49, 4294901760
    %2745 = vmatpush.msra.mxu0 %v2744
    %v2746 = vand.u32 %v47, 4294901760
    %2747 = vmatpush.msra.mxu0 %v2746
    %v2748 = vand.u32 %v45, 4294901760
    %2749 = vmatpush.msra.mxu0 %v2748
    %v2750 = vand.u32 %v43, 4294901760
    %2751 = vmatpush.msra.mxu0 %v2750
    %v2752 = vand.u32 %v41, 4294901760
    %2753 = vmatpush.msra.mxu0 %v2752
    %v2754 = vand.u32 %v39, 4294901760
    %2755 = vmatpush.msra.mxu0 %v2754
    %v2756 = vand.u32 %v37, 4294901760
    %2757 = vmatpush.msra.mxu0 %v2756
    %v2758 = vand.u32 %v35, 4294901760
    %2759 = vmatpush.msra.mxu0 %v2758
    %v2760 = vand.u32 %v1767, 4294901760
    %v2761 = vsub.f32 %v1767, %v2760
    %v2762 = vand.u32 %v2761, 4294901760
    %2763 = vmatmul.f32.gmra.mxu0 %v2762
    %v2764 = vpop.f32.mrf.mxu0
    %v2765 = vadd.f32 %v2721, %v2764
    %v2766 = vand.u32 %v1769, 4294901760
    %v2767 = vsub.f32 %v1769, %v2766
    %v2768 = vand.u32 %v2767, 4294901760
    %2769 = vmatmul.f32.gmra.mxu0 %v2768
    %v2770 = vpop.f32.mrf.mxu0
    %v2771 = vadd.f32 %v2726, %v2770
    %2772 = vdwg.mxu0
    %v2773 = vand.u32 %v65, 4294901760
    %v2774 = vsub.f32 %v65, %v2773
    %v2775 = vand.u32 %v2774, 4294901760
    %2776 = vmatpush.msra.mxu0 %v2775
    %v2777 = vand.u32 %v63, 4294901760
    %v2778 = vsub.f32 %v63, %v2777
    %v2779 = vand.u32 %v2778, 4294901760
    %2780 = vmatpush.msra.mxu0 %v2779
    %v2781 = vand.u32 %v61, 4294901760
    %v2782 = vsub.f32 %v61, %v2781
    %v2783 = vand.u32 %v2782, 4294901760
    %2784 = vmatpush.msra.mxu0 %v2783
    %v2785 = vand.u32 %v59, 4294901760
    %v2786 = vsub.f32 %v59, %v2785
    %v2787 = vand.u32 %v2786, 4294901760
    %2788 = vmatpush.msra.mxu0 %v2787
    %v2789 = vand.u32 %v57, 4294901760
    %v2790 = vsub.f32 %v57, %v2789
    %v2791 = vand.u32 %v2790, 4294901760
    %2792 = vmatpush.msra.mxu0 %v2791
    %v2793 = vand.u32 %v55, 4294901760
    %v2794 = vsub.f32 %v55, %v2793
    %v2795 = vand.u32 %v2794, 4294901760
    %2796 = vmatpush.msra.mxu0 %v2795
    %v2797 = vand.u32 %v53, 4294901760
    %v2798 = vsub.f32 %v53, %v2797
    %v2799 = vand.u32 %v2798, 4294901760
    %2800 = vmatpush.msra.mxu0 %v2799
    %v2801 = vand.u32 %v51, 4294901760
    %v2802 = vsub.f32 %v51, %v2801
    %v2803 = vand.u32 %v2802, 4294901760
    %2804 = vmatpush.msra.mxu0 %v2803
    %v2805 = vand.u32 %v49, 4294901760
    %v2806 = vsub.f32 %v49, %v2805
    %v2807 = vand.u32 %v2806, 4294901760
    %2808 = vmatpush.msra.mxu0 %v2807
    %v2809 = vand.u32 %v47, 4294901760
    %v2810 = vsub.f32 %v47, %v2809
    %v2811 = vand.u32 %v2810, 4294901760
    %2812 = vmatpush.msra.mxu0 %v2811
    %v2813 = vand.u32 %v45, 4294901760
    %v2814 = vsub.f32 %v45, %v2813
    %v2815 = vand.u32 %v2814, 4294901760
    %2816 = vmatpush.msra.mxu0 %v2815
    %v2817 = vand.u32 %v43, 4294901760
    %v2818 = vsub.f32 %v43, %v2817
    %v2819 = vand.u32 %v2818, 4294901760
    %2820 = vmatpush.msra.mxu0 %v2819
    %v2821 = vand.u32 %v41, 4294901760
    %v2822 = vsub.f32 %v41, %v2821
    %v2823 = vand.u32 %v2822, 4294901760
    %2824 = vmatpush.msra.mxu0 %v2823
    %v2825 = vand.u32 %v39, 4294901760
    %v2826 = vsub.f32 %v39, %v2825
    %v2827 = vand.u32 %v2826, 4294901760
    %2828 = vmatpush.msra.mxu0 %v2827
    %v2829 = vand.u32 %v37, 4294901760
    %v2830 = vsub.f32 %v37, %v2829
    %v2831 = vand.u32 %v2830, 4294901760
    %2832 = vmatpush.msra.mxu0 %v2831
    %v2833 = vand.u32 %v35, 4294901760
    %v2834 = vsub.f32 %v35, %v2833
    %v2835 = vand.u32 %v2834, 4294901760
    %2836 = vmatpush.msra.mxu0 %v2835
    %v2837 = vand.u32 %v1767, 4294901760
    %2838 = vmatmul.f32.gmra.mxu0 %v2837
    %v2839 = vpop.f32.mrf.mxu0
    %v2840 = vadd.f32 %v2765, %v2839
    %v2841 = vand.u32 %v1769, 4294901760
    %2842 = vmatmul.f32.gmra.mxu0 %v2841
    %v2843 = vpop.f32.mrf.mxu0
    %v2844 = vadd.f32 %v2771, %v2843
    %2845 = vdwg.mxu0
    %v2846 = vand.u32 %v65, 4294901760
    %2847 = vmatpush.msra.mxu0 %v2846
    %v2848 = vand.u32 %v63, 4294901760
    %2849 = vmatpush.msra.mxu0 %v2848
    %v2850 = vand.u32 %v61, 4294901760
    %2851 = vmatpush.msra.mxu0 %v2850
    %v2852 = vand.u32 %v59, 4294901760
    %2853 = vmatpush.msra.mxu0 %v2852
    %v2854 = vand.u32 %v57, 4294901760
    %2855 = vmatpush.msra.mxu0 %v2854
    %v2856 = vand.u32 %v55, 4294901760
    %2857 = vmatpush.msra.mxu0 %v2856
    %v2858 = vand.u32 %v53, 4294901760
    %2859 = vmatpush.msra.mxu0 %v2858
    %v2860 = vand.u32 %v51, 4294901760
    %2861 = vmatpush.msra.mxu0 %v2860
    %v2862 = vand.u32 %v49, 4294901760
    %2863 = vmatpush.msra.mxu0 %v2862
    %v2864 = vand.u32 %v47, 4294901760
    %2865 = vmatpush.msra.mxu0 %v2864
    %v2866 = vand.u32 %v45, 4294901760
    %2867 = vmatpush.msra.mxu0 %v2866
    %v2868 = vand.u32 %v43, 4294901760
    %2869 = vmatpush.msra.mxu0 %v2868
    %v2870 = vand.u32 %v41, 4294901760
    %2871 = vmatpush.msra.mxu0 %v2870
    %v2872 = vand.u32 %v39, 4294901760
    %2873 = vmatpush.msra.mxu0 %v2872
    %v2874 = vand.u32 %v37, 4294901760
    %2875 = vmatpush.msra.mxu0 %v2874
    %v2876 = vand.u32 %v35, 4294901760
    %2877 = vmatpush.msra.mxu0 %v2876
    %v2878 = vand.u32 %v1767, 4294901760
    %2879 = vmatmul.f32.gmra.mxu0 %v2878
    %v2880 = vpop.f32.mrf.mxu0
    %v2881 = vadd.f32 %v2840, %v2880
    %v2882 = vand.u32 %v1769, 4294901760
    %2883 = vmatmul.f32.gmra.mxu0 %v2882
    %v2884 = vpop.f32.mrf.mxu0
    %v2885 = vadd.f32 %v2844, %v2884
    %2886 = vdwg.mxu0
    %v2887 = vand.u32 %v97, 4294901760
    %2888 = vmatpush.msra.mxu0 %v2887
    %v2889 = vand.u32 %v95, 4294901760
    %2890 = vmatpush.msra.mxu0 %v2889
    %v2891 = vand.u32 %v93, 4294901760
    %2892 = vmatpush.msra.mxu0 %v2891
    %v2893 = vand.u32 %v91, 4294901760
    %2894 = vmatpush.msra.mxu0 %v2893
    %v2895 = vand.u32 %v89, 4294901760
    %2896 = vmatpush.msra.mxu0 %v2895
    %v2897 = vand.u32 %v87, 4294901760
    %2898 = vmatpush.msra.mxu0 %v2897
    %v2899 = vand.u32 %v85, 4294901760
    %2900 = vmatpush.msra.mxu0 %v2899
    %v2901 = vand.u32 %v83, 4294901760
    %2902 = vmatpush.msra.mxu0 %v2901
    %v2903 = vand.u32 %v81, 4294901760
    %2904 = vmatpush.msra.mxu0 %v2903
    %v2905 = vand.u32 %v79, 4294901760
    %2906 = vmatpush.msra.mxu0 %v2905
    %v2907 = vand.u32 %v77, 4294901760
    %2908 = vmatpush.msra.mxu0 %v2907
    %v2909 = vand.u32 %v75, 4294901760
    %2910 = vmatpush.msra.mxu0 %v2909
    %v2911 = vand.u32 %v73, 4294901760
    %2912 = vmatpush.msra.mxu0 %v2911
    %v2913 = vand.u32 %v71, 4294901760
    %2914 = vmatpush.msra.mxu0 %v2913
    %v2915 = vand.u32 %v69, 4294901760
    %2916 = vmatpush.msra.mxu0 %v2915
    %v2917 = vand.u32 %v67, 4294901760
    %2918 = vmatpush.msra.mxu0 %v2917
    %v2919 = vand.u32 %v1768, 4294901760
    %v2920 = vsub.f32 %v1768, %v2919
    %v2921 = vand.u32 %v2920, 4294901760
    %v2922 = vsub.f32 %v2920, %v2921
    %v2923 = vand.u32 %v2922, 4294901760
    %2924 = vmatmul.f32.gmra.mxu0 %v2923
    %v2925 = vpop.f32.mrf.mxu0
    %v2926 = vadd.f32 %v2881, %v2925
    %v2927 = vand.u32 %v1770, 4294901760
    %v2928 = vsub.f32 %v1770, %v2927
    %v2929 = vand.u32 %v2928, 4294901760
    %v2930 = vsub.f32 %v2928, %v2929
    %v2931 = vand.u32 %v2930, 4294901760
    %2932 = vmatmul.f32.gmra.mxu0 %v2931
    %v2933 = vpop.f32.mrf.mxu0
    %v2934 = vadd.f32 %v2885, %v2933
    %2935 = vdwg.mxu0
    %v2936 = vand.u32 %v97, 4294901760
    %v2937 = vsub.f32 %v97, %v2936
    %v2938 = vand.u32 %v2937, 4294901760
    %v2939 = vsub.f32 %v2937, %v2938
    %v2940 = vand.u32 %v2939, 4294901760
    %2941 = vmatpush.msra.mxu0 %v2940
    %v2942 = vand.u32 %v95, 4294901760
    %v2943 = vsub.f32 %v95, %v2942
    %v2944 = vand.u32 %v2943, 4294901760
    %v2945 = vsub.f32 %v2943, %v2944
    %v2946 = vand.u32 %v2945, 4294901760
    %2947 = vmatpush.msra.mxu0 %v2946
    %v2948 = vand.u32 %v93, 4294901760
    %v2949 = vsub.f32 %v93, %v2948
    %v2950 = vand.u32 %v2949, 4294901760
    %v2951 = vsub.f32 %v2949, %v2950
    %v2952 = vand.u32 %v2951, 4294901760
    %2953 = vmatpush.msra.mxu0 %v2952
    %v2954 = vand.u32 %v91, 4294901760
    %v2955 = vsub.f32 %v91, %v2954
    %v2956 = vand.u32 %v2955, 4294901760
    %v2957 = vsub.f32 %v2955, %v2956
    %v2958 = vand.u32 %v2957, 4294901760
    %2959 = vmatpush.msra.mxu0 %v2958
    %v2960 = vand.u32 %v89, 4294901760
    %v2961 = vsub.f32 %v89, %v2960
    %v2962 = vand.u32 %v2961, 4294901760
    %v2963 = vsub.f32 %v2961, %v2962
    %v2964 = vand.u32 %v2963, 4294901760
    %2965 = vmatpush.msra.mxu0 %v2964
    %v2966 = vand.u32 %v87, 4294901760
    %v2967 = vsub.f32 %v87, %v2966
    %v2968 = vand.u32 %v2967, 4294901760
    %v2969 = vsub.f32 %v2967, %v2968
    %v2970 = vand.u32 %v2969, 4294901760
    %2971 = vmatpush.msra.mxu0 %v2970
    %v2972 = vand.u32 %v85, 4294901760
    %v2973 = vsub.f32 %v85, %v2972
    %v2974 = vand.u32 %v2973, 4294901760
    %v2975 = vsub.f32 %v2973, %v2974
    %v2976 = vand.u32 %v2975, 4294901760
    %2977 = vmatpush.msra.mxu0 %v2976
    %v2978 = vand.u32 %v83, 4294901760
    %v2979 = vsub.f32 %v83, %v2978
    %v2980 = vand.u32 %v2979, 4294901760
    %v2981 = vsub.f32 %v2979, %v2980
    %v2982 = vand.u32 %v2981, 4294901760
    %2983 = vmatpush.msra.mxu0 %v2982
    %v2984 = vand.u32 %v81, 4294901760
    %v2985 = vsub.f32 %v81, %v2984
    %v2986 = vand.u32 %v2985, 4294901760
    %v2987 = vsub.f32 %v2985, %v2986
    %v2988 = vand.u32 %v2987, 4294901760
    %2989 = vmatpush.msra.mxu0 %v2988
    %v2990 = vand.u32 %v79, 4294901760
    %v2991 = vsub.f32 %v79, %v2990
    %v2992 = vand.u32 %v2991, 4294901760
    %v2993 = vsub.f32 %v2991, %v2992
    %v2994 = vand.u32 %v2993, 4294901760
    %2995 = vmatpush.msra.mxu0 %v2994
    %v2996 = vand.u32 %v77, 4294901760
    %v2997 = vsub.f32 %v77, %v2996
    %v2998 = vand.u32 %v2997, 4294901760
    %v2999 = vsub.f32 %v2997, %v2998
    %v3000 = vand.u32 %v2999, 4294901760
    %3001 = vmatpush.msra.mxu0 %v3000
    %v3002 = vand.u32 %v75, 4294901760
    %v3003 = vsub.f32 %v75, %v3002
    %v3004 = vand.u32 %v3003, 4294901760
    %v3005 = vsub.f32 %v3003, %v3004
    %v3006 = vand.u32 %v3005, 4294901760
    %3007 = vmatpush.msra.mxu0 %v3006
    %v3008 = vand.u32 %v73, 4294901760
    %v3009 = vsub.f32 %v73, %v3008
    %v3010 = vand.u32 %v3009, 4294901760
    %v3011 = vsub.f32 %v3009, %v3010
    %v3012 = vand.u32 %v3011, 4294901760
    %3013 = vmatpush.msra.mxu0 %v3012
    %v3014 = vand.u32 %v71, 4294901760
    %v3015 = vsub.f32 %v71, %v3014
    %v3016 = vand.u32 %v3015, 4294901760
    %v3017 = vsub.f32 %v3015, %v3016
    %v3018 = vand.u32 %v3017, 4294901760
    %3019 = vmatpush.msra.mxu0 %v3018
    %v3020 = vand.u32 %v69, 4294901760
    %v3021 = vsub.f32 %v69, %v3020
    %v3022 = vand.u32 %v3021, 4294901760
    %v3023 = vsub.f32 %v3021, %v3022
    %v3024 = vand.u32 %v3023, 4294901760
    %3025 = vmatpush.msra.mxu0 %v3024
    %v3026 = vand.u32 %v67, 4294901760
    %v3027 = vsub.f32 %v67, %v3026
    %v3028 = vand.u32 %v3027, 4294901760
    %v3029 = vsub.f32 %v3027, %v3028
    %v3030 = vand.u32 %v3029, 4294901760
    %3031 = vmatpush.msra.mxu0 %v3030
    %v3032 = vand.u32 %v1768, 4294901760
    %3033 = vmatmul.f32.gmra.mxu0 %v3032
    %v3034 = vpop.f32.mrf.mxu0
    %v3035 = vadd.f32 %v2926, %v3034
    %v3036 = vand.u32 %v1770, 4294901760
    %3037 = vmatmul.f32.gmra.mxu0 %v3036
    %v3038 = vpop.f32.mrf.mxu0
    %v3039 = vadd.f32 %v2934, %v3038
    %3040 = vdwg.mxu0
    %v3041 = vand.u32 %v97, 4294901760
    %v3042 = vsub.f32 %v97, %v3041
    %3043 = vmatpush.msra.mxu0 %v3042
    %v3044 = vand.u32 %v95, 4294901760
    %v3045 = vsub.f32 %v95, %v3044
    %3046 = vmatpush.msra.mxu0 %v3045
    %v3047 = vand.u32 %v93, 4294901760
    %v3048 = vsub.f32 %v93, %v3047
    %3049 = vmatpush.msra.mxu0 %v3048
    %v3050 = vand.u32 %v91, 4294901760
    %v3051 = vsub.f32 %v91, %v3050
    %3052 = vmatpush.msra.mxu0 %v3051
    %v3053 = vand.u32 %v89, 4294901760
    %v3054 = vsub.f32 %v89, %v3053
    %3055 = vmatpush.msra.mxu0 %v3054
    %v3056 = vand.u32 %v87, 4294901760
    %v3057 = vsub.f32 %v87, %v3056
    %3058 = vmatpush.msra.mxu0 %v3057
    %v3059 = vand.u32 %v85, 4294901760
    %v3060 = vsub.f32 %v85, %v3059
    %3061 = vmatpush.msra.mxu0 %v3060
    %v3062 = vand.u32 %v83, 4294901760
    %v3063 = vsub.f32 %v83, %v3062
    %3064 = vmatpush.msra.mxu0 %v3063
    %v3065 = vand.u32 %v81, 4294901760
    %v3066 = vsub.f32 %v81, %v3065
    %3067 = vmatpush.msra.mxu0 %v3066
    %v3068 = vand.u32 %v79, 4294901760
    %v3069 = vsub.f32 %v79, %v3068
    %3070 = vmatpush.msra.mxu0 %v3069
    %v3071 = vand.u32 %v77, 4294901760
    %v3072 = vsub.f32 %v77, %v3071
    %3073 = vmatpush.msra.mxu0 %v3072
    %v3074 = vand.u32 %v75, 4294901760
    %v3075 = vsub.f32 %v75, %v3074
    %3076 = vmatpush.msra.mxu0 %v3075
    %v3077 = vand.u32 %v73, 4294901760
    %v3078 = vsub.f32 %v73, %v3077
    %3079 = vmatpush.msra.mxu0 %v3078
    %v3080 = vand.u32 %v71, 4294901760
    %v3081 = vsub.f32 %v71, %v3080
    %3082 = vmatpush.msra.mxu0 %v3081
    %v3083 = vand.u32 %v69, 4294901760
    %v3084 = vsub.f32 %v69, %v3083
    %3085 = vmatpush.msra.mxu0 %v3084
    %v3086 = vand.u32 %v67, 4294901760
    %v3087 = vsub.f32 %v67, %v3086
    %3088 = vmatpush.msra.mxu0 %v3087
    %v3089 = vand.u32 %v1768, 4294901760
    %v3090 = vsub.f32 %v1768, %v3089
    %3091 = vmatmul.f32.gmra.mxu0 %v3090
    %v3092 = vpop.f32.mrf.mxu0
    %v3093 = vadd.f32 %v3035, %v3092
    %v3094 = vand.u32 %v1770, 4294901760
    %v3095 = vsub.f32 %v1770, %v3094
    %3096 = vmatmul.f32.gmra.mxu0 %v3095
    %v3097 = vpop.f32.mrf.mxu0
    %v3098 = vadd.f32 %v3039, %v3097
    %3099 = vdwg.mxu0
    %v3100 = vand.u32 %v97, 4294901760
    %3101 = vmatpush.msra.mxu0 %v3100
    %v3102 = vand.u32 %v95, 4294901760
    %3103 = vmatpush.msra.mxu0 %v3102
    %v3104 = vand.u32 %v93, 4294901760
    %3105 = vmatpush.msra.mxu0 %v3104
    %v3106 = vand.u32 %v91, 4294901760
    %3107 = vmatpush.msra.mxu0 %v3106
    %v3108 = vand.u32 %v89, 4294901760
    %3109 = vmatpush.msra.mxu0 %v3108
    %v3110 = vand.u32 %v87, 4294901760
    %3111 = vmatpush.msra.mxu0 %v3110
    %v3112 = vand.u32 %v85, 4294901760
    %3113 = vmatpush.msra.mxu0 %v3112
    %v3114 = vand.u32 %v83, 4294901760
    %3115 = vmatpush.msra.mxu0 %v3114
    %v3116 = vand.u32 %v81, 4294901760
    %3117 = vmatpush.msra.mxu0 %v3116
    %v3118 = vand.u32 %v79, 4294901760
    %3119 = vmatpush.msra.mxu0 %v3118
    %v3120 = vand.u32 %v77, 4294901760
    %3121 = vmatpush.msra.mxu0 %v3120
    %v3122 = vand.u32 %v75, 4294901760
    %3123 = vmatpush.msra.mxu0 %v3122
    %v3124 = vand.u32 %v73, 4294901760
    %3125 = vmatpush.msra.mxu0 %v3124
    %v3126 = vand.u32 %v71, 4294901760
    %3127 = vmatpush.msra.mxu0 %v3126
    %v3128 = vand.u32 %v69, 4294901760
    %3129 = vmatpush.msra.mxu0 %v3128
    %v3130 = vand.u32 %v67, 4294901760
    %3131 = vmatpush.msra.mxu0 %v3130
    %v3132 = vand.u32 %v1768, 4294901760
    %v3133 = vsub.f32 %v1768, %v3132
    %v3134 = vand.u32 %v3133, 4294901760
    %3135 = vmatmul.f32.gmra.mxu0 %v3134
    %v3136 = vpop.f32.mrf.mxu0
    %v3137 = vadd.f32 %v3093, %v3136
    %v3138 = vand.u32 %v1770, 4294901760
    %v3139 = vsub.f32 %v1770, %v3138
    %v3140 = vand.u32 %v3139, 4294901760
    %3141 = vmatmul.f32.gmra.mxu0 %v3140
    %v3142 = vpop.f32.mrf.mxu0
    %v3143 = vadd.f32 %v3098, %v3142
    %3144 = vdwg.mxu0
    %v3145 = vand.u32 %v97, 4294901760
    %v3146 = vsub.f32 %v97, %v3145
    %v3147 = vand.u32 %v3146, 4294901760
    %3148 = vmatpush.msra.mxu0 %v3147
    %v3149 = vand.u32 %v95, 4294901760
    %v3150 = vsub.f32 %v95, %v3149
    %v3151 = vand.u32 %v3150, 4294901760
    %3152 = vmatpush.msra.mxu0 %v3151
    %v3153 = vand.u32 %v93, 4294901760
    %v3154 = vsub.f32 %v93, %v3153
    %v3155 = vand.u32 %v3154, 4294901760
    %3156 = vmatpush.msra.mxu0 %v3155
    %v3157 = vand.u32 %v91, 4294901760
    %v3158 = vsub.f32 %v91, %v3157
    %v3159 = vand.u32 %v3158, 4294901760
    %3160 = vmatpush.msra.mxu0 %v3159
    %v3161 = vand.u32 %v89, 4294901760
    %v3162 = vsub.f32 %v89, %v3161
    %v3163 = vand.u32 %v3162, 4294901760
    %3164 = vmatpush.msra.mxu0 %v3163
    %v3165 = vand.u32 %v87, 4294901760
    %v3166 = vsub.f32 %v87, %v3165
    %v3167 = vand.u32 %v3166, 4294901760
    %3168 = vmatpush.msra.mxu0 %v3167
    %v3169 = vand.u32 %v85, 4294901760
    %v3170 = vsub.f32 %v85, %v3169
    %v3171 = vand.u32 %v3170, 4294901760
    %3172 = vmatpush.msra.mxu0 %v3171
    %v3173 = vand.u32 %v83, 4294901760
    %v3174 = vsub.f32 %v83, %v3173
    %v3175 = vand.u32 %v3174, 4294901760
    %3176 = vmatpush.msra.mxu0 %v3175
    %v3177 = vand.u32 %v81, 4294901760
    %v3178 = vsub.f32 %v81, %v3177
    %v3179 = vand.u32 %v3178, 4294901760
    %3180 = vmatpush.msra.mxu0 %v3179
    %v3181 = vand.u32 %v79, 4294901760
    %v3182 = vsub.f32 %v79, %v3181
    %v3183 = vand.u32 %v3182, 4294901760
    %3184 = vmatpush.msra.mxu0 %v3183
    %v3185 = vand.u32 %v77, 4294901760
    %v3186 = vsub.f32 %v77, %v3185
    %v3187 = vand.u32 %v3186, 4294901760
    %3188 = vmatpush.msra.mxu0 %v3187
    %v3189 = vand.u32 %v75, 4294901760
    %v3190 = vsub.f32 %v75, %v3189
    %v3191 = vand.u32 %v3190, 4294901760
    %3192 = vmatpush.msra.mxu0 %v3191
    %v3193 = vand.u32 %v73, 4294901760
    %v3194 = vsub.f32 %v73, %v3193
    %v3195 = vand.u32 %v3194, 4294901760
    %3196 = vmatpush.msra.mxu0 %v3195
    %v3197 = vand.u32 %v71, 4294901760
    %v3198 = vsub.f32 %v71, %v3197
    %v3199 = vand.u32 %v3198, 4294901760
    %3200 = vmatpush.msra.mxu0 %v3199
    %v3201 = vand.u32 %v69, 4294901760
    %v3202 = vsub.f32 %v69, %v3201
    %v3203 = vand.u32 %v3202, 4294901760
    %3204 = vmatpush.msra.mxu0 %v3203
    %v3205 = vand.u32 %v67, 4294901760
    %v3206 = vsub.f32 %v67, %v3205
    %v3207 = vand.u32 %v3206, 4294901760
    %3208 = vmatpush.msra.mxu0 %v3207
    %v3209 = vand.u32 %v1768, 4294901760
    %3210 = vmatmul.f32.gmra.mxu0 %v3209
    %v3211 = vpop.f32.mrf.mxu0
    %v3212 = vadd.f32 %v3137, %v3211
    %v3213 = vand.u32 %v1770, 4294901760
    %3214 = vmatmul.f32.gmra.mxu0 %v3213
    %v3215 = vpop.f32.mrf.mxu0
    %v3216 = vadd.f32 %v3143, %v3215
    %3217 = vdwg.mxu0
    %v3218 = vand.u32 %v97, 4294901760
    %3219 = vmatpush.msra.mxu0 %v3218
    %v3220 = vand.u32 %v95, 4294901760
    %3221 = vmatpush.msra.mxu0 %v3220
    %v3222 = vand.u32 %v93, 4294901760
    %3223 = vmatpush.msra.mxu0 %v3222
    %v3224 = vand.u32 %v91, 4294901760
    %3225 = vmatpush.msra.mxu0 %v3224
    %v3226 = vand.u32 %v89, 4294901760
    %3227 = vmatpush.msra.mxu0 %v3226
    %v3228 = vand.u32 %v87, 4294901760
    %3229 = vmatpush.msra.mxu0 %v3228
    %v3230 = vand.u32 %v85, 4294901760
    %3231 = vmatpush.msra.mxu0 %v3230
    %v3232 = vand.u32 %v83, 4294901760
    %3233 = vmatpush.msra.mxu0 %v3232
    %v3234 = vand.u32 %v81, 4294901760
    %3235 = vmatpush.msra.mxu0 %v3234
    %v3236 = vand.u32 %v79, 4294901760
    %3237 = vmatpush.msra.mxu0 %v3236
    %v3238 = vand.u32 %v77, 4294901760
    %3239 = vmatpush.msra.mxu0 %v3238
    %v3240 = vand.u32 %v75, 4294901760
    %3241 = vmatpush.msra.mxu0 %v3240
    %v3242 = vand.u32 %v73, 4294901760
    %3243 = vmatpush.msra.mxu0 %v3242
    %v3244 = vand.u32 %v71, 4294901760
    %3245 = vmatpush.msra.mxu0 %v3244
    %v3246 = vand.u32 %v69, 4294901760
    %3247 = vmatpush.msra.mxu0 %v3246
    %v3248 = vand.u32 %v67, 4294901760
    %3249 = vmatpush.msra.mxu0 %v3248
    %v3250 = vand.u32 %v1768, 4294901760
    %3251 = vmatmul.f32.gmra.mxu0 %v3250
    %v3252 = vpop.f32.mrf.mxu0
    %v3253 = vadd.f32 %v3212, %v3252
    %v3254 = vand.u32 %v1770, 4294901760
    %3255 = vmatmul.f32.gmra.mxu0 %v3254
    %v3256 = vpop.f32.mrf.mxu0
    %v3257 = vadd.f32 %v3216, %v3256
    %3258 = vdwg.mxu0
    %s3259 = scalar_lea.vmem [#allocation5], 32
    %3260 = vst [vmem:[%s3259] sm:$0xff] %v2509
    %3261 = vst [vmem:[%s3259 + $0x8] sm:$0xff] %v3253
    %3262 = vst [vmem:[%s3259 + $0x10] sm:$0xff] %v2513
    %3263 = vst [vmem:[%s3259 + $0x18] sm:$0xff] %v3257
    // Predicated region
    $region22: #{tpu_custom_call.1} parent=1 // pred_check
      _
    $region23: #{tpu_custom_call.1} parent=1 // pred_check_branch
      %3265 = sbr.rel (0) target = $region25
    $region24: #{tpu_custom_call.1} parent=1 // pred_region
      %3267 = vsyncadd [#allocation4], 0
      %s3268 = sshll.u32 [#allocation5], 4
      %s3269 = int_to_ptr.vmem [resolvable:$true] %s3268
      %s3270 = sshll.u32 %s4, 4
      %s3271 = int_to_ptr.hbm [resolvable:$true] %s3270
      %3276 = dma.vmem_to_hbm [thread:$0]  %s3269, 1024, %s3271, [#allocation4], 256, 256, 16
    $region25: #{tpu_custom_call.1} parent=1 // pred_fallthru
      _
    // Predicated region
    $region26: #{tpu_custom_call.1} parent=1 // pred_check
      _
    $region27: #{tpu_custom_call.1} parent=1 // pred_check_branch
      %3278 = sbr.rel (0) target = $region29
    $region28: #{tpu_custom_call.1} parent=1 // pred_region
      %3280 = dma.done [#allocation4], 1024
    $region29: #{tpu_custom_call.1} parent=1 // pred_fallthru
      _
    %3281 = vsyncpa [#allocation3], 1
    %3282 = vsyncpa [#allocation4], 1

</llo_original>
